<compile_context>
chip_gen: v5e
topology: v5e:2x2
jax: 0.10.0
libtpu: 0.0.40
codegen_flags: <defaults>
</compile_context>

<pallas_src>
import functools

import jax
import jax.numpy as jnp
from jax import lax
from jax.experimental import pallas as pl
from jax.experimental.pallas import tpu as pltpu

LRELU_SLOPE = 0.2
BN_EPS = 0.8                  # nn.BatchNorm2d(C, 0.8): positional 0.8 is eps


def _round_up(x, k):
    return ((x + k - 1) // k) * k


# ----------------------------------------------------------------------------
# per-generation configuration (VMEM limit / tiling budget / MXU alignment)
# ----------------------------------------------------------------------------
def _gen_config():
    kind = ""
    try:
        kind = (jax.devices()[0].device_kind or "").lower()
    except Exception:
        pass
    if "v7" in kind or "7x" in kind:
        # 64 MiB physical VMEM: stay well under it.
        return {"vmem_limit": 44 * 2**20, "vmem_budget": 32 * 2**20, "mxu_align": 256}
    if "v6" in kind:
        return {"vmem_limit": 100 * 2**20, "vmem_budget": 80 * 2**20, "mxu_align": 256}
    if "v5" in kind and ("lite" in kind or "v5e" in kind):
        return {"vmem_limit": 100 * 2**20, "vmem_budget": 80 * 2**20, "mxu_align": 128}
    # unknown / older generations: conservative defaults
    return {"vmem_limit": 64 * 2**20, "vmem_budget": 48 * 2**20, "mxu_align": 128}


def _choose_m_tiles(m, per_row_bytes, budget_bytes):
    """Biggest M tile (<=512, multiple of 8) that fits the budget, then rebalance
    so the last tile is not nearly-empty (m=520 -> tm=264, not 512+512)."""
    tm_cap = max(8, min(512, (budget_bytes // max(per_row_bytes, 1)) // 8 * 8))
    n_m = -(-m // tm_cap)
    tm = _round_up(-(-m // n_m), 8)
    return tm, n_m


def _conv_tiles(m, tk, cout, coutp, out_itemsize, budget):
    # per-M-row VMEM: double-buffered bf16 patches + double-buffered output + f32 acc
    per_row = 2 * tk * 2 + 2 * cout * out_itemsize + coutp * 4
    # resident: double-buffered bf16 weight tile + f32 bias
    fixed = 2 * tk * coutp * 2 + 2 * coutp * 4
    return _choose_m_tiles(m, per_row, max(budget - fixed, 8 * per_row))


def _conv_dims(cin, cout, kh, kw, mxu_align):
    """Padded MXU-operand dims and K tile for one conv layer."""
    k = kh * kw * cin
    big = (k >= 512) and (cout >= 256)           # skip head/term convs
    align = mxu_align if big else 128
    coutp = _round_up(cout, align)
    if k < 128:
        kp = k                                    # full-dim block: no K padding
        tk = kp
    elif k <= 2048:
        kp = _round_up(k, align)
        tk = kp                                   # single K step, weight resident
    else:
        tk = 512                                  # K-tiled (v7x VMEM fit)
        kp = _round_up(k, tk)
    return {"k": k, "kp": kp, "tk": tk, "cout": cout, "coutp": coutp}


# ----------------------------------------------------------------------------
# Pallas kernels
# ----------------------------------------------------------------------------
def _mm_bias_act_kernel(p_ref, w_ref, b_ref, o_ref, acc_ref, *, act, n_k, cout):
    """bf16 matmul (f32 acc over the K grid axis) + bias [+ LeakyReLU].
    Output is stored with UNPADDED channel lanes, only on the last K step."""
    kk = pl.program_id(1)

    @pl.when(kk == 0)
    def _():
        acc_ref[...] = jnp.zeros_like(acc_ref)

    acc_ref[...] += jnp.dot(p_ref[...], w_ref[...],
                            preferred_element_type=jnp.float32)

    @pl.when(kk == n_k - 1)
    def _():
        y = (acc_ref[...] + b_ref[...])[:, :cout]
        if act == "lrelu":
            y = jnp.where(y >= 0.0, y, LRELU_SLOPE * y)
        o_ref[...] = y.astype(o_ref.dtype)


def _mm_bias_stats_kernel(p_ref, w_ref, b_ref, o_ref, s1_ref, s2_ref, acc_ref,
                          *, n_k, n_m, cout, tm, m_real):
    """Matmul + bias, plus PER-M-TILE partial sum / sumsq outputs (f32) for
    training-mode BatchNorm.  No cross-tile accumulation -> M axis stays
    'parallel'.  Padded rows are masked out only on the last M tile."""
    i = pl.program_id(0)
    kk = pl.program_id(1)

    @pl.when(kk == 0)
    def _():
        acc_ref[...] = jnp.zeros_like(acc_ref)

    acc_ref[...] += jnp.dot(p_ref[...], w_ref[...],
                            preferred_element_type=jnp.float32)

    last_k = kk == n_k - 1
    needs_mask = (n_m * tm) != m_real            # static (trace-time) decision

    def _y():
        return (acc_ref[...] + b_ref[...])[:, :cout]

    def _store_stats(y):
        s1_ref[...] = jnp.sum(y, axis=0, keepdims=True)[None]
        s2_ref[...] = jnp.sum(y * y, axis=0, keepdims=True)[None]

    @pl.when(last_k)
    def _():
        o_ref[...] = _y().astype(o_ref.dtype)

    if not needs_mask:
        @pl.when(last_k)
        def _():
            _store_stats(_y())
    else:
        # fast path: every row of this tile is a real pixel
        @pl.when(last_k & (i < n_m - 1))
        def _():
            _store_stats(_y())

        # last tile: zero the padded rows before reducing (correctness-critical)
        @pl.when(last_k & (i == n_m - 1))
        def _():
            row = i * tm + lax.broadcasted_iota(jnp.int32, (tm, 1), 0)
            _store_stats(jnp.where(row < m_real, _y(), 0.0))


def _scale_shift_lrelu_kernel(y_ref, sc_ref, sh_ref, o_ref):
    """Apply BatchNorm as y*scale + shift (f32 math), then LeakyReLU(0.2)."""
    y = y_ref[...].astype(jnp.float32) * sc_ref[...] + sh_ref[...]
    o_ref[...] = jnp.where(y >= 0.0, y, LRELU_SLOPE * y).astype(o_ref.dtype)


def _avgpool_kernel(p_ref, ic_ref, o_ref):
    """count_include_pad=False avg pool: sum over the k*k window axis (true channel
    width, no 128-lane padding), times per-pixel reciprocal valid-count."""
    o_ref[...] = (jnp.sum(p_ref[...], axis=1) * ic_ref[...]).astype(o_ref.dtype)


# ----------------------------------------------------------------------------
# glue: NHWC im2col (pad / strided slice / reshape only)
# ----------------------------------------------------------------------------
def _im2col_nhwc(x, kh, kw, stride, pad):
    """x: [N, H, W, C] -> (patches [N*OH*OW, kh*kw*C], OH, OW). Column order (kh,kw,C)."""
    n, h, w, c = x.shape
    xp = jnp.pad(x, ((0, 0), (pad, pad), (pad, pad), (0, 0)))
    oh = (h + 2 * pad - kh) // stride + 1
    ow = (w + 2 * pad - kw) // stride + 1
    cols = []
    for i in range(kh):
        for j in range(kw):
            cols.append(xp[:, i:i + stride * oh:stride, j:j + stride * ow:stride, :])
    p = jnp.stack(cols, axis=3)                       # [N, OH, OW, kh*kw, C]
    return p.reshape(n * oh * ow, kh * kw * c), oh, ow


# ----------------------------------------------------------------------------
# pallas_call wrappers
# ----------------------------------------------------------------------------
def _conv_matmul(patches_p, pack, tm, n_m, cfg, *, act="none", with_stats=False,
                 m_real=0, out_dtype=jnp.bfloat16):
    mpad = patches_p.shape[0]
    kp, tk, cout, coutp = pack["kp"], pack["tk"], pack["cout"], pack["coutp"]
    n_k = kp // tk
    grid = (n_m, n_k)

    p_map = lambda i, kk: (i, kk)
    p_spec = pl.BlockSpec((tm, tk), p_map)
    if n_k == 1 and n_m >= 3:
        # DMA-exposed layer (small K, many M tiles): deeper buffering on the stream.
        try:
            p_spec = pl.BlockSpec((tm, tk), p_map, pipeline_mode=pl.Buffered(3))
        except TypeError:
            p_spec = pl.BlockSpec((tm, tk), p_map)

    in_specs = [
        p_spec,                                               # patches tile (bf16)
        pl.BlockSpec((tk, coutp), lambda i, kk: (kk, 0)),     # weight K-tile
        pl.BlockSpec((1, coutp), lambda i, kk: (0, 0)),       # bias resident
    ]
    scratch = [pltpu.VMEM((tm, coutp), jnp.float32)]          # f32 accumulator
    cost = pl.CostEstimate(
        flops=int(2 * m_real * pack["k"] * cout),
        transcendentals=0,
        bytes_accessed=int(patches_p.size * 2 + pack["w"].size * 2
                           + mpad * cout * jnp.dtype(out_dtype).itemsize),
    )
    cp = pltpu.CompilerParams(dimension_semantics=("parallel", "arbitrary"),
                              vmem_limit_bytes=cfg["vmem_limit"])

    if with_stats:
        out_shape = (jax.ShapeDtypeStruct((mpad, cout), out_dtype),
                     jax.ShapeDtypeStruct((n_m, 1, cout), jnp.float32),
                     jax.ShapeDtypeStruct((n_m, 1, cout), jnp.float32))
        out_specs = (pl.BlockSpec((tm, cout), lambda i, kk: (i, 0)),
                     pl.BlockSpec((1, 1, cout), lambda i, kk: (i, 0, 0)),
                     pl.BlockSpec((1, 1, cout), lambda i, kk: (i, 0, 0)))
        kern = functools.partial(_mm_bias_stats_kernel, n_k=n_k, n_m=n_m,
                                 cout=cout, tm=tm, m_real=m_real)
    else:
        out_shape = jax.ShapeDtypeStruct((mpad, cout), out_dtype)
        out_specs = pl.BlockSpec((tm, cout), lambda i, kk: (i, 0))
        kern = functools.partial(_mm_bias_act_kernel, act=act, n_k=n_k, cout=cout)

    return pl.pallas_call(
        kern,
        out_shape=out_shape,
        grid=grid,
        in_specs=in_specs,
        out_specs=out_specs,
        scratch_shapes=scratch,
        compiler_params=cp,
        cost_estimate=cost,
    )(patches_p, pack["w"], pack["b"])


def _bn_apply(y_p, scale, shift, tm, n_m, cfg):
    mpad, cout = y_p.shape
    return pl.pallas_call(
        _scale_shift_lrelu_kernel,
        out_shape=jax.ShapeDtypeStruct((mpad, cout), y_p.dtype),
        grid=(n_m,),
        in_specs=[pl.BlockSpec((tm, cout), lambda i: (i, 0)),
                  pl.BlockSpec((1, cout), lambda i: (0, 0)),
                  pl.BlockSpec((1, cout), lambda i: (0, 0))],
        out_specs=pl.BlockSpec((tm, cout), lambda i: (i, 0)),
        compiler_params=pltpu.CompilerParams(
            dimension_semantics=("parallel",), vmem_limit_bytes=cfg["vmem_limit"]),
    )(y_p, scale, shift)


def conv2d_pallas(x_nhwc, pack, mode, cfg, gamma=None, beta=None,
                  out_dtype=jnp.bfloat16):
    """Conv2d (+ optional train-mode BN(eps=0.8) + LeakyReLU(0.2)).  NHWC in/out."""
    n = x_nhwc.shape[0]
    patches, oh, ow = _im2col_nhwc(x_nhwc, pack["kh"], pack["kw"],
                                   pack["stride"], pack["pad"])      # [M, K]
    m, k = patches.shape
    kp, tk, cout, coutp = pack["kp"], pack["tk"], pack["cout"], pack["coutp"]

    out_itemsize = jnp.dtype(jnp.bfloat16 if mode == "bn_lrelu" else out_dtype).itemsize
    tm, n_m = _conv_tiles(m, tk, cout, coutp, out_itemsize, cfg["vmem_budget"])
    mpad = n_m * tm

    patches_p = jnp.pad(patches.astype(jnp.bfloat16), ((0, mpad - m), (0, kp - k)))

    if mode == "bn_lrelu":
        y_p, s1, s2 = _conv_matmul(patches_p, pack, tm, n_m, cfg,
                                   with_stats=True, m_real=m,
                                   out_dtype=jnp.bfloat16)
        ssum = jnp.sum(s1[:, 0, :], axis=0)                 # tiny cross-tile reduce
        ssq = jnp.sum(s2[:, 0, :], axis=0)
        mean = ssum / float(m)
        var = jnp.maximum(ssq / float(m) - mean * mean, 0.0)  # biased batch var
        scale = gamma * lax.rsqrt(var + BN_EPS)
        shift = beta - mean * scale
        y_p = _bn_apply(y_p, scale.reshape(1, cout), shift.reshape(1, cout),
                        tm, n_m, cfg)
    else:
        y_p = _conv_matmul(patches_p, pack, tm, n_m, cfg, act=mode,
                           m_real=m, out_dtype=out_dtype)

    return y_p[:m].reshape(n, oh, ow, cout)


def avgpool2d_pallas(x_nhwc, k, stride, pad, cfg):
    """AvgPool2d(k, stride, padding=pad, count_include_pad=False).  NHWC in/out (f32)."""
    n, h, w, c = x_nhwc.shape
    xf = x_nhwc.astype(jnp.float32)
    xp = jnp.pad(xf, ((0, 0), (pad, pad), (pad, pad), (0, 0)))
    oh = (h + 2 * pad - k) // stride + 1
    ow = (w + 2 * pad - k) // stride + 1
    cols = [xp[:, i:i + stride * oh:stride, j:j + stride * ow:stride, :]
            for i in range(k) for j in range(k)]
    m = n * oh * ow
    p = jnp.stack(cols, axis=3).reshape(m, k * k, c)        # [M, k*k, C]  (C unpadded)

    # per-output-pixel valid count (same across batch) -> reciprocal
    op = jnp.pad(jnp.ones((1, h, w, 1), jnp.float32),
                 ((0, 0), (pad, pad), (pad, pad), (0, 0)))
    cnt = sum(op[:, i:i + stride * oh:stride, j:j + stride * ow:stride, :]
              for i in range(k) for j in range(k))          # [1, OH, OW, 1]
    inv = jnp.broadcast_to(1.0 / cnt, (n, oh, ow, 1)).reshape(m, 1)

    per_row = 2 * k * k * c * 4 + 2 * 4 + 2 * c * 4
    tm, n_m = _choose_m_tiles(m, per_row, cfg["vmem_budget"])
    mpad = n_m * tm
    p_p = jnp.pad(p, ((0, mpad - m), (0, 0), (0, 0)))
    inv_p = jnp.pad(inv, ((0, mpad - m), (0, 0)), constant_values=1.0)

    y = pl.pallas_call(
        _avgpool_kernel,
        out_shape=jax.ShapeDtypeStruct((mpad, c), jnp.float32),
        grid=(n_m,),
        in_specs=[pl.BlockSpec((tm, k * k, c), lambda i: (i, 0, 0)),
                  pl.BlockSpec((tm, 1), lambda i: (i, 0))],
        out_specs=pl.BlockSpec((tm, c), lambda i: (i, 0)),
        compiler_params=pltpu.CompilerParams(
            dimension_semantics=("parallel",), vmem_limit_bytes=cfg["vmem_limit"]),
    )(p_p, inv_p)
    return y[:m].reshape(n, oh, ow, c)


# ----------------------------------------------------------------------------
# Discriminator (parameter init + weight pre-packing + forward)
# ----------------------------------------------------------------------------
def init_params(key, i_dim, n_dim, n_down, n_models):
    params = []
    for _ in range(n_models):
        key, k1, k2, k3, k4 = jax.random.split(key, 5)
        blk = {
            "head_w": 0.1 * jax.random.normal(k1, (n_dim, i_dim, 4, 4), jnp.float32),
            "head_b": 0.1 * jax.random.normal(k2, (n_dim,), jnp.float32),
        }
        body = []
        for i in range(n_down):
            key, kw_, kb_ = jax.random.split(key, 3)
            cin = n_dim * 2 ** i
            co = n_dim * 2 ** (i + 1)
            body.append((
                0.1 * jax.random.normal(kw_, (co, cin, 4, 4), jnp.float32),
                0.1 * jax.random.normal(kb_, (co,), jnp.float32),
                jnp.ones((co,), jnp.float32),   # BN gamma (torch default)
                jnp.zeros((co,), jnp.float32),  # BN beta  (torch default)
            ))
        blk["body"] = body
        ct = n_dim * 2 ** n_down
        blk["term_w"] = 0.1 * jax.random.normal(k3, (1, ct, 3, 3), jnp.float32)
        blk["term_b"] = 0.1 * jax.random.normal(k4, (1,), jnp.float32)
        params.append(blk)
    return params


def _pack_conv(w_oihw, b, stride, pad, cfg):
    """Pre-pack once: OIHW -> lane-dense [Kp, CoutP] bf16 weight + padded f32 bias."""
    cout, cin, kh, kw = w_oihw.shape
    dims = _conv_dims(cin, cout, kh, kw, cfg["mxu_align"])
    wmat = jnp.transpose(w_oihw, (2, 3, 1, 0)).reshape(dims["k"], cout)   # (kh,kw,Cin)-major
    w_p = jnp.pad(wmat, ((0, dims["kp"] - dims["k"]),
                         (0, dims["coutp"] - cout))).astype(jnp.bfloat16)
    b_p = jnp.pad(b.astype(jnp.float32).reshape(1, cout),
                  ((0, 0), (0, dims["coutp"] - cout)))
    return dict(dims, w=w_p, b=b_p, kh=kh, kw=kw, stride=stride, pad=pad)


def prepare_params(params, cfg):
    packed = []
    for blk in params:
        pb = {
            "head": _pack_conv(blk["head_w"], blk["head_b"], 2, 1, cfg),
            "body": [(_pack_conv(w, b, 2, 1, cfg),
                      g.astype(jnp.float32), be.astype(jnp.float32))
                     for (w, b, g, be) in blk["body"]],
            "term": _pack_conv(blk["term_w"], blk["term_b"], 1, 1, cfg),
        }
        packed.append(pb)
    return packed


def dis_block_pallas(x_nhwc, pblk, cfg):
    x = conv2d_pallas(x_nhwc, pblk["head"], "lrelu", cfg)                 # bf16 out
    for (pack, g, be) in pblk["body"]:
        x = conv2d_pallas(x, pack, "bn_lrelu", cfg, gamma=g, beta=be)     # bf16 out
    return conv2d_pallas(x, pblk["term"], "none", cfg, out_dtype=jnp.float32)


def discriminator_pallas(x_nchw, packed, i_dim, cfg):
    x = jnp.transpose(x_nchw, (0, 2, 3, 1)).astype(jnp.float32)  # NCHW -> NHWC once
    responses = []
    for pblk in packed:
        y = dis_block_pallas(x, pblk, cfg)
        responses.append(jnp.transpose(y, (0, 3, 1, 2)))         # back to NCHW
        x = avgpool2d_pallas(x, i_dim, 2, 1, cfg)                # AvgPool2d(i_dim,2,[1,1])
    return responses


# ----------------------------------------------------------------------------
# pure-JAX reference (sanity check)
# ----------------------------------------------------------------------------
def _ref_conv(x, w, b, stride, pad):
    y = lax.conv_general_dilated(x, w, (stride, stride), ((pad, pad), (pad, pad)),
                                 dimension_numbers=("NCHW", "OIHW", "NCHW"))
    return y + b.reshape(1, -1, 1, 1)


def _ref_bn(y, g, be):
    mean = y.mean(axis=(0, 2, 3), keepdims=True)
    var = ((y - mean) ** 2).mean(axis=(0, 2, 3), keepdims=True)
    return (y - mean) / jnp.sqrt(var + BN_EPS) * g.reshape(1, -1, 1, 1) + be.reshape(1, -1, 1, 1)


def _ref_lrelu(y):
    return jnp.where(y >= 0, y, LRELU_SLOPE * y)


def _ref_avgpool(x, k, stride, pad):
    n, c, h, w = x.shape
    xp = jnp.pad(x, ((0, 0), (0, 0), (pad, pad), (pad, pad)))
    op = jnp.pad(jnp.ones((1, 1, h, w), x.dtype), ((0, 0), (0, 0), (pad, pad), (pad, pad)))
    s = lax.reduce_window(xp, 0.0, lax.add, (1, 1, k, k), (1, 1, stride, stride), "VALID")
    cnt = lax.reduce_window(op, 0.0, lax.add, (1, 1, k, k), (1, 1, stride, stride), "VALID")
    return s / cnt


def discriminator_ref(x, params, i_dim):
    responses = []
    for blk in params:
        y = _ref_lrelu(_ref_conv(x, blk["head_w"], blk["head_b"], 2, 1))
        for (w, b, g, be) in blk["body"]:
            y = _ref_lrelu(_ref_bn(_ref_conv(y, w, b, 2, 1), g, be))
        responses.append(_ref_conv(y, blk["term_w"], blk["term_b"], 1, 1))
        x = _ref_avgpool(x, i_dim, 2, 1)
    return responses


# ----------------------------------------------------------------------------
if __name__ == "__main__":
    i_dim, n_dim, n_down, n_models = 3, 4, 1, 2
    N, H, W = 2, 16, 16

    key = jax.random.PRNGKey(0)
    kx, kparam = jax.random.split(key)
    x = jax.random.normal(kx, (N, i_dim, H, W), jnp.float32)
    params = init_params(kparam, i_dim, n_dim, n_down, n_models)

    cfg = _gen_config()
    packed = prepare_params(params, cfg)        # weights packed once, outside the step

    fwd = jax.jit(lambda xx: discriminator_pallas(xx, packed, i_dim, cfg))
    outs = jax.block_until_ready(fwd(x))

    refs = discriminator_ref(x, params, i_dim)
    for o, r in zip(outs, refs):
        assert o.shape == r.shape, (o.shape, r.shape)
        max_diff = float(jnp.max(jnp.abs(o - r)))
        # bf16 MXU operands + bf16 intermediates: compare loosely vs f32 reference
        assert max_diff < 5e-2, f"mismatch: {max_diff}"

    print("KERNEL_OK")
</pallas_src>

<mosaic_0001>
module attributes {stable_mosaic.version = 11 : i64} {
  func.func @_mm_bias_act_kernel(%arg0: i32, %arg1: i32, %arg2: memref<128x48xbf16, #tpu.memory_space<vmem>>, %arg3: memref<48x128xbf16, #tpu.memory_space<vmem>>, %arg4: memref<1x128xf32, #tpu.memory_space<vmem>>, %arg5: memref<128x4xbf16, #tpu.memory_space<vmem>>, %arg6: memref<128x128xf32, #tpu.memory_space<vmem>>) attributes {dimension_semantics = [#tpu.dimension_semantics<parallel>, #tpu.dimension_semantics<arbitrary>], iteration_bounds = array<i64: 1, 1>, scalar_prefetch = 0 : i64, scratch_operands = 1 : i64, tpu.core_type = #tpu.core_type<tc>, window_params = [{transform_indices = @transform_0, window_bounds = array<i64: 128, 48>}, {transform_indices = @transform_1, window_bounds = array<i64: 48, 128>}, {pipeline_mode = #tpu.pipeline_mode<synchronous>, transform_indices = @transform_2, window_bounds = array<i64: 1, 128>}, {transform_indices = @transform_3, window_bounds = array<i64: 128, 4>}]} {
    %c0_i32 = arith.constant 0 : i32
    %0 = arith.cmpi eq, %arg1, %c0_i32 : i32
    %1 = arith.extui %0 : i1 to i32
    %c0_i32_0 = arith.constant 0 : i32
    %2 = arith.cmpi ne, %1, %c0_i32_0 : i32
    scf.if %2 {
      %cst_10 = arith.constant 0.000000e+00 : f32
      %12 = vector.broadcast %cst_10 : f32 to vector<128x128xf32>
      %c0_11 = arith.constant 0 : index
      %c0_12 = arith.constant 0 : index
      %13 = vector.load %arg6[%c0_11, %c0_12] : memref<128x128xf32, #tpu.memory_space<vmem>>, vector<128x128xf32>
      tpu.vector_store %arg6[%c0_11, %c0_12], %12 {strides = array<i32>} : memref<128x128xf32, #tpu.memory_space<vmem>>, vector<128x128xf32>,
    } else {
    }
    %c0 = arith.constant 0 : index
    %c0_1 = arith.constant 0 : index
    %3 = vector.load %arg6[%c0, %c0_1] : memref<128x128xf32, #tpu.memory_space<vmem>>, vector<128x128xf32>
    %c0_2 = arith.constant 0 : index
    %c0_3 = arith.constant 0 : index
    %4 = vector.load %arg2[%c0_2, %c0_3] : memref<128x48xbf16, #tpu.memory_space<vmem>>, vector<128x48xbf16>
    %c0_4 = arith.constant 0 : index
    %c0_5 = arith.constant 0 : index
    %5 = vector.load %arg3[%c0_4, %c0_5] : memref<48x128xbf16, #tpu.memory_space<vmem>>, vector<48x128xbf16>
    %cst = arith.constant dense<0.000000e+00> : vector<128x128xf32>
    %6 = tpu.matmul %4, %5, %cst {dimension_numbers = #tpu.dot_dimension_numbers<[1], [0], [0], [1], [0, 0, 1, 1], [], []>} : vector<128x48xbf16>, vector<48x128xbf16>, vector<128x128xf32> -> vector<128x128xf32>
    %7 = arith.addf %3, %6 : vector<128x128xf32>
    %c0_6 = arith.constant 0 : index
    %c0_7 = arith.constant 0 : index
    %8 = vector.load %arg6[%c0_6, %c0_7] : memref<128x128xf32, #tpu.memory_space<vmem>>, vector<128x128xf32>
    tpu.vector_store %arg6[%c0_6, %c0_7], %7 {strides = array<i32>} : memref<128x128xf32, #tpu.memory_space<vmem>>, vector<128x128xf32>,
    %c0_i32_8 = arith.constant 0 : i32
    %9 = arith.cmpi eq, %arg1, %c0_i32_8 : i32
    %10 = arith.extui %9 : i1 to i32
    %c0_i32_9 = arith.constant 0 : i32
    %11 = arith.cmpi ne, %10, %c0_i32_9 : i32
    scf.if %11 {
      %c0_10 = arith.constant 0 : index
      %c0_11 = arith.constant 0 : index
      %12 = vector.load %arg6[%c0_10, %c0_11] : memref<128x128xf32, #tpu.memory_space<vmem>>, vector<128x128xf32>
      %c0_12 = arith.constant 0 : index
      %c0_13 = arith.constant 0 : index
      %13 = vector.load %arg4[%c0_12, %c0_13] : memref<1x128xf32, #tpu.memory_space<vmem>>, vector<1x128xf32>
      %14 = vector.broadcast %13 : vector<1x128xf32> to vector<128x128xf32>
      %15 = arith.addf %12, %14 : vector<128x128xf32>
      %16 = vector.extract_strided_slice %15 {offsets = [0, 0], sizes = [128, 4], strides = [1, 1]} : vector<128x128xf32> to vector<128x4xf32>
      %cst_14 = arith.constant 0.000000e+00 : f32
      %17 = vector.broadcast %cst_14 : f32 to vector<128x4xf32>
      %18 = arith.cmpf oge, %16, %17 : vector<128x4xf32>
      %cst_15 = arith.constant 2.000000e-01 : f32
      %19 = vector.broadcast %cst_15 : f32 to vector<128x4xf32>
      %20 = arith.mulf %19, %16 : vector<128x4xf32>
      %21 = arith.select %18, %16, %20 : vector<128x4xi1>, vector<128x4xf32>
      %22 = arith.truncf %21 : vector<128x4xf32> to vector<128x4xbf16>
      %c0_16 = arith.constant 0 : index
      %c0_17 = arith.constant 0 : index
      %23 = vector.load %arg5[%c0_16, %c0_17] : memref<128x4xbf16, #tpu.memory_space<vmem>>, vector<128x4xbf16>
      tpu.vector_store %arg5[%c0_16, %c0_17], %22 {strides = array<i32>} : memref<128x4xbf16, #tpu.memory_space<vmem>>, vector<128x4xbf16>,
    } else {
    }
    return
  }
  func.func @transform_0(%arg0: i32, %arg1: i32) -> (i32, i32) {
    %c0_i32 = arith.constant 0 : i32
    return %arg0, %arg1 : i32, i32
  }
  func.func @transform_1(%arg0: i32, %arg1: i32) -> (i32, i32) {
    %c0_i32 = arith.constant 0 : i32
    %c0_i32_0 = arith.constant 0 : i32
    return %arg1, %c0_i32 : i32, i32
  }
  func.func @transform_2(%arg0: i32, %arg1: i32) -> (i32, i32) {
    %c0_i32 = arith.constant 0 : i32
    %c0_i32_0 = arith.constant 0 : i32
    %c0_i32_1 = arith.constant 0 : i32
    return %c0_i32, %c0_i32_0 : i32, i32
  }
  func.func @transform_3(%arg0: i32, %arg1: i32) -> (i32, i32) {
    %c0_i32 = arith.constant 0 : i32
    %c0_i32_0 = arith.constant 0 : i32
    return %arg0, %c0_i32 : i32, i32
  }
}

module attributes {stable_mosaic.version = 11 : i64} {
  func.func @_mm_bias_stats_kernel(%arg0: i32, %arg1: i32, %arg2: memref<32x64xbf16, #tpu.memory_space<vmem>>, %arg3: memref<64x128xbf16, #tpu.memory_space<vmem>>, %arg4: memref<1x128xf32, #tpu.memory_space<vmem>>, %arg5: memref<32x8xbf16, #tpu.memory_space<vmem>>, %arg6: memref<1x1x8xf32, #tpu.memory_space<vmem>>, %arg7: memref<1x1x8xf32, #tpu.memory_space<vmem>>, %arg8: memref<32x128xf32, #tpu.memory_space<vmem>>) attributes {dimension_semantics = [#tpu.dimension_semantics<parallel>, #tpu.dimension_semantics<arbitrary>], iteration_bounds = array<i64: 1, 1>, scalar_prefetch = 0 : i64, scratch_operands = 1 : i64, tpu.core_type = #tpu.core_type<tc>, window_params = [{transform_indices = @transform_0, window_bounds = array<i64: 32, 64>}, {transform_indices = @transform_1, window_bounds = array<i64: 64, 128>}, {pipeline_mode = #tpu.pipeline_mode<synchronous>, transform_indices = @transform_2, window_bounds = array<i64: 1, 128>}, {transform_indices = @transform_3, window_bounds = array<i64: 32, 8>}, {transform_indices = @transform_4, window_bounds = array<i64: 1, 1, 8>}, {transform_indices = @transform_5, window_bounds = array<i64: 1, 1, 8>}]} {
    %c0_i32 = arith.constant 0 : i32
    %0 = arith.cmpi eq, %arg1, %c0_i32 : i32
    %1 = arith.extui %0 : i1 to i32
    %c0_i32_0 = arith.constant 0 : i32
    %2 = arith.cmpi ne, %1, %c0_i32_0 : i32
    scf.if %2 {
      %cst_11 = arith.constant 0.000000e+00 : f32
      %14 = vector.broadcast %cst_11 : f32 to vector<32x128xf32>
      %c0_12 = arith.constant 0 : index
      %c0_13 = arith.constant 0 : index
      %15 = vector.load %arg8[%c0_12, %c0_13] : memref<32x128xf32, #tpu.memory_space<vmem>>, vector<32x128xf32>
      tpu.vector_store %arg8[%c0_12, %c0_13], %14 {strides = array<i32>} : memref<32x128xf32, #tpu.memory_space<vmem>>, vector<32x128xf32>,
    } else {
    }
    %c0 = arith.constant 0 : index
    %c0_1 = arith.constant 0 : index
    %3 = vector.load %arg8[%c0, %c0_1] : memref<32x128xf32, #tpu.memory_space<vmem>>, vector<32x128xf32>
    %c0_2 = arith.constant 0 : index
    %c0_3 = arith.constant 0 : index
    %4 = vector.load %arg2[%c0_2, %c0_3] : memref<32x64xbf16, #tpu.memory_space<vmem>>, vector<32x64xbf16>
    %c0_4 = arith.constant 0 : index
    %c0_5 = arith.constant 0 : index
    %5 = vector.load %arg3[%c0_4, %c0_5] : memref<64x128xbf16, #tpu.memory_space<vmem>>, vector<64x128xbf16>
    %cst = arith.constant dense<0.000000e+00> : vector<32x128xf32>
    %6 = tpu.matmul %4, %5, %cst {dimension_numbers = #tpu.dot_dimension_numbers<[1], [0], [0], [1], [0, 0, 1, 1], [], []>} : vector<32x64xbf16>, vector<64x128xbf16>, vector<32x128xf32> -> vector<32x128xf32>
    %7 = arith.addf %3, %6 : vector<32x128xf32>
    %c0_6 = arith.constant 0 : index
    %c0_7 = arith.constant 0 : index
    %8 = vector.load %arg8[%c0_6, %c0_7] : memref<32x128xf32, #tpu.memory_space<vmem>>, vector<32x128xf32>
    tpu.vector_store %arg8[%c0_6, %c0_7], %7 {strides = array<i32>} : memref<32x128xf32, #tpu.memory_space<vmem>>, vector<32x128xf32>,
    %c0_i32_8 = arith.constant 0 : i32
    %9 = arith.cmpi eq, %arg1, %c0_i32_8 : i32
    %10 = arith.extui %9 : i1 to i32
    %c0_i32_9 = arith.constant 0 : i32
    %11 = arith.cmpi ne, %10, %c0_i32_9 : i32
    scf.if %11 {
      %c0_11 = arith.constant 0 : index
      %c0_12 = arith.constant 0 : index
      %14 = vector.load %arg8[%c0_11, %c0_12] : memref<32x128xf32, #tpu.memory_space<vmem>>, vector<32x128xf32>
      %c0_13 = arith.constant 0 : index
      %c0_14 = arith.constant 0 : index
      %15 = vector.load %arg4[%c0_13, %c0_14] : memref<1x128xf32, #tpu.memory_space<vmem>>, vector<1x128xf32>
      %16 = vector.broadcast %15 : vector<1x128xf32> to vector<32x128xf32>
      %17 = arith.addf %14, %16 : vector<32x128xf32>
      %18 = vector.extract_strided_slice %17 {offsets = [0, 0], sizes = [32, 8], strides = [1, 1]} : vector<32x128xf32> to vector<32x8xf32>
      %19 = arith.truncf %18 : vector<32x8xf32> to vector<32x8xbf16>
      %c0_15 = arith.constant 0 : index
      %c0_16 = arith.constant 0 : index
      %20 = vector.load %arg5[%c0_15, %c0_16] : memref<32x8xbf16, #tpu.memory_space<vmem>>, vector<32x8xbf16>
      tpu.vector_store %arg5[%c0_15, %c0_16], %19 {strides = array<i32>} : memref<32x8xbf16, #tpu.memory_space<vmem>>, vector<32x8xbf16>,
    } else {
    }
    %12 = arith.extui %9 : i1 to i32
    %c0_i32_10 = arith.constant 0 : i32
    %13 = arith.cmpi ne, %12, %c0_i32_10 : i32
    scf.if %13 {
      %c0_11 = arith.constant 0 : index
      %c0_12 = arith.constant 0 : index
      %14 = vector.load %arg8[%c0_11, %c0_12] : memref<32x128xf32, #tpu.memory_space<vmem>>, vector<32x128xf32>
      %c0_13 = arith.constant 0 : index
      %c0_14 = arith.constant 0 : index
      %15 = vector.load %arg4[%c0_13, %c0_14] : memref<1x128xf32, #tpu.memory_space<vmem>>, vector<1x128xf32>
      %16 = vector.broadcast %15 : vector<1x128xf32> to vector<32x128xf32>
      %17 = arith.addf %14, %16 : vector<32x128xf32>
      %18 = vector.extract_strided_slice %17 {offsets = [0, 0], sizes = [32, 8], strides = [1, 1]} : vector<32x128xf32> to vector<32x8xf32>
      %cst_15 = arith.constant dense<0.000000e+00> : vector<8xf32>
      %19 = vector.multi_reduction <add>, %18, %cst_15 [0] : vector<32x8xf32> to vector<8xf32>
      %20 = vector.shape_cast %19 : vector<8xf32> to vector<1x8xf32>
      %21 = vector.shape_cast %20 : vector<1x8xf32> to vector<1x1x8xf32>
      %c0_16 = arith.constant 0 : index
      %c0_17 = arith.constant 0 : index
      %c0_18 = arith.constant 0 : index
      %22 = vector.load %arg6[%c0_16, %c0_17, %c0_18] : memref<1x1x8xf32, #tpu.memory_space<vmem>>, vector<1x1x8xf32>
      tpu.vector_store %arg6[%c0_16, %c0_17, %c0_18], %21 {strides = array<i32>} : memref<1x1x8xf32, #tpu.memory_space<vmem>>, vector<1x1x8xf32>,
      %23 = arith.mulf %18, %18 : vector<32x8xf32>
      %cst_19 = arith.constant dense<0.000000e+00> : vector<8xf32>
      %24 = vector.multi_reduction <add>, %23, %cst_19 [0] : vector<32x8xf32> to vector<8xf32>
      %25 = vector.shape_cast %24 : vector<8xf32> to vector<1x8xf32>
      %26 = vector.shape_cast %25 : vector<1x8xf32> to vector<1x1x8xf32>
      %c0_20 = arith.constant 0 : index
      %c0_21 = arith.constant 0 : index
      %c0_22 = arith.constant 0 : index
      %27 = vector.load %arg7[%c0_20, %c0_21, %c0_22] : memref<1x1x8xf32, #tpu.memory_space<vmem>>, vector<1x1x8xf32>
      tpu.vector_store %arg7[%c0_20, %c0_21, %c0_22], %26 {strides = array<i32>} : memref<1x1x8xf32, #tpu.memory_space<vmem>>, vector<1x1x8xf32>,
    } else {
    }
    return
  }
  func.func @transform_0(%arg0: i32, %arg1: i32) -> (i32, i32) {
    %c0_i32 = arith.constant 0 : i32
    return %arg0, %arg1 : i32, i32
  }
  func.func @transform_1(%arg0: i32, %arg1: i32) -> (i32, i32) {
    %c0_i32 = arith.constant 0 : i32
    %c0_i32_0 = arith.constant 0 : i32
    return %arg1, %c0_i32 : i32, i32
  }
  func.func @transform_2(%arg0: i32, %arg1: i32) -> (i32, i32) {
    %c0_i32 = arith.constant 0 : i32
    %c0_i32_0 = arith.constant 0 : i32
    %c0_i32_1 = arith.constant 0 : i32
    return %c0_i32, %c0_i32_0 : i32, i32
  }
  func.func @transform_3(%arg0: i32, %arg1: i32) -> (i32, i32) {
    %c0_i32 = arith.constant 0 : i32
    %c0_i32_0 = arith.constant 0 : i32
    return %arg0, %c0_i32 : i32, i32
  }
  func.func @transform_4(%arg0: i32, %arg1: i32) -> (i32, i32, i32) {
    %c0_i32 = arith.constant 0 : i32
    %c0_i32_0 = arith.constant 0 : i32
    %c0_i32_1 = arith.constant 0 : i32
    return %arg0, %c0_i32, %c0_i32_0 : i32, i32, i32
  }
  func.func @transform_5(%arg0: i32, %arg1: i32) -> (i32, i32, i32) {
    %c0_i32 = arith.constant 0 : i32
    %c0_i32_0 = arith.constant 0 : i32
    %c0_i32_1 = arith.constant 0 : i32
    return %arg0, %c0_i32, %c0_i32_0 : i32, i32, i32
  }
}

module attributes {stable_mosaic.version = 11 : i64} {
  func.func @_scale_shift_lrelu_kernel(%arg0: i32, %arg1: memref<32x8xbf16, #tpu.memory_space<vmem>>, %arg2: memref<1x8xf32, #tpu.memory_space<vmem>>, %arg3: memref<1x8xf32, #tpu.memory_space<vmem>>, %arg4: memref<32x8xbf16, #tpu.memory_space<vmem>>) attributes {dimension_semantics = [#tpu.dimension_semantics<parallel>], iteration_bounds = array<i64: 1>, scalar_prefetch = 0 : i64, scratch_operands = 0 : i64, tpu.core_type = #tpu.core_type<tc>, window_params = [{transform_indices = @transform_0, window_bounds = array<i64: 32, 8>}, {pipeline_mode = #tpu.pipeline_mode<synchronous>, transform_indices = @transform_1, window_bounds = array<i64: 1, 8>}, {pipeline_mode = #tpu.pipeline_mode<synchronous>, transform_indices = @transform_2, window_bounds = array<i64: 1, 8>}, {transform_indices = @transform_3, window_bounds = array<i64: 32, 8>}]} {
    %c0 = arith.constant 0 : index
    %c0_0 = arith.constant 0 : index
    %0 = vector.load %arg1[%c0, %c0_0] : memref<32x8xbf16, #tpu.memory_space<vmem>>, vector<32x8xbf16>
    %1 = arith.extf %0 : vector<32x8xbf16> to vector<32x8xf32>
    %c0_1 = arith.constant 0 : index
    %c0_2 = arith.constant 0 : index
    %2 = vector.load %arg2[%c0_1, %c0_2] : memref<1x8xf32, #tpu.memory_space<vmem>>, vector<1x8xf32>
    %3 = vector.broadcast %2 : vector<1x8xf32> to vector<32x8xf32>
    %4 = arith.mulf %1, %3 : vector<32x8xf32>
    %c0_3 = arith.constant 0 : index
    %c0_4 = arith.constant 0 : index
    %5 = vector.load %arg3[%c0_3, %c0_4] : memref<1x8xf32, #tpu.memory_space<vmem>>, vector<1x8xf32>
    %6 = vector.broadcast %5 : vector<1x8xf32> to vector<32x8xf32>
    %7 = arith.addf %4, %6 : vector<32x8xf32>
    %cst = arith.constant 0.000000e+00 : f32
    %8 = vector.broadcast %cst : f32 to vector<32x8xf32>
    %9 = arith.cmpf oge, %7, %8 : vector<32x8xf32>
    %cst_5 = arith.constant 2.000000e-01 : f32
    %10 = vector.broadcast %cst_5 : f32 to vector<32x8xf32>
    %11 = arith.mulf %10, %7 : vector<32x8xf32>
    %12 = arith.select %9, %7, %11 : vector<32x8xi1>, vector<32x8xf32>
    %13 = arith.truncf %12 : vector<32x8xf32> to vector<32x8xbf16>
    %c0_6 = arith.constant 0 : index
    %c0_7 = arith.constant 0 : index
    %14 = vector.load %arg4[%c0_6, %c0_7] : memref<32x8xbf16, #tpu.memory_space<vmem>>, vector<32x8xbf16>
    tpu.vector_store %arg4[%c0_6, %c0_7], %13 {strides = array<i32>} : memref<32x8xbf16, #tpu.memory_space<vmem>>, vector<32x8xbf16>,
    return
  }
  func.func @transform_0(%arg0: i32) -> (i32, i32) {
    %c0_i32 = arith.constant 0 : i32
    %c0_i32_0 = arith.constant 0 : i32
    return %arg0, %c0_i32 : i32, i32
  }
  func.func @transform_1(%arg0: i32) -> (i32, i32) {
    %c0_i32 = arith.constant 0 : i32
    %c0_i32_0 = arith.constant 0 : i32
    %c0_i32_1 = arith.constant 0 : i32
    return %c0_i32, %c0_i32_0 : i32, i32
  }
  func.func @transform_2(%arg0: i32) -> (i32, i32) {
    %c0_i32 = arith.constant 0 : i32
    %c0_i32_0 = arith.constant 0 : i32
    %c0_i32_1 = arith.constant 0 : i32
    return %c0_i32, %c0_i32_0 : i32, i32
  }
  func.func @transform_3(%arg0: i32) -> (i32, i32) {
    %c0_i32 = arith.constant 0 : i32
    %c0_i32_0 = arith.constant 0 : i32
    return %arg0, %c0_i32 : i32, i32
  }
}

module attributes {stable_mosaic.version = 11 : i64} {
  func.func @_mm_bias_act_kernel(%arg0: i32, %arg1: i32, %arg2: memref<32x72xbf16, #tpu.memory_space<vmem>>, %arg3: memref<72x128xbf16, #tpu.memory_space<vmem>>, %arg4: memref<1x128xf32, #tpu.memory_space<vmem>>, %arg5: memref<32x1xf32, #tpu.memory_space<vmem>>, %arg6: memref<32x128xf32, #tpu.memory_space<vmem>>) attributes {dimension_semantics = [#tpu.dimension_semantics<parallel>, #tpu.dimension_semantics<arbitrary>], iteration_bounds = array<i64: 1, 1>, scalar_prefetch = 0 : i64, scratch_operands = 1 : i64, tpu.core_type = #tpu.core_type<tc>, window_params = [{transform_indices = @transform_0, window_bounds = array<i64: 32, 72>}, {transform_indices = @transform_1, window_bounds = array<i64: 72, 128>}, {pipeline_mode = #tpu.pipeline_mode<synchronous>, transform_indices = @transform_2, window_bounds = array<i64: 1, 128>}, {transform_indices = @transform_3, window_bounds = array<i64: 32, 1>}]} {
    %c0_i32 = arith.constant 0 : i32
    %0 = arith.cmpi eq, %arg1, %c0_i32 : i32
    %1 = arith.extui %0 : i1 to i32
    %c0_i32_0 = arith.constant 0 : i32
    %2 = arith.cmpi ne, %1, %c0_i32_0 : i32
    scf.if %2 {
      %cst_10 = arith.constant 0.000000e+00 : f32
      %12 = vector.broadcast %cst_10 : f32 to vector<32x128xf32>
      %c0_11 = arith.constant 0 : index
      %c0_12 = arith.constant 0 : index
      %13 = vector.load %arg6[%c0_11, %c0_12] : memref<32x128xf32, #tpu.memory_space<vmem>>, vector<32x128xf32>
      tpu.vector_store %arg6[%c0_11, %c0_12], %12 {strides = array<i32>} : memref<32x128xf32, #tpu.memory_space<vmem>>, vector<32x128xf32>,
    } else {
    }
    %c0 = arith.constant 0 : index
    %c0_1 = arith.constant 0 : index
    %3 = vector.load %arg6[%c0, %c0_1] : memref<32x128xf32, #tpu.memory_space<vmem>>, vector<32x128xf32>
    %c0_2 = arith.constant 0 : index
    %c0_3 = arith.constant 0 : index
    %4 = vector.load %arg2[%c0_2, %c0_3] : memref<32x72xbf16, #tpu.memory_space<vmem>>, vector<32x72xbf16>
    %c0_4 = arith.constant 0 : index
    %c0_5 = arith.constant 0 : index
    %5 = vector.load %arg3[%c0_4, %c0_5] : memref<72x128xbf16, #tpu.memory_space<vmem>>, vector<72x128xbf16>
    %cst = arith.constant dense<0.000000e+00> : vector<32x128xf32>
    %6 = tpu.matmul %4, %5, %cst {dimension_numbers = #tpu.dot_dimension_numbers<[1], [0], [0], [1], [0, 0, 1, 1], [], []>} : vector<32x72xbf16>, vector<72x128xbf16>, vector<32x128xf32> -> vector<32x128xf32>
    %7 = arith.addf %3, %6 : vector<32x128xf32>
    %c0_6 = arith.constant 0 : index
    %c0_7 = arith.constant 0 : index
    %8 = vector.load %arg6[%c0_6, %c0_7] : memref<32x128xf32, #tpu.memory_space<vmem>>, vector<32x128xf32>
    tpu.vector_store %arg6[%c0_6, %c0_7], %7 {strides = array<i32>} : memref<32x128xf32, #tpu.memory_space<vmem>>, vector<32x128xf32>,
    %c0_i32_8 = arith.constant 0 : i32
    %9 = arith.cmpi eq, %arg1, %c0_i32_8 : i32
    %10 = arith.extui %9 : i1 to i32
    %c0_i32_9 = arith.constant 0 : i32
    %11 = arith.cmpi ne, %10, %c0_i32_9 : i32
    scf.if %11 {
      %c0_10 = arith.constant 0 : index
      %c0_11 = arith.constant 0 : index
      %12 = vector.load %arg6[%c0_10, %c0_11] : memref<32x128xf32, #tpu.memory_space<vmem>>, vector<32x128xf32>
      %c0_12 = arith.constant 0 : index
      %c0_13 = arith.constant 0 : index
      %13 = vector.load %arg4[%c0_12, %c0_13] : memref<1x128xf32, #tpu.memory_space<vmem>>, vector<1x128xf32>
      %14 = vector.broadcast %13 : vector<1x128xf32> to vector<32x128xf32>
      %15 = arith.addf %12, %14 : vector<32x128xf32>
      %16 = vector.extract_strided_slice %15 {offsets = [0, 0], sizes = [32, 1], strides = [1, 1]} : vector<32x128xf32> to vector<32x1xf32>
      %c0_14 = arith.constant 0 : index
      %c0_15 = arith.constant 0 : index
      %17 = vector.load %arg5[%c0_14, %c0_15] : memref<32x1xf32, #tpu.memory_space<vmem>>, vector<32x1xf32>
      tpu.vector_store %arg5[%c0_14, %c0_15], %16 {strides = array<i32>} : memref<32x1xf32, #tpu.memory_space<vmem>>, vector<32x1xf32>,
    } else {
    }
    return
  }
  func.func @transform_0(%arg0: i32, %arg1: i32) -> (i32, i32) {
    %c0_i32 = arith.constant 0 : i32
    return %arg0, %arg1 : i32, i32
  }
  func.func @transform_1(%arg0: i32, %arg1: i32) -> (i32, i32) {
    %c0_i32 = arith.constant 0 : i32
    %c0_i32_0 = arith.constant 0 : i32
    return %arg1, %c0_i32 : i32, i32
  }
  func.func @transform_2(%arg0: i32, %arg1: i32) -> (i32, i32) {
    %c0_i32 = arith.constant 0 : i32
    %c0_i32_0 = arith.constant 0 : i32
    %c0_i32_1 = arith.constant 0 : i32
    return %c0_i32, %c0_i32_0 : i32, i32
  }
  func.func @transform_3(%arg0: i32, %arg1: i32) -> (i32, i32) {
    %c0_i32 = arith.constant 0 : i32
    %c0_i32_0 = arith.constant 0 : i32
    return %arg0, %c0_i32 : i32, i32
  }
}

module attributes {stable_mosaic.version = 11 : i64} {
  func.func @_avgpool_kernel(%arg0: i32, %arg1: memref<128x9x3xf32, #tpu.memory_space<vmem>>, %arg2: memref<128x1xf32, #tpu.memory_space<vmem>>, %arg3: memref<128x3xf32, #tpu.memory_space<vmem>>) attributes {dimension_semantics = [#tpu.dimension_semantics<parallel>], iteration_bounds = array<i64: 1>, scalar_prefetch = 0 : i64, scratch_operands = 0 : i64, tpu.core_type = #tpu.core_type<tc>, window_params = [{transform_indices = @transform_0, window_bounds = array<i64: 128, 9, 3>}, {transform_indices = @transform_1, window_bounds = array<i64: 128, 1>}, {transform_indices = @transform_2, window_bounds = array<i64: 128, 3>}]} {
    %c0 = arith.constant 0 : index
    %c0_0 = arith.constant 0 : index
    %c0_1 = arith.constant 0 : index
    %0 = vector.load %arg1[%c0, %c0_0, %c0_1] : memref<128x9x3xf32, #tpu.memory_space<vmem>>, vector<128x9x3xf32>
    %cst = arith.constant dense<0.000000e+00> : vector<128x3xf32>
    %1 = vector.multi_reduction <add>, %0, %cst [1] : vector<128x9x3xf32> to vector<128x3xf32>
    %c0_2 = arith.constant 0 : index
    %c0_3 = arith.constant 0 : index
    %2 = vector.load %arg2[%c0_2, %c0_3] : memref<128x1xf32, #tpu.memory_space<vmem>>, vector<128x1xf32>
    %3 = vector.broadcast %2 : vector<128x1xf32> to vector<128x3xf32>
    %4 = arith.mulf %1, %3 : vector<128x3xf32>
    %c0_4 = arith.constant 0 : index
    %c0_5 = arith.constant 0 : index
    %5 = vector.load %arg3[%c0_4, %c0_5] : memref<128x3xf32, #tpu.memory_space<vmem>>, vector<128x3xf32>
    tpu.vector_store %arg3[%c0_4, %c0_5], %4 {strides = array<i32>} : memref<128x3xf32, #tpu.memory_space<vmem>>, vector<128x3xf32>,
    return
  }
  func.func @transform_0(%arg0: i32) -> (i32, i32, i32) {
    %c0_i32 = arith.constant 0 : i32
    %c0_i32_0 = arith.constant 0 : i32
    %c0_i32_1 = arith.constant 0 : i32
    return %arg0, %c0_i32, %c0_i32_0 : i32, i32, i32
  }
  func.func @transform_1(%arg0: i32) -> (i32, i32) {
    %c0_i32 = arith.constant 0 : i32
    %c0_i32_0 = arith.constant 0 : i32
    return %arg0, %c0_i32 : i32, i32
  }
  func.func @transform_2(%arg0: i32) -> (i32, i32) {
    %c0_i32 = arith.constant 0 : i32
    %c0_i32_0 = arith.constant 0 : i32
    return %arg0, %c0_i32 : i32, i32
  }
}

module attributes {stable_mosaic.version = 11 : i64} {
  func.func @_mm_bias_act_kernel(%arg0: i32, %arg1: i32, %arg2: memref<32x48xbf16, #tpu.memory_space<vmem>>, %arg3: memref<48x128xbf16, #tpu.memory_space<vmem>>, %arg4: memref<1x128xf32, #tpu.memory_space<vmem>>, %arg5: memref<32x4xbf16, #tpu.memory_space<vmem>>, %arg6: memref<32x128xf32, #tpu.memory_space<vmem>>) attributes {dimension_semantics = [#tpu.dimension_semantics<parallel>, #tpu.dimension_semantics<arbitrary>], iteration_bounds = array<i64: 1, 1>, scalar_prefetch = 0 : i64, scratch_operands = 1 : i64, tpu.core_type = #tpu.core_type<tc>, window_params = [{transform_indices = @transform_0, window_bounds = array<i64: 32, 48>}, {transform_indices = @transform_1, window_bounds = array<i64: 48, 128>}, {pipeline_mode = #tpu.pipeline_mode<synchronous>, transform_indices = @transform_2, window_bounds = array<i64: 1, 128>}, {transform_indices = @transform_3, window_bounds = array<i64: 32, 4>}]} {
    %c0_i32 = arith.constant 0 : i32
    %0 = arith.cmpi eq, %arg1, %c0_i32 : i32
    %1 = arith.extui %0 : i1 to i32
    %c0_i32_0 = arith.constant 0 : i32
    %2 = arith.cmpi ne, %1, %c0_i32_0 : i32
    scf.if %2 {
      %cst_10 = arith.constant 0.000000e+00 : f32
      %12 = vector.broadcast %cst_10 : f32 to vector<32x128xf32>
      %c0_11 = arith.constant 0 : index
      %c0_12 = arith.constant 0 : index
      %13 = vector.load %arg6[%c0_11, %c0_12] : memref<32x128xf32, #tpu.memory_space<vmem>>, vector<32x128xf32>
      tpu.vector_store %arg6[%c0_11, %c0_12], %12 {strides = array<i32>} : memref<32x128xf32, #tpu.memory_space<vmem>>, vector<32x128xf32>,
    } else {
    }
    %c0 = arith.constant 0 : index
    %c0_1 = arith.constant 0 : index
    %3 = vector.load %arg6[%c0, %c0_1] : memref<32x128xf32, #tpu.memory_space<vmem>>, vector<32x128xf32>
    %c0_2 = arith.constant 0 : index
    %c0_3 = arith.constant 0 : index
    %4 = vector.load %arg2[%c0_2, %c0_3] : memref<32x48xbf16, #tpu.memory_space<vmem>>, vector<32x48xbf16>
    %c0_4 = arith.constant 0 : index
    %c0_5 = arith.constant 0 : index
    %5 = vector.load %arg3[%c0_4, %c0_5] : memref<48x128xbf16, #tpu.memory_space<vmem>>, vector<48x128xbf16>
    %cst = arith.constant dense<0.000000e+00> : vector<32x128xf32>
    %6 = tpu.matmul %4, %5, %cst {dimension_numbers = #tpu.dot_dimension_numbers<[1], [0], [0], [1], [0, 0, 1, 1], [], []>} : vector<32x48xbf16>, vector<48x128xbf16>, vector<32x128xf32> -> vector<32x128xf32>
    %7 = arith.addf %3, %6 : vector<32x128xf32>
    %c0_6 = arith.constant 0 : index
    %c0_7 = arith.constant 0 : index
    %8 = vector.load %arg6[%c0_6, %c0_7] : memref<32x128xf32, #tpu.memory_space<vmem>>, vector<32x128xf32>
    tpu.vector_store %arg6[%c0_6, %c0_7], %7 {strides = array<i32>} : memref<32x128xf32, #tpu.memory_space<vmem>>, vector<32x128xf32>,
    %c0_i32_8 = arith.constant 0 : i32
    %9 = arith.cmpi eq, %arg1, %c0_i32_8 : i32
    %10 = arith.extui %9 : i1 to i32
    %c0_i32_9 = arith.constant 0 : i32
    %11 = arith.cmpi ne, %10, %c0_i32_9 : i32
    scf.if %11 {
      %c0_10 = arith.constant 0 : index
      %c0_11 = arith.constant 0 : index
      %12 = vector.load %arg6[%c0_10, %c0_11] : memref<32x128xf32, #tpu.memory_space<vmem>>, vector<32x128xf32>
      %c0_12 = arith.constant 0 : index
      %c0_13 = arith.constant 0 : index
      %13 = vector.load %arg4[%c0_12, %c0_13] : memref<1x128xf32, #tpu.memory_space<vmem>>, vector<1x128xf32>
      %14 = vector.broadcast %13 : vector<1x128xf32> to vector<32x128xf32>
      %15 = arith.addf %12, %14 : vector<32x128xf32>
      %16 = vector.extract_strided_slice %15 {offsets = [0, 0], sizes = [32, 4], strides = [1, 1]} : vector<32x128xf32> to vector<32x4xf32>
      %cst_14 = arith.constant 0.000000e+00 : f32
      %17 = vector.broadcast %cst_14 : f32 to vector<32x4xf32>
      %18 = arith.cmpf oge, %16, %17 : vector<32x4xf32>
      %cst_15 = arith.constant 2.000000e-01 : f32
      %19 = vector.broadcast %cst_15 : f32 to vector<32x4xf32>
      %20 = arith.mulf %19, %16 : vector<32x4xf32>
      %21 = arith.select %18, %16, %20 : vector<32x4xi1>, vector<32x4xf32>
      %22 = arith.truncf %21 : vector<32x4xf32> to vector<32x4xbf16>
      %c0_16 = arith.constant 0 : index
      %c0_17 = arith.constant 0 : index
      %23 = vector.load %arg5[%c0_16, %c0_17] : memref<32x4xbf16, #tpu.memory_space<vmem>>, vector<32x4xbf16>
      tpu.vector_store %arg5[%c0_16, %c0_17], %22 {strides = array<i32>} : memref<32x4xbf16, #tpu.memory_space<vmem>>, vector<32x4xbf16>,
    } else {
    }
    return
  }
  func.func @transform_0(%arg0: i32, %arg1: i32) -> (i32, i32) {
    %c0_i32 = arith.constant 0 : i32
    return %arg0, %arg1 : i32, i32
  }
  func.func @transform_1(%arg0: i32, %arg1: i32) -> (i32, i32) {
    %c0_i32 = arith.constant 0 : i32
    %c0_i32_0 = arith.constant 0 : i32
    return %arg1, %c0_i32 : i32, i32
  }
  func.func @transform_2(%arg0: i32, %arg1: i32) -> (i32, i32) {
    %c0_i32 = arith.constant 0 : i32
    %c0_i32_0 = arith.constant 0 : i32
    %c0_i32_1 = arith.constant 0 : i32
    return %c0_i32, %c0_i32_0 : i32, i32
  }
  func.func @transform_3(%arg0: i32, %arg1: i32) -> (i32, i32) {
    %c0_i32 = arith.constant 0 : i32
    %c0_i32_0 = arith.constant 0 : i32
    return %arg0, %c0_i32 : i32, i32
  }
}

module attributes {stable_mosaic.version = 11 : i64} {
  func.func @_scale_shift_lrelu_kernel(%arg0: i32, %arg1: memref<8x8xbf16, #tpu.memory_space<vmem>>, %arg2: memref<1x8xf32, #tpu.memory_space<vmem>>, %arg3: memref<1x8xf32, #tpu.memory_space<vmem>>, %arg4: memref<8x8xbf16, #tpu.memory_space<vmem>>) attributes {dimension_semantics = [#tpu.dimension_semantics<parallel>], iteration_bounds = array<i64: 1>, scalar_prefetch = 0 : i64, scratch_operands = 0 : i64, tpu.core_type = #tpu.core_type<tc>, window_params = [{transform_indices = @transform_0, window_bounds = array<i64: 8, 8>}, {pipeline_mode = #tpu.pipeline_mode<synchronous>, transform_indices = @transform_1, window_bounds = array<i64: 1, 8>}, {pipeline_mode = #tpu.pipeline_mode<synchronous>, transform_indices = @transform_2, window_bounds = array<i64: 1, 8>}, {transform_indices = @transform_3, window_bounds = array<i64: 8, 8>}]} {
    %c0 = arith.constant 0 : index
    %c0_0 = arith.constant 0 : index
    %0 = vector.load %arg1[%c0, %c0_0] : memref<8x8xbf16, #tpu.memory_space<vmem>>, vector<8x8xbf16>
    %1 = arith.extf %0 : vector<8x8xbf16> to vector<8x8xf32>
    %c0_1 = arith.constant 0 : index
    %c0_2 = arith.constant 0 : index
    %2 = vector.load %arg2[%c0_1, %c0_2] : memref<1x8xf32, #tpu.memory_space<vmem>>, vector<1x8xf32>
    %3 = vector.broadcast %2 : vector<1x8xf32> to vector<8x8xf32>
    %4 = arith.mulf %1, %3 : vector<8x8xf32>
    %c0_3 = arith.constant 0 : index
    %c0_4 = arith.constant 0 : index
    %5 = vector.load %arg3[%c0_3, %c0_4] : memref<1x8xf32, #tpu.memory_space<vmem>>, vector<1x8xf32>
    %6 = vector.broadcast %5 : vector<1x8xf32> to vector<8x8xf32>
    %7 = arith.addf %4, %6 : vector<8x8xf32>
    %cst = arith.constant 0.000000e+00 : f32
    %8 = vector.broadcast %cst : f32 to vector<8x8xf32>
    %9 = arith.cmpf oge, %7, %8 : vector<8x8xf32>
    %cst_5 = arith.constant 2.000000e-01 : f32
    %10 = vector.broadcast %cst_5 : f32 to vector<8x8xf32>
    %11 = arith.mulf %10, %7 : vector<8x8xf32>
    %12 = arith.select %9, %7, %11 : vector<8x8xi1>, vector<8x8xf32>
    %13 = arith.truncf %12 : vector<8x8xf32> to vector<8x8xbf16>
    %c0_6 = arith.constant 0 : index
    %c0_7 = arith.constant 0 : index
    %14 = vector.load %arg4[%c0_6, %c0_7] : memref<8x8xbf16, #tpu.memory_space<vmem>>, vector<8x8xbf16>
    tpu.vector_store %arg4[%c0_6, %c0_7], %13 {strides = array<i32>} : memref<8x8xbf16, #tpu.memory_space<vmem>>, vector<8x8xbf16>,
    return
  }
  func.func @transform_0(%arg0: i32) -> (i32, i32) {
    %c0_i32 = arith.constant 0 : i32
    %c0_i32_0 = arith.constant 0 : i32
    return %arg0, %c0_i32 : i32, i32
  }
  func.func @transform_1(%arg0: i32) -> (i32, i32) {
    %c0_i32 = arith.constant 0 : i32
    %c0_i32_0 = arith.constant 0 : i32
    %c0_i32_1 = arith.constant 0 : i32
    return %c0_i32, %c0_i32_0 : i32, i32
  }
  func.func @transform_2(%arg0: i32) -> (i32, i32) {
    %c0_i32 = arith.constant 0 : i32
    %c0_i32_0 = arith.constant 0 : i32
    %c0_i32_1 = arith.constant 0 : i32
    return %c0_i32, %c0_i32_0 : i32, i32
  }
  func.func @transform_3(%arg0: i32) -> (i32, i32) {
    %c0_i32 = arith.constant 0 : i32
    %c0_i32_0 = arith.constant 0 : i32
    return %arg0, %c0_i32 : i32, i32
  }
}

module attributes {stable_mosaic.version = 11 : i64} {
  func.func @_mm_bias_stats_kernel(%arg0: i32, %arg1: i32, %arg2: memref<8x64xbf16, #tpu.memory_space<vmem>>, %arg3: memref<64x128xbf16, #tpu.memory_space<vmem>>, %arg4: memref<1x128xf32, #tpu.memory_space<vmem>>, %arg5: memref<8x8xbf16, #tpu.memory_space<vmem>>, %arg6: memref<1x1x8xf32, #tpu.memory_space<vmem>>, %arg7: memref<1x1x8xf32, #tpu.memory_space<vmem>>, %arg8: memref<8x128xf32, #tpu.memory_space<vmem>>) attributes {dimension_semantics = [#tpu.dimension_semantics<parallel>, #tpu.dimension_semantics<arbitrary>], iteration_bounds = array<i64: 1, 1>, scalar_prefetch = 0 : i64, scratch_operands = 1 : i64, tpu.core_type = #tpu.core_type<tc>, window_params = [{transform_indices = @transform_0, window_bounds = array<i64: 8, 64>}, {transform_indices = @transform_1, window_bounds = array<i64: 64, 128>}, {pipeline_mode = #tpu.pipeline_mode<synchronous>, transform_indices = @transform_2, window_bounds = array<i64: 1, 128>}, {transform_indices = @transform_3, window_bounds = array<i64: 8, 8>}, {transform_indices = @transform_4, window_bounds = array<i64: 1, 1, 8>}, {transform_indices = @transform_5, window_bounds = array<i64: 1, 1, 8>}]} {
    %c0_i32 = arith.constant 0 : i32
    %0 = arith.cmpi eq, %arg1, %c0_i32 : i32
    %1 = arith.extui %0 : i1 to i32
    %c0_i32_0 = arith.constant 0 : i32
    %2 = arith.cmpi ne, %1, %c0_i32_0 : i32
    scf.if %2 {
      %cst_11 = arith.constant 0.000000e+00 : f32
      %14 = vector.broadcast %cst_11 : f32 to vector<8x128xf32>
      %c0_12 = arith.constant 0 : index
      %c0_13 = arith.constant 0 : index
      %15 = vector.load %arg8[%c0_12, %c0_13] : memref<8x128xf32, #tpu.memory_space<vmem>>, vector<8x128xf32>
      tpu.vector_store %arg8[%c0_12, %c0_13], %14 {strides = array<i32>} : memref<8x128xf32, #tpu.memory_space<vmem>>, vector<8x128xf32>,
    } else {
    }
    %c0 = arith.constant 0 : index
    %c0_1 = arith.constant 0 : index
    %3 = vector.load %arg8[%c0, %c0_1] : memref<8x128xf32, #tpu.memory_space<vmem>>, vector<8x128xf32>
    %c0_2 = arith.constant 0 : index
    %c0_3 = arith.constant 0 : index
    %4 = vector.load %arg2[%c0_2, %c0_3] : memref<8x64xbf16, #tpu.memory_space<vmem>>, vector<8x64xbf16>
    %c0_4 = arith.constant 0 : index
    %c0_5 = arith.constant 0 : index
    %5 = vector.load %arg3[%c0_4, %c0_5] : memref<64x128xbf16, #tpu.memory_space<vmem>>, vector<64x128xbf16>
    %cst = arith.constant dense<0.000000e+00> : vector<8x128xf32>
    %6 = tpu.matmul %4, %5, %cst {dimension_numbers = #tpu.dot_dimension_numbers<[1], [0], [0], [1], [0, 0, 1, 1], [], []>} : vector<8x64xbf16>, vector<64x128xbf16>, vector<8x128xf32> -> vector<8x128xf32>
    %7 = arith.addf %3, %6 : vector<8x128xf32>
    %c0_6 = arith.constant 0 : index
    %c0_7 = arith.constant 0 : index
    %8 = vector.load %arg8[%c0_6, %c0_7] : memref<8x128xf32, #tpu.memory_space<vmem>>, vector<8x128xf32>
    tpu.vector_store %arg8[%c0_6, %c0_7], %7 {strides = array<i32>} : memref<8x128xf32, #tpu.memory_space<vmem>>, vector<8x128xf32>,
    %c0_i32_8 = arith.constant 0 : i32
    %9 = arith.cmpi eq, %arg1, %c0_i32_8 : i32
    %10 = arith.extui %9 : i1 to i32
    %c0_i32_9 = arith.constant 0 : i32
    %11 = arith.cmpi ne, %10, %c0_i32_9 : i32
    scf.if %11 {
      %c0_11 = arith.constant 0 : index
      %c0_12 = arith.constant 0 : index
      %14 = vector.load %arg8[%c0_11, %c0_12] : memref<8x128xf32, #tpu.memory_space<vmem>>, vector<8x128xf32>
      %c0_13 = arith.constant 0 : index
      %c0_14 = arith.constant 0 : index
      %15 = vector.load %arg4[%c0_13, %c0_14] : memref<1x128xf32, #tpu.memory_space<vmem>>, vector<1x128xf32>
      %16 = vector.broadcast %15 : vector<1x128xf32> to vector<8x128xf32>
      %17 = arith.addf %14, %16 : vector<8x128xf32>
      %18 = vector.extract_strided_slice %17 {offsets = [0, 0], sizes = [8, 8], strides = [1, 1]} : vector<8x128xf32> to vector<8x8xf32>
      %19 = arith.truncf %18 : vector<8x8xf32> to vector<8x8xbf16>
      %c0_15 = arith.constant 0 : index
      %c0_16 = arith.constant 0 : index
      %20 = vector.load %arg5[%c0_15, %c0_16] : memref<8x8xbf16, #tpu.memory_space<vmem>>, vector<8x8xbf16>
      tpu.vector_store %arg5[%c0_15, %c0_16], %19 {strides = array<i32>} : memref<8x8xbf16, #tpu.memory_space<vmem>>, vector<8x8xbf16>,
    } else {
    }
    %12 = arith.extui %9 : i1 to i32
    %c0_i32_10 = arith.constant 0 : i32
    %13 = arith.cmpi ne, %12, %c0_i32_10 : i32
    scf.if %13 {
      %c0_11 = arith.constant 0 : index
      %c0_12 = arith.constant 0 : index
      %14 = vector.load %arg8[%c0_11, %c0_12] : memref<8x128xf32, #tpu.memory_space<vmem>>, vector<8x128xf32>
      %c0_13 = arith.constant 0 : index
      %c0_14 = arith.constant 0 : index
      %15 = vector.load %arg4[%c0_13, %c0_14] : memref<1x128xf32, #tpu.memory_space<vmem>>, vector<1x128xf32>
      %16 = vector.broadcast %15 : vector<1x128xf32> to vector<8x128xf32>
      %17 = arith.addf %14, %16 : vector<8x128xf32>
      %18 = vector.extract_strided_slice %17 {offsets = [0, 0], sizes = [8, 8], strides = [1, 1]} : vector<8x128xf32> to vector<8x8xf32>
      %cst_15 = arith.constant dense<0.000000e+00> : vector<8xf32>
      %19 = vector.multi_reduction <add>, %18, %cst_15 [0] : vector<8x8xf32> to vector<8xf32>
      %20 = vector.shape_cast %19 : vector<8xf32> to vector<1x8xf32>
      %21 = vector.shape_cast %20 : vector<1x8xf32> to vector<1x1x8xf32>
      %c0_16 = arith.constant 0 : index
      %c0_17 = arith.constant 0 : index
      %c0_18 = arith.constant 0 : index
      %22 = vector.load %arg6[%c0_16, %c0_17, %c0_18] : memref<1x1x8xf32, #tpu.memory_space<vmem>>, vector<1x1x8xf32>
      tpu.vector_store %arg6[%c0_16, %c0_17, %c0_18], %21 {strides = array<i32>} : memref<1x1x8xf32, #tpu.memory_space<vmem>>, vector<1x1x8xf32>,
      %23 = arith.mulf %18, %18 : vector<8x8xf32>
      %cst_19 = arith.constant dense<0.000000e+00> : vector<8xf32>
      %24 = vector.multi_reduction <add>, %23, %cst_19 [0] : vector<8x8xf32> to vector<8xf32>
      %25 = vector.shape_cast %24 : vector<8xf32> to vector<1x8xf32>
      %26 = vector.shape_cast %25 : vector<1x8xf32> to vector<1x1x8xf32>
      %c0_20 = arith.constant 0 : index
      %c0_21 = arith.constant 0 : index
      %c0_22 = arith.constant 0 : index
      %27 = vector.load %arg7[%c0_20, %c0_21, %c0_22] : memref<1x1x8xf32, #tpu.memory_space<vmem>>, vector<1x1x8xf32>
      tpu.vector_store %arg7[%c0_20, %c0_21, %c0_22], %26 {strides = array<i32>} : memref<1x1x8xf32, #tpu.memory_space<vmem>>, vector<1x1x8xf32>,
    } else {
    }
    return
  }
  func.func @transform_0(%arg0: i32, %arg1: i32) -> (i32, i32) {
    %c0_i32 = arith.constant 0 : i32
    return %arg0, %arg1 : i32, i32
  }
  func.func @transform_1(%arg0: i32, %arg1: i32) -> (i32, i32) {
    %c0_i32 = arith.constant 0 : i32
    %c0_i32_0 = arith.constant 0 : i32
    return %arg1, %c0_i32 : i32, i32
  }
  func.func @transform_2(%arg0: i32, %arg1: i32) -> (i32, i32) {
    %c0_i32 = arith.constant 0 : i32
    %c0_i32_0 = arith.constant 0 : i32
    %c0_i32_1 = arith.constant 0 : i32
    return %c0_i32, %c0_i32_0 : i32, i32
  }
  func.func @transform_3(%arg0: i32, %arg1: i32) -> (i32, i32) {
    %c0_i32 = arith.constant 0 : i32
    %c0_i32_0 = arith.constant 0 : i32
    return %arg0, %c0_i32 : i32, i32
  }
  func.func @transform_4(%arg0: i32, %arg1: i32) -> (i32, i32, i32) {
    %c0_i32 = arith.constant 0 : i32
    %c0_i32_0 = arith.constant 0 : i32
    %c0_i32_1 = arith.constant 0 : i32
    return %arg0, %c0_i32, %c0_i32_0 : i32, i32, i32
  }
  func.func @transform_5(%arg0: i32, %arg1: i32) -> (i32, i32, i32) {
    %c0_i32 = arith.constant 0 : i32
    %c0_i32_0 = arith.constant 0 : i32
    %c0_i32_1 = arith.constant 0 : i32
    return %arg0, %c0_i32, %c0_i32_0 : i32, i32, i32
  }
}

module attributes {stable_mosaic.version = 11 : i64} {
  func.func @_mm_bias_act_kernel(%arg0: i32, %arg1: i32, %arg2: memref<8x72xbf16, #tpu.memory_space<vmem>>, %arg3: memref<72x128xbf16, #tpu.memory_space<vmem>>, %arg4: memref<1x128xf32, #tpu.memory_space<vmem>>, %arg5: memref<8x1xf32, #tpu.memory_space<vmem>>, %arg6: memref<8x128xf32, #tpu.memory_space<vmem>>) attributes {dimension_semantics = [#tpu.dimension_semantics<parallel>, #tpu.dimension_semantics<arbitrary>], iteration_bounds = array<i64: 1, 1>, scalar_prefetch = 0 : i64, scratch_operands = 1 : i64, tpu.core_type = #tpu.core_type<tc>, window_params = [{transform_indices = @transform_0, window_bounds = array<i64: 8, 72>}, {transform_indices = @transform_1, window_bounds = array<i64: 72, 128>}, {pipeline_mode = #tpu.pipeline_mode<synchronous>, transform_indices = @transform_2, window_bounds = array<i64: 1, 128>}, {transform_indices = @transform_3, window_bounds = array<i64: 8, 1>}]} {
    %c0_i32 = arith.constant 0 : i32
    %0 = arith.cmpi eq, %arg1, %c0_i32 : i32
    %1 = arith.extui %0 : i1 to i32
    %c0_i32_0 = arith.constant 0 : i32
    %2 = arith.cmpi ne, %1, %c0_i32_0 : i32
    scf.if %2 {
      %cst_10 = arith.constant 0.000000e+00 : f32
      %12 = vector.broadcast %cst_10 : f32 to vector<8x128xf32>
      %c0_11 = arith.constant 0 : index
      %c0_12 = arith.constant 0 : index
      %13 = vector.load %arg6[%c0_11, %c0_12] : memref<8x128xf32, #tpu.memory_space<vmem>>, vector<8x128xf32>
      tpu.vector_store %arg6[%c0_11, %c0_12], %12 {strides = array<i32>} : memref<8x128xf32, #tpu.memory_space<vmem>>, vector<8x128xf32>,
    } else {
    }
    %c0 = arith.constant 0 : index
    %c0_1 = arith.constant 0 : index
    %3 = vector.load %arg6[%c0, %c0_1] : memref<8x128xf32, #tpu.memory_space<vmem>>, vector<8x128xf32>
    %c0_2 = arith.constant 0 : index
    %c0_3 = arith.constant 0 : index
    %4 = vector.load %arg2[%c0_2, %c0_3] : memref<8x72xbf16, #tpu.memory_space<vmem>>, vector<8x72xbf16>
    %c0_4 = arith.constant 0 : index
    %c0_5 = arith.constant 0 : index
    %5 = vector.load %arg3[%c0_4, %c0_5] : memref<72x128xbf16, #tpu.memory_space<vmem>>, vector<72x128xbf16>
    %cst = arith.constant dense<0.000000e+00> : vector<8x128xf32>
    %6 = tpu.matmul %4, %5, %cst {dimension_numbers = #tpu.dot_dimension_numbers<[1], [0], [0], [1], [0, 0, 1, 1], [], []>} : vector<8x72xbf16>, vector<72x128xbf16>, vector<8x128xf32> -> vector<8x128xf32>
    %7 = arith.addf %3, %6 : vector<8x128xf32>
    %c0_6 = arith.constant 0 : index
    %c0_7 = arith.constant 0 : index
    %8 = vector.load %arg6[%c0_6, %c0_7] : memref<8x128xf32, #tpu.memory_space<vmem>>, vector<8x128xf32>
    tpu.vector_store %arg6[%c0_6, %c0_7], %7 {strides = array<i32>} : memref<8x128xf32, #tpu.memory_space<vmem>>, vector<8x128xf32>,
    %c0_i32_8 = arith.constant 0 : i32
    %9 = arith.cmpi eq, %arg1, %c0_i32_8 : i32
    %10 = arith.extui %9 : i1 to i32
    %c0_i32_9 = arith.constant 0 : i32
    %11 = arith.cmpi ne, %10, %c0_i32_9 : i32
    scf.if %11 {
      %c0_10 = arith.constant 0 : index
      %c0_11 = arith.constant 0 : index
      %12 = vector.load %arg6[%c0_10, %c0_11] : memref<8x128xf32, #tpu.memory_space<vmem>>, vector<8x128xf32>
      %c0_12 = arith.constant 0 : index
      %c0_13 = arith.constant 0 : index
      %13 = vector.load %arg4[%c0_12, %c0_13] : memref<1x128xf32, #tpu.memory_space<vmem>>, vector<1x128xf32>
      %14 = vector.broadcast %13 : vector<1x128xf32> to vector<8x128xf32>
      %15 = arith.addf %12, %14 : vector<8x128xf32>
      %16 = vector.extract_strided_slice %15 {offsets = [0, 0], sizes = [8, 1], strides = [1, 1]} : vector<8x128xf32> to vector<8x1xf32>
      %c0_14 = arith.constant 0 : index
      %c0_15 = arith.constant 0 : index
      %17 = vector.load %arg5[%c0_14, %c0_15] : memref<8x1xf32, #tpu.memory_space<vmem>>, vector<8x1xf32>
      tpu.vector_store %arg5[%c0_14, %c0_15], %16 {strides = array<i32>} : memref<8x1xf32, #tpu.memory_space<vmem>>, vector<8x1xf32>,
    } else {
    }
    return
  }
  func.func @transform_0(%arg0: i32, %arg1: i32) -> (i32, i32) {
    %c0_i32 = arith.constant 0 : i32
    return %arg0, %arg1 : i32, i32
  }
  func.func @transform_1(%arg0: i32, %arg1: i32) -> (i32, i32) {
    %c0_i32 = arith.constant 0 : i32
    %c0_i32_0 = arith.constant 0 : i32
    return %arg1, %c0_i32 : i32, i32
  }
  func.func @transform_2(%arg0: i32, %arg1: i32) -> (i32, i32) {
    %c0_i32 = arith.constant 0 : i32
    %c0_i32_0 = arith.constant 0 : i32
    %c0_i32_1 = arith.constant 0 : i32
    return %c0_i32, %c0_i32_0 : i32, i32
  }
  func.func @transform_3(%arg0: i32, %arg1: i32) -> (i32, i32) {
    %c0_i32 = arith.constant 0 : i32
    %c0_i32_0 = arith.constant 0 : i32
    return %arg0, %c0_i32 : i32, i32
  }
}

</mosaic_0001>

<llo_original>
// kernel: _lambda_.9
$region0: #{_lambda_.9}
  #allocation0 [shape = 'u32[]', space=smem, size = 0x4, offset = 0x4, fixed_abs, tag = 'smem constant byte address 0x4 - core index']
  #allocation1 [shape = 'u32[72,128]{1,0:T(1,128)}', space=vmem, size = 0x9000, scoped, tag = 'internal scratch']
  #allocation2 [shape = 'f32[128,128]{1,0:T(8,128)}', space=vmem, size = 0x10000, scoped, tag = 'scratch operand']
  %s0 = inlined_call_operand.vmem [shape: bf16[128,48], index: 0, kind: input, shape index: {}]
  %s1 = inlined_call_operand.vmem [shape: bf16[48,128], index: 1, kind: input, shape index: {}]
  %s2 = inlined_call_operand.vmem [shape: f32[1,128], index: 2, kind: input, shape index: {}]
  %s3 = inlined_call_operand.vmem [shape: bf16[128,4], index: 3, kind: output, shape index: {}]
  %s4 = sld [smem:[#allocation0]]
  $region30: #{_lambda_.9} parent=0
    _
  %s6 = ssub.s32 1, %s4
  %s7 = scalar_select 0, %s6, %s4
  // Predicated region
  $region2: #{_lambda_.9} parent=0 // pred_check
    _
  $region3: #{_lambda_.9} parent=0 // pred_check_branch
    %9 = sbr.rel (0) target = $region5
  $region4: #{_lambda_.9} parent=0 // pred_region
    _
  $region5: #{_lambda_.9} parent=0 // pred_fallthru
    _
  // Predicated region
  $region6: #{_lambda_.9} parent=0 // pred_check
    _
  $region7: #{_lambda_.9} parent=0 // pred_check_branch
    %11 = sbr.rel (0) target = $region9
  $region8: #{_lambda_.9} parent=0 // pred_region
    _
  $region9: #{_lambda_.9} parent=0 // pred_fallthru
    _
  // Predicated region
  $region10: #{_lambda_.9} parent=0 // pred_check
    _
  $region11: #{_lambda_.9} parent=0 // pred_check_branch
    %13 = sbr.rel (0) target = $region13
  $region12: #{_lambda_.9} parent=0 // pred_region
    _
  $region13: #{_lambda_.9} parent=0 // pred_fallthru
    _
  %p15 = scmp.eq.s32.totalorder 0, 0
  // Predicated region
  $region14: #{_lambda_.9} parent=0 // pred_check
    %p16 = pneg %p15
  $region15: #{_lambda_.9} parent=0 // pred_check_branch
    %18 = sbr.rel (%p16) target = $region17
  $region16: #{_lambda_.9} parent=0 // pred_region
    %19 = vst [vmem:[#allocation2] sm:$0xff] 0.0
    %20 = vst [vmem:[#allocation2 + $0x8] sm:$0xff] 0.0
    %21 = vst [vmem:[#allocation2 + $0x10] sm:$0xff] 0.0
    %22 = vst [vmem:[#allocation2 + $0x18] sm:$0xff] 0.0
    %23 = vst [vmem:[#allocation2 + $0x20] sm:$0xff] 0.0
    %24 = vst [vmem:[#allocation2 + $0x28] sm:$0xff] 0.0
    %25 = vst [vmem:[#allocation2 + $0x30] sm:$0xff] 0.0
    %26 = vst [vmem:[#allocation2 + $0x38] sm:$0xff] 0.0
    %27 = vst [vmem:[#allocation2 + $0x40] sm:$0xff] 0.0
    %28 = vst [vmem:[#allocation2 + $0x48] sm:$0xff] 0.0
    %29 = vst [vmem:[#allocation2 + $0x50] sm:$0xff] 0.0
    %30 = vst [vmem:[#allocation2 + $0x58] sm:$0xff] 0.0
    %31 = vst [vmem:[#allocation2 + $0x60] sm:$0xff] 0.0
    %32 = vst [vmem:[#allocation2 + $0x68] sm:$0xff] 0.0
    %33 = vst [vmem:[#allocation2 + $0x70] sm:$0xff] 0.0
    %34 = vst [vmem:[#allocation2 + $0x78] sm:$0xff] 0.0
  $region17: #{_lambda_.9} parent=0 // pred_fallthru
    _
  %v35 = vld [vmem:[#allocation2] sm:$0xff]
  %v36 = vld [vmem:[#allocation2 + $0x8] sm:$0xff]
  %v37 = vld [vmem:[#allocation2 + $0x10] sm:$0xff]
  %v38 = vld [vmem:[#allocation2 + $0x18] sm:$0xff]
  %v39 = vld [vmem:[#allocation2 + $0x20] sm:$0xff]
  %v40 = vld [vmem:[#allocation2 + $0x28] sm:$0xff]
  %v41 = vld [vmem:[#allocation2 + $0x30] sm:$0xff]
  %v42 = vld [vmem:[#allocation2 + $0x38] sm:$0xff]
  %v43 = vld [vmem:[#allocation2 + $0x40] sm:$0xff]
  %v44 = vld [vmem:[#allocation2 + $0x48] sm:$0xff]
  %v45 = vld [vmem:[#allocation2 + $0x50] sm:$0xff]
  %v46 = vld [vmem:[#allocation2 + $0x58] sm:$0xff]
  %v47 = vld [vmem:[#allocation2 + $0x60] sm:$0xff]
  %v48 = vld [vmem:[#allocation2 + $0x68] sm:$0xff]
  %v49 = vld [vmem:[#allocation2 + $0x70] sm:$0xff]
  %v50 = vld [vmem:[#allocation2 + $0x78] sm:$0xff]
  %v51 = vld [vmem:[%s0] sm:$0xf]
  %v52 = vld [vmem:[%s0 + $0x4] sm:$0xf]
  %v53 = vld [vmem:[%s0 + $0x8] sm:$0xf]
  %v54 = vld [vmem:[%s0 + $0xc] sm:$0xf]
  %v55 = vld [vmem:[%s0 + $0x10] sm:$0xf]
  %v56 = vld [vmem:[%s0 + $0x14] sm:$0xf]
  %v57 = vld [vmem:[%s0 + $0x18] sm:$0xf]
  %v58 = vld [vmem:[%s0 + $0x1c] sm:$0xf]
  %v59 = vld [vmem:[%s0 + $0x20] sm:$0xf]
  %v60 = vld [vmem:[%s0 + $0x24] sm:$0xf]
  %v61 = vld [vmem:[%s0 + $0x28] sm:$0xf]
  %v62 = vld [vmem:[%s0 + $0x2c] sm:$0xf]
  %v63 = vld [vmem:[%s0 + $0x30] sm:$0xf]
  %v64 = vld [vmem:[%s0 + $0x34] sm:$0xf]
  %v65 = vld [vmem:[%s0 + $0x38] sm:$0xf]
  %v66 = vld [vmem:[%s0 + $0x3c] sm:$0xf]
  %v67 = vld [vmem:[%s1] sm:$0xf]
  %v68 = vld [vmem:[%s1 + $0x4] sm:$0xf]
  %v69 = vld [vmem:[%s1 + $0x8] sm:$0xf]
  %v70 = vld [vmem:[%s1 + $0xc] sm:$0xf]
  %v71 = vld [vmem:[%s1 + $0x10] sm:$0xf]
  %v72 = vld [vmem:[%s1 + $0x14] sm:$0xf]
  %v89 = vunpack.c.l.b16 %v51
  %v90 = vunpack.c.l.b16 %v52
  %v91 = vunpack.c.l.b16 %v53
  %v92 = vunpack.c.l.b16 %v54
  %v93 = vunpack.c.l.b16 %v55
  %v94 = vunpack.c.l.b16 %v56
  %v95 = vunpack.c.l.b16 %v57
  %v96 = vunpack.c.l.b16 %v58
  %v97 = vunpack.c.l.b16 %v59
  %v98 = vunpack.c.l.b16 %v60
  %v99 = vunpack.c.l.b16 %v61
  %v100 = vunpack.c.l.b16 %v62
  %v101 = vunpack.c.l.b16 %v63
  %v102 = vunpack.c.l.b16 %v64
  %v103 = vunpack.c.l.b16 %v65
  %v104 = vunpack.c.l.b16 %v66
  %v105 = vpack.c.b16 %v90, %v89
  %v106 = vpack.c.b16 %v92, %v91
  %v107 = vpack.c.b16 %v94, %v93
  %v108 = vpack.c.b16 %v96, %v95
  %v109 = vpack.c.b16 %v98, %v97
  %v110 = vpack.c.b16 %v100, %v99
  %v111 = vpack.c.b16 %v102, %v101
  %v112 = vpack.c.b16 %v104, %v103
  %v119 = vunpack.c.l.b16 %v67
  %v120 = vunpack.c.l.b16 %v68
  %v121 = vunpack.c.l.b16 %v69
  %v122 = vunpack.c.l.b16 %v70
  %v123 = vunpack.c.l.b16 %v71
  %v124 = vunpack.c.l.b16 %v72
  %v125 = vpack.c.b16 %v120, %v119
  %v126 = vpack.c.b16 %v122, %v121
  %v127 = vpack.c.b16 %v124, %v123
  %vm131 = vcmask 392192
  %v133 = vsel %vm131, %v105, 0
  %v136 = vsel %vm131, %v106, 0
  %v139 = vsel %vm131, %v107, 0
  %v142 = vsel %vm131, %v108, 0
  %v145 = vsel %vm131, %v109, 0
  %v148 = vsel %vm131, %v110, 0
  %v151 = vsel %vm131, %v111, 0
  %v154 = vsel %vm131, %v112, 0
  %156 = vmatpush.bf16.msra.mxu0 0
  %157 = vmatpush.bf16.msra.mxu0 0
  %158 = vmatpush.bf16.msra.mxu0 0
  %159 = vmatpush.bf16.msra.mxu0 0
  %160 = vmatpush.bf16.msra.mxu0 0
  %161 = vmatpush.bf16.msra.mxu0 %v127
  %162 = vmatpush.bf16.msra.mxu0 %v126
  %163 = vmatpush.bf16.msra.mxu0 %v125
  %164 = vmatmul.bf16.gmra.mxu0 %v133
  %v165 = vpop.f32.mrf.mxu0
  %v166 = vadd.f32 0.0, %v165
  %v167 = vpop.f32.mrf.mxu0
  %v168 = vadd.f32 0.0, %v167
  %169 = vmatmul.bf16.gmra.mxu0 %v136
  %v170 = vpop.f32.mrf.mxu0
  %v171 = vadd.f32 0.0, %v170
  %v172 = vpop.f32.mrf.mxu0
  %v173 = vadd.f32 0.0, %v172
  %174 = vmatmul.bf16.gmra.mxu0 %v139
  %v175 = vpop.f32.mrf.mxu0
  %v176 = vadd.f32 0.0, %v175
  %v177 = vpop.f32.mrf.mxu0
  %v178 = vadd.f32 0.0, %v177
  %179 = vmatmul.bf16.gmra.mxu0 %v142
  %v180 = vpop.f32.mrf.mxu0
  %v181 = vadd.f32 0.0, %v180
  %v182 = vpop.f32.mrf.mxu0
  %v183 = vadd.f32 0.0, %v182
  %184 = vmatmul.bf16.gmra.mxu0 %v145
  %v185 = vpop.f32.mrf.mxu0
  %v186 = vadd.f32 0.0, %v185
  %v187 = vpop.f32.mrf.mxu0
  %v188 = vadd.f32 0.0, %v187
  %189 = vmatmul.bf16.gmra.mxu0 %v148
  %v190 = vpop.f32.mrf.mxu0
  %v191 = vadd.f32 0.0, %v190
  %v192 = vpop.f32.mrf.mxu0
  %v193 = vadd.f32 0.0, %v192
  %194 = vmatmul.bf16.gmra.mxu0 %v151
  %v195 = vpop.f32.mrf.mxu0
  %v196 = vadd.f32 0.0, %v195
  %v197 = vpop.f32.mrf.mxu0
  %v198 = vadd.f32 0.0, %v197
  %199 = vmatmul.bf16.gmra.mxu0 %v154
  %v200 = vpop.f32.mrf.mxu0
  %v201 = vadd.f32 0.0, %v200
  %v202 = vpop.f32.mrf.mxu0
  %v203 = vadd.f32 0.0, %v202
  %204 = vdwg.mxu0
  %v205 = vadd.f32 %v35, %v166
  %v206 = vadd.f32 %v36, %v168
  %v207 = vadd.f32 %v37, %v171
  %v208 = vadd.f32 %v38, %v173
  %v209 = vadd.f32 %v39, %v176
  %v210 = vadd.f32 %v40, %v178
  %v211 = vadd.f32 %v41, %v181
  %v212 = vadd.f32 %v42, %v183
  %v213 = vadd.f32 %v43, %v186
  %v214 = vadd.f32 %v44, %v188
  %v215 = vadd.f32 %v45, %v191
  %v216 = vadd.f32 %v46, %v193
  %v217 = vadd.f32 %v47, %v196
  %v218 = vadd.f32 %v48, %v198
  %v219 = vadd.f32 %v49, %v201
  %v220 = vadd.f32 %v50, %v203
  %221 = vst [vmem:[#allocation2] sm:$0xff] %v205
  %222 = vst [vmem:[#allocation2 + $0x8] sm:$0xff] %v206
  %223 = vst [vmem:[#allocation2 + $0x10] sm:$0xff] %v207
  %224 = vst [vmem:[#allocation2 + $0x18] sm:$0xff] %v208
  %225 = vst [vmem:[#allocation2 + $0x20] sm:$0xff] %v209
  %226 = vst [vmem:[#allocation2 + $0x28] sm:$0xff] %v210
  %227 = vst [vmem:[#allocation2 + $0x30] sm:$0xff] %v211
  %228 = vst [vmem:[#allocation2 + $0x38] sm:$0xff] %v212
  %229 = vst [vmem:[#allocation2 + $0x40] sm:$0xff] %v213
  %230 = vst [vmem:[#allocation2 + $0x48] sm:$0xff] %v214
  %231 = vst [vmem:[#allocation2 + $0x50] sm:$0xff] %v215
  %232 = vst [vmem:[#allocation2 + $0x58] sm:$0xff] %v216
  %233 = vst [vmem:[#allocation2 + $0x60] sm:$0xff] %v217
  %234 = vst [vmem:[#allocation2 + $0x68] sm:$0xff] %v218
  %235 = vst [vmem:[#allocation2 + $0x70] sm:$0xff] %v219
  %236 = vst [vmem:[#allocation2 + $0x78] sm:$0xff] %v220
  // Predicated region
  $region18: #{_lambda_.9} parent=0 // pred_check
    %p237 = pneg %p15
  $region19: #{_lambda_.9} parent=0 // pred_check_branch
    %239 = sbr.rel (%p237) target = $region21
  $region20: #{_lambda_.9} parent=0 // pred_region
    %v240 = vld [vmem:[#allocation2] sm:$0xff]
    %v241 = vld [vmem:[#allocation2 + $0x8] sm:$0xff]
    %v242 = vld [vmem:[#allocation2 + $0x10] sm:$0xff]
    %v243 = vld [vmem:[#allocation2 + $0x18] sm:$0xff]
    %v244 = vld [vmem:[#allocation2 + $0x20] sm:$0xff]
    %v245 = vld [vmem:[#allocation2 + $0x28] sm:$0xff]
    %v246 = vld [vmem:[#allocation2 + $0x30] sm:$0xff]
    %v247 = vld [vmem:[#allocation2 + $0x38] sm:$0xff]
    %v248 = vld [vmem:[#allocation2 + $0x40] sm:$0xff]
    %v249 = vld [vmem:[#allocation2 + $0x48] sm:$0xff]
    %v250 = vld [vmem:[#allocation2 + $0x50] sm:$0xff]
    %v251 = vld [vmem:[#allocation2 + $0x58] sm:$0xff]
    %v252 = vld [vmem:[#allocation2 + $0x60] sm:$0xff]
    %v253 = vld [vmem:[#allocation2 + $0x68] sm:$0xff]
    %v254 = vld [vmem:[#allocation2 + $0x70] sm:$0xff]
    %v255 = vld [vmem:[#allocation2 + $0x78] sm:$0xff]
    %v256 = vld [vmem:[%s2] sm:$0x1]
    %v258 = vperm.slane %v256, 0
    %v260 = vadd.f32 %v240, %v258
    %v261 = vadd.f32 %v241, %v258
    %v262 = vadd.f32 %v242, %v258
    %v263 = vadd.f32 %v243, %v258
    %v264 = vadd.f32 %v244, %v258
    %v265 = vadd.f32 %v245, %v258
    %v266 = vadd.f32 %v246, %v258
    %v267 = vadd.f32 %v247, %v258
    %v268 = vadd.f32 %v248, %v258
    %v269 = vadd.f32 %v249, %v258
    %v270 = vadd.f32 %v250, %v258
    %v271 = vadd.f32 %v251, %v258
    %v272 = vadd.f32 %v252, %v258
    %v273 = vadd.f32 %v253, %v258
    %v274 = vadd.f32 %v254, %v258
    %v275 = vadd.f32 %v255, %v258
    %vm276 = vcmp.ge.f32.partialorder %v260, 0.0
    %vm277 = vcmp.ge.f32.partialorder %v261, 0.0
    %vm278 = vcmp.ge.f32.partialorder %v262, 0.0
    %vm279 = vcmp.ge.f32.partialorder %v263, 0.0
    %vm280 = vcmp.ge.f32.partialorder %v264, 0.0
    %vm281 = vcmp.ge.f32.partialorder %v265, 0.0
    %vm282 = vcmp.ge.f32.partialorder %v266, 0.0
    %vm283 = vcmp.ge.f32.partialorder %v267, 0.0
    %vm284 = vcmp.ge.f32.partialorder %v268, 0.0
    %vm285 = vcmp.ge.f32.partialorder %v269, 0.0
    %vm286 = vcmp.ge.f32.partialorder %v270, 0.0
    %vm287 = vcmp.ge.f32.partialorder %v271, 0.0
    %vm288 = vcmp.ge.f32.partialorder %v272, 0.0
    %vm289 = vcmp.ge.f32.partialorder %v273, 0.0
    %vm290 = vcmp.ge.f32.partialorder %v274, 0.0
    %vm291 = vcmp.ge.f32.partialorder %v275, 0.0
    %v292 = vmul.f32 %v260, 0.2
    %v293 = vmul.f32 %v261, 0.2
    %v294 = vmul.f32 %v262, 0.2
    %v295 = vmul.f32 %v263, 0.2
    %v296 = vmul.f32 %v264, 0.2
    %v297 = vmul.f32 %v265, 0.2
    %v298 = vmul.f32 %v266, 0.2
    %v299 = vmul.f32 %v267, 0.2
    %v300 = vmul.f32 %v268, 0.2
    %v301 = vmul.f32 %v269, 0.2
    %v302 = vmul.f32 %v270, 0.2
    %v303 = vmul.f32 %v271, 0.2
    %v304 = vmul.f32 %v272, 0.2
    %v305 = vmul.f32 %v273, 0.2
    %v306 = vmul.f32 %v274, 0.2
    %v307 = vmul.f32 %v275, 0.2
    %v308 = vsel %vm276, %v260, %v292
    %v309 = vsel %vm277, %v261, %v293
    %v310 = vsel %vm278, %v262, %v294
    %v311 = vsel %vm279, %v263, %v295
    %v312 = vsel %vm280, %v264, %v296
    %v313 = vsel %vm281, %v265, %v297
    %v314 = vsel %vm282, %v266, %v298
    %v315 = vsel %vm283, %v267, %v299
    %v316 = vsel %vm284, %v268, %v300
    %v317 = vsel %vm285, %v269, %v301
    %v318 = vsel %vm286, %v270, %v302
    %v319 = vsel %vm287, %v271, %v303
    %v320 = vsel %vm288, %v272, %v304
    %v321 = vsel %vm289, %v273, %v305
    %v322 = vsel %vm290, %v274, %v306
    %v323 = vsel %vm291, %v275, %v307
    %v324 = vpack.c.bf16 %v308, %v308
    %v325 = vpack.c.bf16 %v309, %v309
    %v326 = vpack.c.bf16 %v310, %v310
    %v327 = vpack.c.bf16 %v311, %v311
    %v328 = vpack.c.bf16 %v312, %v312
    %v329 = vpack.c.bf16 %v313, %v313
    %v330 = vpack.c.bf16 %v314, %v314
    %v331 = vpack.c.bf16 %v315, %v315
    %v332 = vpack.c.bf16 %v316, %v316
    %v333 = vpack.c.bf16 %v317, %v317
    %v334 = vpack.c.bf16 %v318, %v318
    %v335 = vpack.c.bf16 %v319, %v319
    %v336 = vpack.c.bf16 %v320, %v320
    %v337 = vpack.c.bf16 %v321, %v321
    %v338 = vpack.c.bf16 %v322, %v322
    %v339 = vpack.c.bf16 %v323, %v323
    %vm340 = vcmask 27648
    %341 = vst.msk [vmem:[%s3] sm:$0xf] %vm340, %v324
    %342 = vst.msk [vmem:[%s3 + $0x4] sm:$0xf] %vm340, %v325
    %343 = vst.msk [vmem:[%s3 + $0x8] sm:$0xf] %vm340, %v326
    %344 = vst.msk [vmem:[%s3 + $0xc] sm:$0xf] %vm340, %v327
    %345 = vst.msk [vmem:[%s3 + $0x10] sm:$0xf] %vm340, %v328
    %346 = vst.msk [vmem:[%s3 + $0x14] sm:$0xf] %vm340, %v329
    %347 = vst.msk [vmem:[%s3 + $0x18] sm:$0xf] %vm340, %v330
    %348 = vst.msk [vmem:[%s3 + $0x1c] sm:$0xf] %vm340, %v331
    %349 = vst.msk [vmem:[%s3 + $0x20] sm:$0xf] %vm340, %v332
    %350 = vst.msk [vmem:[%s3 + $0x24] sm:$0xf] %vm340, %v333
    %351 = vst.msk [vmem:[%s3 + $0x28] sm:$0xf] %vm340, %v334
    %352 = vst.msk [vmem:[%s3 + $0x2c] sm:$0xf] %vm340, %v335
    %353 = vst.msk [vmem:[%s3 + $0x30] sm:$0xf] %vm340, %v336
    %354 = vst.msk [vmem:[%s3 + $0x34] sm:$0xf] %vm340, %v337
    %355 = vst.msk [vmem:[%s3 + $0x38] sm:$0xf] %vm340, %v338
    %356 = vst.msk [vmem:[%s3 + $0x3c] sm:$0xf] %vm340, %v339
  $region21: #{_lambda_.9} parent=0 // pred_fallthru
    _
  // Predicated region
  $region22: #{_lambda_.9} parent=0 // pred_check
    _
  $region23: #{_lambda_.9} parent=0 // pred_check_branch
    %358 = sbr.rel (0) target = $region25
  $region24: #{_lambda_.9} parent=0 // pred_region
    _
  $region25: #{_lambda_.9} parent=0 // pred_fallthru
    _
  // Predicated region
  $region26: #{_lambda_.9} parent=0 // pred_check
    _
  $region27: #{_lambda_.9} parent=0 // pred_check_branch
    %360 = sbr.rel (0) target = $region29
  $region28: #{_lambda_.9} parent=0 // pred_region
    _
  $region29: #{_lambda_.9} parent=0 // pred_fallthru
    _

// kernel: _lambda_.11
$region0: #{_lambda_.11}
  #allocation0 [shape = 'u32[]', space=smem, size = 0x4, offset = 0x4, fixed_abs, tag = 'smem constant byte address 0x4 - core index']
  #allocation1 [shape = 'u32[72,128]{1,0:T(1,128)}', space=vmem, size = 0x9000, scoped, tag = 'internal scratch']
  %s0 = inlined_call_operand.vmem [shape: bf16[32,8], index: 0, kind: input, shape index: {}]
  %s1 = inlined_call_operand.vmem [shape: f32[1,8], index: 1, kind: input, shape index: {}]
  %s2 = inlined_call_operand.vmem [shape: f32[1,8], index: 2, kind: input, shape index: {}]
  %s3 = inlined_call_operand.vmem [shape: bf16[32,8], index: 3, kind: output, shape index: {}]
  %s4 = sld [smem:[#allocation0]]
  $region22: #{_lambda_.11} parent=0
    _
  %s6 = ssub.s32 1, %s4
  %s7 = scalar_select 0, %s6, %s4
  // Predicated region
  $region2: #{_lambda_.11} parent=0 // pred_check
    _
  $region3: #{_lambda_.11} parent=0 // pred_check_branch
    %9 = sbr.rel (0) target = $region5
  $region4: #{_lambda_.11} parent=0 // pred_region
    _
  $region5: #{_lambda_.11} parent=0 // pred_fallthru
    _
  // Predicated region
  $region6: #{_lambda_.11} parent=0 // pred_check
    _
  $region7: #{_lambda_.11} parent=0 // pred_check_branch
    %11 = sbr.rel (0) target = $region9
  $region8: #{_lambda_.11} parent=0 // pred_region
    _
  $region9: #{_lambda_.11} parent=0 // pred_fallthru
    _
  // Predicated region
  $region10: #{_lambda_.11} parent=0 // pred_check
    _
  $region11: #{_lambda_.11} parent=0 // pred_check_branch
    %13 = sbr.rel (0) target = $region13
  $region12: #{_lambda_.11} parent=0 // pred_region
    _
  $region13: #{_lambda_.11} parent=0 // pred_fallthru
    _
  %v14 = vld [vmem:[%s0] sm:$0xf]
  %v15 = vld [vmem:[%s0 + $0x4] sm:$0xf]
  %v16 = vld [vmem:[%s0 + $0x8] sm:$0xf]
  %v17 = vld [vmem:[%s0 + $0xc] sm:$0xf]
  %v18 = vunpack.c.l.bf16 %v14
  %v19 = vunpack.c.l.bf16 %v15
  %v20 = vunpack.c.l.bf16 %v16
  %v21 = vunpack.c.l.bf16 %v17
  %v22 = vld [vmem:[%s1] sm:$0x1]
  %v24 = vperm.slane %v22, 0
  %v26 = vmul.f32 %v18, %v24
  %v27 = vmul.f32 %v19, %v24
  %v28 = vmul.f32 %v20, %v24
  %v29 = vmul.f32 %v21, %v24
  %v30 = vld [vmem:[%s2] sm:$0x1]
  %v32 = vperm.slane %v30, 0
  %v34 = vadd.f32 %v26, %v32
  %v35 = vadd.f32 %v27, %v32
  %v36 = vadd.f32 %v28, %v32
  %v37 = vadd.f32 %v29, %v32
  %vm38 = vcmp.ge.f32.partialorder %v34, 0.0
  %vm39 = vcmp.ge.f32.partialorder %v35, 0.0
  %vm40 = vcmp.ge.f32.partialorder %v36, 0.0
  %vm41 = vcmp.ge.f32.partialorder %v37, 0.0
  %v42 = vmul.f32 %v34, 0.2
  %v43 = vmul.f32 %v35, 0.2
  %v44 = vmul.f32 %v36, 0.2
  %v45 = vmul.f32 %v37, 0.2
  %v46 = vsel %vm38, %v34, %v42
  %v47 = vsel %vm39, %v35, %v43
  %v48 = vsel %vm40, %v36, %v44
  %v49 = vsel %vm41, %v37, %v45
  %v50 = vpack.c.bf16 %v46, %v46
  %v51 = vpack.c.bf16 %v47, %v47
  %v52 = vpack.c.bf16 %v48, %v48
  %v53 = vpack.c.bf16 %v49, %v49
  %vm54 = vcmask 60416
  %55 = vst.msk [vmem:[%s3] sm:$0xf] %vm54, %v50
  %56 = vst.msk [vmem:[%s3 + $0x4] sm:$0xf] %vm54, %v51
  %57 = vst.msk [vmem:[%s3 + $0x8] sm:$0xf] %vm54, %v52
  %58 = vst.msk [vmem:[%s3 + $0xc] sm:$0xf] %vm54, %v53
  // Predicated region
  $region14: #{_lambda_.11} parent=0 // pred_check
    _
  $region15: #{_lambda_.11} parent=0 // pred_check_branch
    %60 = sbr.rel (0) target = $region17
  $region16: #{_lambda_.11} parent=0 // pred_region
    _
  $region17: #{_lambda_.11} parent=0 // pred_fallthru
    _
  // Predicated region
  $region18: #{_lambda_.11} parent=0 // pred_check
    _
  $region19: #{_lambda_.11} parent=0 // pred_check_branch
    %62 = sbr.rel (0) target = $region21
  $region20: #{_lambda_.11} parent=0 // pred_region
    _
  $region21: #{_lambda_.11} parent=0 // pred_fallthru
    _

// kernel: _lambda_.10
$region0: #{_lambda_.10}
  #allocation0 [shape = 'u32[]', space=smem, size = 0x4, offset = 0x4, fixed_abs, tag = 'smem constant byte address 0x4 - core index']
  #allocation1 [shape = 'u32[72,128]{1,0:T(1,128)}', space=vmem, size = 0x9000, scoped, tag = 'internal scratch']
  #allocation2 [shape = 'f32[32,128]{1,0:T(8,128)}', space=vmem, size = 0x4000, scoped, tag = 'scratch operand']
  %s0 = inlined_call_operand.vmem [shape: bf16[32,64], index: 0, kind: input, shape index: {}]
  %s1 = inlined_call_operand.vmem [shape: bf16[64,128], index: 1, kind: input, shape index: {}]
  %s2 = inlined_call_operand.vmem [shape: f32[1,128], index: 2, kind: input, shape index: {}]
  %s3 = inlined_call_operand.vmem [shape: bf16[32,8], index: 3, kind: output, shape index: {0}]
  %s4 = inlined_call_operand.vmem [shape: f32[1,1,8], index: 4, kind: output, shape index: {1}]
  %s5 = inlined_call_operand.vmem [shape: f32[1,1,8], index: 5, kind: output, shape index: {2}]
  %6 = xla_tuple %s3, %s4, %s5
  %s7 = sld [smem:[#allocation0]]
  $region46: #{_lambda_.10} parent=0
    _
  %s9 = ssub.s32 1, %s7
  %s10 = scalar_select 0, %s9, %s7
  // Predicated region
  $region2: #{_lambda_.10} parent=0 // pred_check
    _
  $region3: #{_lambda_.10} parent=0 // pred_check_branch
    %12 = sbr.rel (0) target = $region5
  $region4: #{_lambda_.10} parent=0 // pred_region
    _
  $region5: #{_lambda_.10} parent=0 // pred_fallthru
    _
  // Predicated region
  $region6: #{_lambda_.10} parent=0 // pred_check
    _
  $region7: #{_lambda_.10} parent=0 // pred_check_branch
    %14 = sbr.rel (0) target = $region9
  $region8: #{_lambda_.10} parent=0 // pred_region
    _
  $region9: #{_lambda_.10} parent=0 // pred_fallthru
    _
  // Predicated region
  $region10: #{_lambda_.10} parent=0 // pred_check
    _
  $region11: #{_lambda_.10} parent=0 // pred_check_branch
    %16 = sbr.rel (0) target = $region13
  $region12: #{_lambda_.10} parent=0 // pred_region
    _
  $region13: #{_lambda_.10} parent=0 // pred_fallthru
    _
  %p18 = scmp.eq.s32.totalorder 0, 0
  // Predicated region
  $region14: #{_lambda_.10} parent=0 // pred_check
    %p19 = pneg %p18
  $region15: #{_lambda_.10} parent=0 // pred_check_branch
    %21 = sbr.rel (%p19) target = $region17
  $region16: #{_lambda_.10} parent=0 // pred_region
    %22 = vst [vmem:[#allocation2] sm:$0xff] 0.0
    %23 = vst [vmem:[#allocation2 + $0x8] sm:$0xff] 0.0
    %24 = vst [vmem:[#allocation2 + $0x10] sm:$0xff] 0.0
    %25 = vst [vmem:[#allocation2 + $0x18] sm:$0xff] 0.0
  $region17: #{_lambda_.10} parent=0 // pred_fallthru
    _
  %v26 = vld [vmem:[#allocation2] sm:$0xff]
  %v27 = vld [vmem:[#allocation2 + $0x8] sm:$0xff]
  %v28 = vld [vmem:[#allocation2 + $0x10] sm:$0xff]
  %v29 = vld [vmem:[#allocation2 + $0x18] sm:$0xff]
  %v30 = vld [vmem:[%s0] sm:$0xf]
  %v31 = vld [vmem:[%s0 + $0x4] sm:$0xf]
  %v32 = vld [vmem:[%s0 + $0x8] sm:$0xf]
  %v33 = vld [vmem:[%s0 + $0xc] sm:$0xf]
  %v34 = vld [vmem:[%s1] sm:$0xf]
  %v35 = vld [vmem:[%s1 + $0x4] sm:$0xf]
  %v36 = vld [vmem:[%s1 + $0x8] sm:$0xf]
  %v37 = vld [vmem:[%s1 + $0xc] sm:$0xf]
  %v38 = vld [vmem:[%s1 + $0x10] sm:$0xf]
  %v39 = vld [vmem:[%s1 + $0x14] sm:$0xf]
  %v40 = vld [vmem:[%s1 + $0x18] sm:$0xf]
  %v41 = vld [vmem:[%s1 + $0x1c] sm:$0xf]
  %v46 = vunpack.c.l.b16 %v30
  %v47 = vunpack.c.l.b16 %v31
  %v48 = vunpack.c.l.b16 %v32
  %v49 = vunpack.c.l.b16 %v33
  %v50 = vpack.c.b16 %v47, %v46
  %v51 = vpack.c.b16 %v49, %v48
  %v60 = vunpack.c.l.b16 %v34
  %v61 = vunpack.c.l.b16 %v35
  %v62 = vunpack.c.l.b16 %v36
  %v63 = vunpack.c.l.b16 %v37
  %v64 = vunpack.c.l.b16 %v38
  %v65 = vunpack.c.l.b16 %v39
  %v66 = vunpack.c.l.b16 %v40
  %v67 = vunpack.c.l.b16 %v41
  %v68 = vpack.c.b16 %v61, %v60
  %v69 = vpack.c.b16 %v63, %v62
  %v70 = vpack.c.b16 %v65, %v64
  %v71 = vpack.c.b16 %v67, %v66
  %vm76 = vcmask 523264
  %v78 = vsel %vm76, %v50, 0
  %v81 = vsel %vm76, %v51, 0
  %83 = vmatpush.bf16.msra.mxu0 0
  %84 = vmatpush.bf16.msra.mxu0 0
  %85 = vmatpush.bf16.msra.mxu0 0
  %86 = vmatpush.bf16.msra.mxu0 0
  %87 = vmatpush.bf16.msra.mxu0 %v71
  %88 = vmatpush.bf16.msra.mxu0 %v70
  %89 = vmatpush.bf16.msra.mxu0 %v69
  %90 = vmatpush.bf16.msra.mxu0 %v68
  %91 = vmatmul.bf16.gmra.mxu0 %v78
  %v92 = vpop.f32.mrf.mxu0
  %v93 = vadd.f32 0.0, %v92
  %v94 = vpop.f32.mrf.mxu0
  %v95 = vadd.f32 0.0, %v94
  %96 = vmatmul.bf16.gmra.mxu0 %v81
  %v97 = vpop.f32.mrf.mxu0
  %v98 = vadd.f32 0.0, %v97
  %v99 = vpop.f32.mrf.mxu0
  %v100 = vadd.f32 0.0, %v99
  %101 = vdwg.mxu0
  %v102 = vadd.f32 %v26, %v93
  %v103 = vadd.f32 %v27, %v95
  %v104 = vadd.f32 %v28, %v98
  %v105 = vadd.f32 %v29, %v100
  %106 = vst [vmem:[#allocation2] sm:$0xff] %v102
  %107 = vst [vmem:[#allocation2 + $0x8] sm:$0xff] %v103
  %108 = vst [vmem:[#allocation2 + $0x10] sm:$0xff] %v104
  %109 = vst [vmem:[#allocation2 + $0x18] sm:$0xff] %v105
  // Predicated region
  $region18: #{_lambda_.10} parent=0 // pred_check
    %p110 = pneg %p18
  $region19: #{_lambda_.10} parent=0 // pred_check_branch
    %112 = sbr.rel (%p110) target = $region21
  $region20: #{_lambda_.10} parent=0 // pred_region
    %v113 = vld [vmem:[#allocation2] sm:$0xff]
    %v114 = vld [vmem:[#allocation2 + $0x8] sm:$0xff]
    %v115 = vld [vmem:[#allocation2 + $0x10] sm:$0xff]
    %v116 = vld [vmem:[#allocation2 + $0x18] sm:$0xff]
    %v117 = vld [vmem:[%s2] sm:$0x1]
    %v119 = vperm.slane %v117, 0
    %v121 = vadd.f32 %v113, %v119
    %v122 = vadd.f32 %v114, %v119
    %v123 = vadd.f32 %v115, %v119
    %v124 = vadd.f32 %v116, %v119
    %v125 = vpack.c.bf16 %v121, %v121
    %v126 = vpack.c.bf16 %v122, %v122
    %v127 = vpack.c.bf16 %v123, %v123
    %v128 = vpack.c.bf16 %v124, %v124
    %vm129 = vcmask 60416
    %130 = vst.msk [vmem:[%s3] sm:$0xf] %vm129, %v125
    %131 = vst.msk [vmem:[%s3 + $0x4] sm:$0xf] %vm129, %v126
    %132 = vst.msk [vmem:[%s3 + $0x8] sm:$0xf] %vm129, %v127
    %133 = vst.msk [vmem:[%s3 + $0xc] sm:$0xf] %vm129, %v128
    %v134 = vld [vmem:[#allocation2] sm:$0xff]
    %v135 = vld [vmem:[#allocation2 + $0x8] sm:$0xff]
    %v136 = vld [vmem:[#allocation2 + $0x10] sm:$0xff]
    %v137 = vld [vmem:[#allocation2 + $0x18] sm:$0xff]
    %v138 = vld [vmem:[%s2] sm:$0x1]
    %v140 = vperm.slane %v138, 0
    %v142 = vadd.f32 %v134, %v140
    %v143 = vadd.f32 %v135, %v140
    %v144 = vadd.f32 %v136, %v140
    %v145 = vadd.f32 %v137, %v140
    %vm146 = vcmask 64512
    %v147 = vsel %vm146, %v142, 0.0
    %v148 = vsel %vm146, %v143, 0.0
    %v149 = vadd.f32 %v147, %v148
    %v150 = vsel %vm146, %v144, 0.0
    %v151 = vadd.f32 %v149, %v150
    %v152 = vsel %vm146, %v145, 0.0
    %v153 = vadd.f32 %v151, %v152
    %v154 = vrot.slane %v153, 4
    %v155 = vadd.f32 %v153, %v154
    %v156 = vrot.slane %v155, 2
    %v157 = vadd.f32 %v155, %v156
    %v158 = vrot.slane %v157, 1
    %v159 = vadd.f32 %v157, %v158
    %vm160 = vcmask 57344
    %161 = vst.msk [vmem:[%s4] sm:$0x1] %vm160, %v159
    %v162 = vmul.f32 %v142, %v142
    %v163 = vmul.f32 %v143, %v143
    %v164 = vmul.f32 %v144, %v144
    %v165 = vmul.f32 %v145, %v145
    %v166 = vsel %vm146, %v162, 0.0
    %v167 = vsel %vm146, %v163, 0.0
    %v168 = vadd.f32 %v166, %v167
    %v169 = vsel %vm146, %v164, 0.0
    %v170 = vadd.f32 %v168, %v169
    %v171 = vsel %vm146, %v165, 0.0
    %v172 = vadd.f32 %v170, %v171
    %v173 = vrot.slane %v172, 4
    %v174 = vadd.f32 %v172, %v173
    %v175 = vrot.slane %v174, 2
    %v176 = vadd.f32 %v174, %v175
    %v177 = vrot.slane %v176, 1
    %v178 = vadd.f32 %v176, %v177
    %179 = vst.msk [vmem:[%s5] sm:$0x1] %vm160, %v178
  $region21: #{_lambda_.10} parent=0 // pred_fallthru
    _
  // Predicated region
  $region22: #{_lambda_.10} parent=0 // pred_check
    _
  $region23: #{_lambda_.10} parent=0 // pred_check_branch
    %181 = sbr.rel (0) target = $region25
  $region24: #{_lambda_.10} parent=0 // pred_region
    _
  $region25: #{_lambda_.10} parent=0 // pred_fallthru
    _
  // Predicated region
  $region26: #{_lambda_.10} parent=0 // pred_check
    _
  $region27: #{_lambda_.10} parent=0 // pred_check_branch
    %183 = sbr.rel (0) target = $region29
  $region28: #{_lambda_.10} parent=0 // pred_region
    _
  $region29: #{_lambda_.10} parent=0 // pred_fallthru
    _
  // Predicated region
  $region30: #{_lambda_.10} parent=0 // pred_check
    _
  $region31: #{_lambda_.10} parent=0 // pred_check_branch
    %185 = sbr.rel (0) target = $region33
  $region32: #{_lambda_.10} parent=0 // pred_region
    _
  $region33: #{_lambda_.10} parent=0 // pred_fallthru
    _
  // Predicated region
  $region34: #{_lambda_.10} parent=0 // pred_check
    _
  $region35: #{_lambda_.10} parent=0 // pred_check_branch
    %187 = sbr.rel (0) target = $region37
  $region36: #{_lambda_.10} parent=0 // pred_region
    _
  $region37: #{_lambda_.10} parent=0 // pred_fallthru
    _
  // Predicated region
  $region38: #{_lambda_.10} parent=0 // pred_check
    _
  $region39: #{_lambda_.10} parent=0 // pred_check_branch
    %189 = sbr.rel (0) target = $region41
  $region40: #{_lambda_.10} parent=0 // pred_region
    _
  $region41: #{_lambda_.10} parent=0 // pred_fallthru
    _
  // Predicated region
  $region42: #{_lambda_.10} parent=0 // pred_check
    _
  $region43: #{_lambda_.10} parent=0 // pred_check_branch
    %191 = sbr.rel (0) target = $region45
  $region44: #{_lambda_.10} parent=0 // pred_region
    _
  $region45: #{_lambda_.10} parent=0 // pred_fallthru
    _

// kernel: _lambda_.12
$region0: #{_lambda_.12}
  #allocation0 [shape = 'u32[]', space=smem, size = 0x4, offset = 0x4, fixed_abs, tag = 'smem constant byte address 0x4 - core index']
  #allocation1 [shape = 'u32[72,128]{1,0:T(1,128)}', space=vmem, size = 0x9000, scoped, tag = 'internal scratch']
  #allocation2 [shape = 'f32[32,128]{1,0:T(8,128)}', space=vmem, size = 0x4000, scoped, tag = 'scratch operand']
  %s0 = inlined_call_operand.vmem [shape: bf16[32,72], index: 0, kind: input, shape index: {}]
  %s1 = inlined_call_operand.vmem [shape: bf16[72,128], index: 1, kind: input, shape index: {}]
  %s2 = inlined_call_operand.vmem [shape: f32[1,128], index: 2, kind: input, shape index: {}]
  %s3 = inlined_call_operand.vmem [shape: f32[32,1], index: 3, kind: output, shape index: {}]
  %s4 = sld [smem:[#allocation0]]
  $region30: #{_lambda_.12} parent=0
    _
  %s6 = ssub.s32 1, %s4
  %s7 = scalar_select 0, %s6, %s4
  // Predicated region
  $region2: #{_lambda_.12} parent=0 // pred_check
    _
  $region3: #{_lambda_.12} parent=0 // pred_check_branch
    %9 = sbr.rel (0) target = $region5
  $region4: #{_lambda_.12} parent=0 // pred_region
    _
  $region5: #{_lambda_.12} parent=0 // pred_fallthru
    _
  // Predicated region
  $region6: #{_lambda_.12} parent=0 // pred_check
    _
  $region7: #{_lambda_.12} parent=0 // pred_check_branch
    %11 = sbr.rel (0) target = $region9
  $region8: #{_lambda_.12} parent=0 // pred_region
    _
  $region9: #{_lambda_.12} parent=0 // pred_fallthru
    _
  // Predicated region
  $region10: #{_lambda_.12} parent=0 // pred_check
    _
  $region11: #{_lambda_.12} parent=0 // pred_check_branch
    %13 = sbr.rel (0) target = $region13
  $region12: #{_lambda_.12} parent=0 // pred_region
    _
  $region13: #{_lambda_.12} parent=0 // pred_fallthru
    _
  %p15 = scmp.eq.s32.totalorder 0, 0
  // Predicated region
  $region14: #{_lambda_.12} parent=0 // pred_check
    %p16 = pneg %p15
  $region15: #{_lambda_.12} parent=0 // pred_check_branch
    %18 = sbr.rel (%p16) target = $region17
  $region16: #{_lambda_.12} parent=0 // pred_region
    %19 = vst [vmem:[#allocation2] sm:$0xff] 0.0
    %20 = vst [vmem:[#allocation2 + $0x8] sm:$0xff] 0.0
    %21 = vst [vmem:[#allocation2 + $0x10] sm:$0xff] 0.0
    %22 = vst [vmem:[#allocation2 + $0x18] sm:$0xff] 0.0
  $region17: #{_lambda_.12} parent=0 // pred_fallthru
    _
  %v23 = vld [vmem:[#allocation2] sm:$0xff]
  %v24 = vld [vmem:[#allocation2 + $0x8] sm:$0xff]
  %v25 = vld [vmem:[#allocation2 + $0x10] sm:$0xff]
  %v26 = vld [vmem:[#allocation2 + $0x18] sm:$0xff]
  %v27 = vld [vmem:[%s0] sm:$0xf]
  %v28 = vld [vmem:[%s0 + $0x4] sm:$0xf]
  %v29 = vld [vmem:[%s0 + $0x8] sm:$0xf]
  %v30 = vld [vmem:[%s0 + $0xc] sm:$0xf]
  %v31 = vld [vmem:[%s1] sm:$0xf]
  %v32 = vld [vmem:[%s1 + $0x4] sm:$0xf]
  %v33 = vld [vmem:[%s1 + $0x8] sm:$0xf]
  %v34 = vld [vmem:[%s1 + $0xc] sm:$0xf]
  %v35 = vld [vmem:[%s1 + $0x10] sm:$0xf]
  %v36 = vld [vmem:[%s1 + $0x14] sm:$0xf]
  %v37 = vld [vmem:[%s1 + $0x18] sm:$0xf]
  %v38 = vld [vmem:[%s1 + $0x1c] sm:$0xf]
  %v39 = vld [vmem:[%s1 + $0x20] sm:$0xf]
  %v44 = vunpack.c.l.b16 %v27
  %v45 = vunpack.c.l.b16 %v28
  %v46 = vunpack.c.l.b16 %v29
  %v47 = vunpack.c.l.b16 %v30
  %v48 = vpack.c.b16 %v45, %v44
  %v49 = vpack.c.b16 %v47, %v46
  %v59 = vunpack.c.l.b16 %v31
  %v60 = vunpack.c.l.b16 %v32
  %v61 = vunpack.c.l.b16 %v33
  %v62 = vunpack.c.l.b16 %v34
  %v63 = vunpack.c.l.b16 %v35
  %v64 = vunpack.c.l.b16 %v36
  %v65 = vunpack.c.l.b16 %v37
  %v66 = vunpack.c.l.b16 %v38
  %v67 = vunpack.c.l.b16 %v39
  %v68 = vpack.c.b16 %v60, %v59
  %v69 = vpack.c.b16 %v62, %v61
  %v70 = vpack.c.b16 %v64, %v63
  %v71 = vpack.c.b16 %v66, %v65
  %v72 = vpack.c.b16 %v67, %v67
  %vm77 = vcmask 588800
  %v79 = vsel %vm77, %v48, 0
  %v82 = vsel %vm77, %v49, 0
  %vm84 = vcmask 1043456
  %v86 = vsel %vm84, %v72, 0
  %88 = vmatpush.bf16.msra.mxu0 0
  %89 = vmatpush.bf16.msra.mxu0 0
  %90 = vmatpush.bf16.msra.mxu0 0
  %91 = vmatpush.bf16.msra.mxu0 %v86
  %92 = vmatpush.bf16.msra.mxu0 %v71
  %93 = vmatpush.bf16.msra.mxu0 %v70
  %94 = vmatpush.bf16.msra.mxu0 %v69
  %95 = vmatpush.bf16.msra.mxu0 %v68
  %96 = vmatmul.bf16.gmra.mxu0 %v79
  %v97 = vpop.f32.mrf.mxu0
  %v98 = vadd.f32 0.0, %v97
  %v99 = vpop.f32.mrf.mxu0
  %v100 = vadd.f32 0.0, %v99
  %101 = vmatmul.bf16.gmra.mxu0 %v82
  %v102 = vpop.f32.mrf.mxu0
  %v103 = vadd.f32 0.0, %v102
  %v104 = vpop.f32.mrf.mxu0
  %v105 = vadd.f32 0.0, %v104
  %106 = vdwg.mxu0
  %v107 = vadd.f32 %v23, %v98
  %v108 = vadd.f32 %v24, %v100
  %v109 = vadd.f32 %v25, %v103
  %v110 = vadd.f32 %v26, %v105
  %111 = vst [vmem:[#allocation2] sm:$0xff] %v107
  %112 = vst [vmem:[#allocation2 + $0x8] sm:$0xff] %v108
  %113 = vst [vmem:[#allocation2 + $0x10] sm:$0xff] %v109
  %114 = vst [vmem:[#allocation2 + $0x18] sm:$0xff] %v110
  // Predicated region
  $region18: #{_lambda_.12} parent=0 // pred_check
    %p115 = pneg %p15
  $region19: #{_lambda_.12} parent=0 // pred_check_branch
    %117 = sbr.rel (%p115) target = $region21
  $region20: #{_lambda_.12} parent=0 // pred_region
    %v118 = vld [vmem:[#allocation2] sm:$0xff]
    %v119 = vld [vmem:[#allocation2 + $0x8] sm:$0xff]
    %v120 = vld [vmem:[#allocation2 + $0x10] sm:$0xff]
    %v121 = vld [vmem:[#allocation2 + $0x18] sm:$0xff]
    %v122 = vld [vmem:[%s2] sm:$0x1]
    %v124 = vperm.slane %v122, 0
    %v126 = vadd.f32 %v118, %v124
    %v127 = vadd.f32 %v119, %v124
    %v128 = vadd.f32 %v120, %v124
    %v129 = vadd.f32 %v121, %v124
    %vm130 = vcmask 7168
    %131 = vst.msk [vmem:[%s3] sm:$0xff] %vm130, %v126
    %132 = vst.msk [vmem:[%s3 + $0x8] sm:$0xff] %vm130, %v127
    %133 = vst.msk [vmem:[%s3 + $0x10] sm:$0xff] %vm130, %v128
    %134 = vst.msk [vmem:[%s3 + $0x18] sm:$0xff] %vm130, %v129
  $region21: #{_lambda_.12} parent=0 // pred_fallthru
    _
  // Predicated region
  $region22: #{_lambda_.12} parent=0 // pred_check
    _
  $region23: #{_lambda_.12} parent=0 // pred_check_branch
    %136 = sbr.rel (0) target = $region25
  $region24: #{_lambda_.12} parent=0 // pred_region
    _
  $region25: #{_lambda_.12} parent=0 // pred_fallthru
    _
  // Predicated region
  $region26: #{_lambda_.12} parent=0 // pred_check
    _
  $region27: #{_lambda_.12} parent=0 // pred_check_branch
    %138 = sbr.rel (0) target = $region29
  $region28: #{_lambda_.12} parent=0 // pred_region
    _
  $region29: #{_lambda_.12} parent=0 // pred_fallthru
    _

// kernel: _lambda_.13
$region0: #{_lambda_.13}
  #allocation0 [shape = 'u32[]', space=smem, size = 0x4, offset = 0x4, fixed_abs, tag = 'smem constant byte address 0x4 - core index']
  #allocation1 [shape = 'u32[72,128]{1,0:T(1,128)}', space=vmem, size = 0x9000, scoped, tag = 'internal scratch']
  %s0 = inlined_call_operand.vmem [shape: f32[128,9,3], index: 0, kind: input, shape index: {}]
  %s1 = inlined_call_operand.vmem [shape: f32[128,1], index: 1, kind: input, shape index: {}]
  %s2 = inlined_call_operand.vmem [shape: f32[128,3], index: 2, kind: output, shape index: {}]
  %s3 = sld [smem:[#allocation0]]
  $region18: #{_lambda_.13} parent=0
    _
  %s5 = ssub.s32 1, %s3
  %s6 = scalar_select 0, %s5, %s3
  // Predicated region
  $region2: #{_lambda_.13} parent=0 // pred_check
    _
  $region3: #{_lambda_.13} parent=0 // pred_check_branch
    %8 = sbr.rel (0) target = $region5
  $region4: #{_lambda_.13} parent=0 // pred_region
    _
  $region5: #{_lambda_.13} parent=0 // pred_fallthru
    _
  // Predicated region
  $region6: #{_lambda_.13} parent=0 // pred_check
    _
  $region7: #{_lambda_.13} parent=0 // pred_check_branch
    %10 = sbr.rel (0) target = $region9
  $region8: #{_lambda_.13} parent=0 // pred_region
    _
  $region9: #{_lambda_.13} parent=0 // pred_fallthru
    _
  %v11 = vld [vmem:[%s0] sm:$0xff]
  %v12 = vld [vmem:[%s0 + $0x8] sm:$0x1]
  %v13 = vld [vmem:[%s0 + $0x10] sm:$0xff]
  %v14 = vld [vmem:[%s0 + $0x18] sm:$0x1]
  %v15 = vld [vmem:[%s0 + $0x20] sm:$0xff]
  %v16 = vld [vmem:[%s0 + $0x28] sm:$0x1]
  %v17 = vld [vmem:[%s0 + $0x30] sm:$0xff]
  %v18 = vld [vmem:[%s0 + $0x38] sm:$0x1]
  %v19 = vld [vmem:[%s0 + $0x40] sm:$0xff]
  %v20 = vld [vmem:[%s0 + $0x48] sm:$0x1]
  %v21 = vld [vmem:[%s0 + $0x50] sm:$0xff]
  %v22 = vld [vmem:[%s0 + $0x58] sm:$0x1]
  %v23 = vld [vmem:[%s0 + $0x60] sm:$0xff]
  %v24 = vld [vmem:[%s0 + $0x68] sm:$0x1]
  %v25 = vld [vmem:[%s0 + $0x70] sm:$0xff]
  %v26 = vld [vmem:[%s0 + $0x78] sm:$0x1]
  %v27 = vld [vmem:[%s0 + $0x80] sm:$0xff]
  %v28 = vld [vmem:[%s0 + $0x88] sm:$0x1]
  %v29 = vld [vmem:[%s0 + $0x90] sm:$0xff]
  %v30 = vld [vmem:[%s0 + $0x98] sm:$0x1]
  %v31 = vld [vmem:[%s0 + $0xa0] sm:$0xff]
  %v32 = vld [vmem:[%s0 + $0xa8] sm:$0x1]
  %v33 = vld [vmem:[%s0 + $0xb0] sm:$0xff]
  %v34 = vld [vmem:[%s0 + $0xb8] sm:$0x1]
  %v35 = vld [vmem:[%s0 + $0xc0] sm:$0xff]
  %v36 = vld [vmem:[%s0 + $0xc8] sm:$0x1]
  %v37 = vld [vmem:[%s0 + $0xd0] sm:$0xff]
  %v38 = vld [vmem:[%s0 + $0xd8] sm:$0x1]
  %v39 = vld [vmem:[%s0 + $0xe0] sm:$0xff]
  %v40 = vld [vmem:[%s0 + $0xe8] sm:$0x1]
  %v41 = vld [vmem:[%s0 + $0xf0] sm:$0xff]
  %v42 = vld [vmem:[%s0 + $0xf8] sm:$0x1]
  %v43 = vld [vmem:[%s0 + $0x100] sm:$0xff]
  %v44 = vld [vmem:[%s0 + $0x108] sm:$0x1]
  %v45 = vld [vmem:[%s0 + $0x110] sm:$0xff]
  %v46 = vld [vmem:[%s0 + $0x118] sm:$0x1]
  %v47 = vld [vmem:[%s0 + $0x120] sm:$0xff]
  %v48 = vld [vmem:[%s0 + $0x128] sm:$0x1]
  %v49 = vld [vmem:[%s0 + $0x130] sm:$0xff]
  %v50 = vld [vmem:[%s0 + $0x138] sm:$0x1]
  %v51 = vld [vmem:[%s0 + $0x140] sm:$0xff]
  %v52 = vld [vmem:[%s0 + $0x148] sm:$0x1]
  %v53 = vld [vmem:[%s0 + $0x150] sm:$0xff]
  %v54 = vld [vmem:[%s0 + $0x158] sm:$0x1]
  %v55 = vld [vmem:[%s0 + $0x160] sm:$0xff]
  %v56 = vld [vmem:[%s0 + $0x168] sm:$0x1]
  %v57 = vld [vmem:[%s0 + $0x170] sm:$0xff]
  %v58 = vld [vmem:[%s0 + $0x178] sm:$0x1]
  %v59 = vld [vmem:[%s0 + $0x180] sm:$0xff]
  %v60 = vld [vmem:[%s0 + $0x188] sm:$0x1]
  %v61 = vld [vmem:[%s0 + $0x190] sm:$0xff]
  %v62 = vld [vmem:[%s0 + $0x198] sm:$0x1]
  %v63 = vld [vmem:[%s0 + $0x1a0] sm:$0xff]
  %v64 = vld [vmem:[%s0 + $0x1a8] sm:$0x1]
  %v65 = vld [vmem:[%s0 + $0x1b0] sm:$0xff]
  %v66 = vld [vmem:[%s0 + $0x1b8] sm:$0x1]
  %v67 = vld [vmem:[%s0 + $0x1c0] sm:$0xff]
  %v68 = vld [vmem:[%s0 + $0x1c8] sm:$0x1]
  %v69 = vld [vmem:[%s0 + $0x1d0] sm:$0xff]
  %v70 = vld [vmem:[%s0 + $0x1d8] sm:$0x1]
  %v71 = vld [vmem:[%s0 + $0x1e0] sm:$0xff]
  %v72 = vld [vmem:[%s0 + $0x1e8] sm:$0x1]
  %v73 = vld [vmem:[%s0 + $0x1f0] sm:$0xff]
  %v74 = vld [vmem:[%s0 + $0x1f8] sm:$0x1]
  %v75 = vld [vmem:[%s0 + $0x200] sm:$0xff]
  %v76 = vld [vmem:[%s0 + $0x208] sm:$0x1]
  %v77 = vld [vmem:[%s0 + $0x210] sm:$0xff]
  %v78 = vld [vmem:[%s0 + $0x218] sm:$0x1]
  %v79 = vld [vmem:[%s0 + $0x220] sm:$0xff]
  %v80 = vld [vmem:[%s0 + $0x228] sm:$0x1]
  %v81 = vld [vmem:[%s0 + $0x230] sm:$0xff]
  %v82 = vld [vmem:[%s0 + $0x238] sm:$0x1]
  %v83 = vld [vmem:[%s0 + $0x240] sm:$0xff]
  %v84 = vld [vmem:[%s0 + $0x248] sm:$0x1]
  %v85 = vld [vmem:[%s0 + $0x250] sm:$0xff]
  %v86 = vld [vmem:[%s0 + $0x258] sm:$0x1]
  %v87 = vld [vmem:[%s0 + $0x260] sm:$0xff]
  %v88 = vld [vmem:[%s0 + $0x268] sm:$0x1]
  %v89 = vld [vmem:[%s0 + $0x270] sm:$0xff]
  %v90 = vld [vmem:[%s0 + $0x278] sm:$0x1]
  %v91 = vld [vmem:[%s0 + $0x280] sm:$0xff]
  %v92 = vld [vmem:[%s0 + $0x288] sm:$0x1]
  %v93 = vld [vmem:[%s0 + $0x290] sm:$0xff]
  %v94 = vld [vmem:[%s0 + $0x298] sm:$0x1]
  %v95 = vld [vmem:[%s0 + $0x2a0] sm:$0xff]
  %v96 = vld [vmem:[%s0 + $0x2a8] sm:$0x1]
  %v97 = vld [vmem:[%s0 + $0x2b0] sm:$0xff]
  %v98 = vld [vmem:[%s0 + $0x2b8] sm:$0x1]
  %v99 = vld [vmem:[%s0 + $0x2c0] sm:$0xff]
  %v100 = vld [vmem:[%s0 + $0x2c8] sm:$0x1]
  %v101 = vld [vmem:[%s0 + $0x2d0] sm:$0xff]
  %v102 = vld [vmem:[%s0 + $0x2d8] sm:$0x1]
  %v103 = vld [vmem:[%s0 + $0x2e0] sm:$0xff]
  %v104 = vld [vmem:[%s0 + $0x2e8] sm:$0x1]
  %v105 = vld [vmem:[%s0 + $0x2f0] sm:$0xff]
  %v106 = vld [vmem:[%s0 + $0x2f8] sm:$0x1]
  %v107 = vld [vmem:[%s0 + $0x300] sm:$0xff]
  %v108 = vld [vmem:[%s0 + $0x308] sm:$0x1]
  %v109 = vld [vmem:[%s0 + $0x310] sm:$0xff]
  %v110 = vld [vmem:[%s0 + $0x318] sm:$0x1]
  %v111 = vld [vmem:[%s0 + $0x320] sm:$0xff]
  %v112 = vld [vmem:[%s0 + $0x328] sm:$0x1]
  %v113 = vld [vmem:[%s0 + $0x330] sm:$0xff]
  %v114 = vld [vmem:[%s0 + $0x338] sm:$0x1]
  %v115 = vld [vmem:[%s0 + $0x340] sm:$0xff]
  %v116 = vld [vmem:[%s0 + $0x348] sm:$0x1]
  %v117 = vld [vmem:[%s0 + $0x350] sm:$0xff]
  %v118 = vld [vmem:[%s0 + $0x358] sm:$0x1]
  %v119 = vld [vmem:[%s0 + $0x360] sm:$0xff]
  %v120 = vld [vmem:[%s0 + $0x368] sm:$0x1]
  %v121 = vld [vmem:[%s0 + $0x370] sm:$0xff]
  %v122 = vld [vmem:[%s0 + $0x378] sm:$0x1]
  %v123 = vld [vmem:[%s0 + $0x380] sm:$0xff]
  %v124 = vld [vmem:[%s0 + $0x388] sm:$0x1]
  %v125 = vld [vmem:[%s0 + $0x390] sm:$0xff]
  %v126 = vld [vmem:[%s0 + $0x398] sm:$0x1]
  %v127 = vld [vmem:[%s0 + $0x3a0] sm:$0xff]
  %v128 = vld [vmem:[%s0 + $0x3a8] sm:$0x1]
  %v129 = vld [vmem:[%s0 + $0x3b0] sm:$0xff]
  %v130 = vld [vmem:[%s0 + $0x3b8] sm:$0x1]
  %v131 = vld [vmem:[%s0 + $0x3c0] sm:$0xff]
  %v132 = vld [vmem:[%s0 + $0x3c8] sm:$0x1]
  %v133 = vld [vmem:[%s0 + $0x3d0] sm:$0xff]
  %v134 = vld [vmem:[%s0 + $0x3d8] sm:$0x1]
  %v135 = vld [vmem:[%s0 + $0x3e0] sm:$0xff]
  %v136 = vld [vmem:[%s0 + $0x3e8] sm:$0x1]
  %v137 = vld [vmem:[%s0 + $0x3f0] sm:$0xff]
  %v138 = vld [vmem:[%s0 + $0x3f8] sm:$0x1]
  %v139 = vld [vmem:[%s0 + $0x400] sm:$0xff]
  %v140 = vld [vmem:[%s0 + $0x408] sm:$0x1]
  %v141 = vld [vmem:[%s0 + $0x410] sm:$0xff]
  %v142 = vld [vmem:[%s0 + $0x418] sm:$0x1]
  %v143 = vld [vmem:[%s0 + $0x420] sm:$0xff]
  %v144 = vld [vmem:[%s0 + $0x428] sm:$0x1]
  %v145 = vld [vmem:[%s0 + $0x430] sm:$0xff]
  %v146 = vld [vmem:[%s0 + $0x438] sm:$0x1]
  %v147 = vld [vmem:[%s0 + $0x440] sm:$0xff]
  %v148 = vld [vmem:[%s0 + $0x448] sm:$0x1]
  %v149 = vld [vmem:[%s0 + $0x450] sm:$0xff]
  %v150 = vld [vmem:[%s0 + $0x458] sm:$0x1]
  %v151 = vld [vmem:[%s0 + $0x460] sm:$0xff]
  %v152 = vld [vmem:[%s0 + $0x468] sm:$0x1]
  %v153 = vld [vmem:[%s0 + $0x470] sm:$0xff]
  %v154 = vld [vmem:[%s0 + $0x478] sm:$0x1]
  %v155 = vld [vmem:[%s0 + $0x480] sm:$0xff]
  %v156 = vld [vmem:[%s0 + $0x488] sm:$0x1]
  %v157 = vld [vmem:[%s0 + $0x490] sm:$0xff]
  %v158 = vld [vmem:[%s0 + $0x498] sm:$0x1]
  %v159 = vld [vmem:[%s0 + $0x4a0] sm:$0xff]
  %v160 = vld [vmem:[%s0 + $0x4a8] sm:$0x1]
  %v161 = vld [vmem:[%s0 + $0x4b0] sm:$0xff]
  %v162 = vld [vmem:[%s0 + $0x4b8] sm:$0x1]
  %v163 = vld [vmem:[%s0 + $0x4c0] sm:$0xff]
  %v164 = vld [vmem:[%s0 + $0x4c8] sm:$0x1]
  %v165 = vld [vmem:[%s0 + $0x4d0] sm:$0xff]
  %v166 = vld [vmem:[%s0 + $0x4d8] sm:$0x1]
  %v167 = vld [vmem:[%s0 + $0x4e0] sm:$0xff]
  %v168 = vld [vmem:[%s0 + $0x4e8] sm:$0x1]
  %v169 = vld [vmem:[%s0 + $0x4f0] sm:$0xff]
  %v170 = vld [vmem:[%s0 + $0x4f8] sm:$0x1]
  %v171 = vld [vmem:[%s0 + $0x500] sm:$0xff]
  %v172 = vld [vmem:[%s0 + $0x508] sm:$0x1]
  %v173 = vld [vmem:[%s0 + $0x510] sm:$0xff]
  %v174 = vld [vmem:[%s0 + $0x518] sm:$0x1]
  %v175 = vld [vmem:[%s0 + $0x520] sm:$0xff]
  %v176 = vld [vmem:[%s0 + $0x528] sm:$0x1]
  %v177 = vld [vmem:[%s0 + $0x530] sm:$0xff]
  %v178 = vld [vmem:[%s0 + $0x538] sm:$0x1]
  %v179 = vld [vmem:[%s0 + $0x540] sm:$0xff]
  %v180 = vld [vmem:[%s0 + $0x548] sm:$0x1]
  %v181 = vld [vmem:[%s0 + $0x550] sm:$0xff]
  %v182 = vld [vmem:[%s0 + $0x558] sm:$0x1]
  %v183 = vld [vmem:[%s0 + $0x560] sm:$0xff]
  %v184 = vld [vmem:[%s0 + $0x568] sm:$0x1]
  %v185 = vld [vmem:[%s0 + $0x570] sm:$0xff]
  %v186 = vld [vmem:[%s0 + $0x578] sm:$0x1]
  %v187 = vld [vmem:[%s0 + $0x580] sm:$0xff]
  %v188 = vld [vmem:[%s0 + $0x588] sm:$0x1]
  %v189 = vld [vmem:[%s0 + $0x590] sm:$0xff]
  %v190 = vld [vmem:[%s0 + $0x598] sm:$0x1]
  %v191 = vld [vmem:[%s0 + $0x5a0] sm:$0xff]
  %v192 = vld [vmem:[%s0 + $0x5a8] sm:$0x1]
  %v193 = vld [vmem:[%s0 + $0x5b0] sm:$0xff]
  %v194 = vld [vmem:[%s0 + $0x5b8] sm:$0x1]
  %v195 = vld [vmem:[%s0 + $0x5c0] sm:$0xff]
  %v196 = vld [vmem:[%s0 + $0x5c8] sm:$0x1]
  %v197 = vld [vmem:[%s0 + $0x5d0] sm:$0xff]
  %v198 = vld [vmem:[%s0 + $0x5d8] sm:$0x1]
  %v199 = vld [vmem:[%s0 + $0x5e0] sm:$0xff]
  %v200 = vld [vmem:[%s0 + $0x5e8] sm:$0x1]
  %v201 = vld [vmem:[%s0 + $0x5f0] sm:$0xff]
  %v202 = vld [vmem:[%s0 + $0x5f8] sm:$0x1]
  %v203 = vld [vmem:[%s0 + $0x600] sm:$0xff]
  %v204 = vld [vmem:[%s0 + $0x608] sm:$0x1]
  %v205 = vld [vmem:[%s0 + $0x610] sm:$0xff]
  %v206 = vld [vmem:[%s0 + $0x618] sm:$0x1]
  %v207 = vld [vmem:[%s0 + $0x620] sm:$0xff]
  %v208 = vld [vmem:[%s0 + $0x628] sm:$0x1]
  %v209 = vld [vmem:[%s0 + $0x630] sm:$0xff]
  %v210 = vld [vmem:[%s0 + $0x638] sm:$0x1]
  %v211 = vld [vmem:[%s0 + $0x640] sm:$0xff]
  %v212 = vld [vmem:[%s0 + $0x648] sm:$0x1]
  %v213 = vld [vmem:[%s0 + $0x650] sm:$0xff]
  %v214 = vld [vmem:[%s0 + $0x658] sm:$0x1]
  %v215 = vld [vmem:[%s0 + $0x660] sm:$0xff]
  %v216 = vld [vmem:[%s0 + $0x668] sm:$0x1]
  %v217 = vld [vmem:[%s0 + $0x670] sm:$0xff]
  %v218 = vld [vmem:[%s0 + $0x678] sm:$0x1]
  %v219 = vld [vmem:[%s0 + $0x680] sm:$0xff]
  %v220 = vld [vmem:[%s0 + $0x688] sm:$0x1]
  %v221 = vld [vmem:[%s0 + $0x690] sm:$0xff]
  %v222 = vld [vmem:[%s0 + $0x698] sm:$0x1]
  %v223 = vld [vmem:[%s0 + $0x6a0] sm:$0xff]
  %v224 = vld [vmem:[%s0 + $0x6a8] sm:$0x1]
  %v225 = vld [vmem:[%s0 + $0x6b0] sm:$0xff]
  %v226 = vld [vmem:[%s0 + $0x6b8] sm:$0x1]
  %v227 = vld [vmem:[%s0 + $0x6c0] sm:$0xff]
  %v228 = vld [vmem:[%s0 + $0x6c8] sm:$0x1]
  %v229 = vld [vmem:[%s0 + $0x6d0] sm:$0xff]
  %v230 = vld [vmem:[%s0 + $0x6d8] sm:$0x1]
  %v231 = vld [vmem:[%s0 + $0x6e0] sm:$0xff]
  %v232 = vld [vmem:[%s0 + $0x6e8] sm:$0x1]
  %v233 = vld [vmem:[%s0 + $0x6f0] sm:$0xff]
  %v234 = vld [vmem:[%s0 + $0x6f8] sm:$0x1]
  %v235 = vld [vmem:[%s0 + $0x700] sm:$0xff]
  %v236 = vld [vmem:[%s0 + $0x708] sm:$0x1]
  %v237 = vld [vmem:[%s0 + $0x710] sm:$0xff]
  %v238 = vld [vmem:[%s0 + $0x718] sm:$0x1]
  %v239 = vld [vmem:[%s0 + $0x720] sm:$0xff]
  %v240 = vld [vmem:[%s0 + $0x728] sm:$0x1]
  %v241 = vld [vmem:[%s0 + $0x730] sm:$0xff]
  %v242 = vld [vmem:[%s0 + $0x738] sm:$0x1]
  %v243 = vld [vmem:[%s0 + $0x740] sm:$0xff]
  %v244 = vld [vmem:[%s0 + $0x748] sm:$0x1]
  %v245 = vld [vmem:[%s0 + $0x750] sm:$0xff]
  %v246 = vld [vmem:[%s0 + $0x758] sm:$0x1]
  %v247 = vld [vmem:[%s0 + $0x760] sm:$0xff]
  %v248 = vld [vmem:[%s0 + $0x768] sm:$0x1]
  %v249 = vld [vmem:[%s0 + $0x770] sm:$0xff]
  %v250 = vld [vmem:[%s0 + $0x778] sm:$0x1]
  %v251 = vld [vmem:[%s0 + $0x780] sm:$0xff]
  %v252 = vld [vmem:[%s0 + $0x788] sm:$0x1]
  %v253 = vld [vmem:[%s0 + $0x790] sm:$0xff]
  %v254 = vld [vmem:[%s0 + $0x798] sm:$0x1]
  %v255 = vld [vmem:[%s0 + $0x7a0] sm:$0xff]
  %v256 = vld [vmem:[%s0 + $0x7a8] sm:$0x1]
  %v257 = vld [vmem:[%s0 + $0x7b0] sm:$0xff]
  %v258 = vld [vmem:[%s0 + $0x7b8] sm:$0x1]
  %v259 = vld [vmem:[%s0 + $0x7c0] sm:$0xff]
  %v260 = vld [vmem:[%s0 + $0x7c8] sm:$0x1]
  %v261 = vld [vmem:[%s0 + $0x7d0] sm:$0xff]
  %v262 = vld [vmem:[%s0 + $0x7d8] sm:$0x1]
  %v263 = vld [vmem:[%s0 + $0x7e0] sm:$0xff]
  %v264 = vld [vmem:[%s0 + $0x7e8] sm:$0x1]
  %v265 = vld [vmem:[%s0 + $0x7f0] sm:$0xff]
  %v266 = vld [vmem:[%s0 + $0x7f8] sm:$0x1]
  %vm267 = vcmask 23552
  %v268 = vsel %vm267, %v11, 0.0
  %vm269 = vcmask 16384
  %v270 = vsel %vm269, %v12, 0.0
  %v271 = vadd.f32 %v268, %v270
  %v272 = vrot.slane %v271, 4
  %v273 = vadd.f32 %v271, %v272
  %v274 = vrot.slane %v273, 2
  %v275 = vadd.f32 %v273, %v274
  %v276 = vrot.slane %v275, 1
  %v277 = vadd.f32 %v275, %v276
  %v278 = vsel %vm267, %v13, 0.0
  %v279 = vsel %vm269, %v14, 0.0
  %v280 = vadd.f32 %v278, %v279
  %v281 = vrot.slane %v280, 4
  %v282 = vadd.f32 %v280, %v281
  %v283 = vrot.slane %v282, 2
  %v284 = vadd.f32 %v282, %v283
  %v285 = vrot.slane %v284, 1
  %v286 = vadd.f32 %v284, %v285
  %v287 = vsel %vm267, %v15, 0.0
  %v288 = vsel %vm269, %v16, 0.0
  %v289 = vadd.f32 %v287, %v288
  %v290 = vrot.slane %v289, 4
  %v291 = vadd.f32 %v289, %v290
  %v292 = vrot.slane %v291, 2
  %v293 = vadd.f32 %v291, %v292
  %v294 = vrot.slane %v293, 1
  %v295 = vadd.f32 %v293, %v294
  %v296 = vsel %vm267, %v17, 0.0
  %v297 = vsel %vm269, %v18, 0.0
  %v298 = vadd.f32 %v296, %v297
  %v299 = vrot.slane %v298, 4
  %v300 = vadd.f32 %v298, %v299
  %v301 = vrot.slane %v300, 2
  %v302 = vadd.f32 %v300, %v301
  %v303 = vrot.slane %v302, 1
  %v304 = vadd.f32 %v302, %v303
  %v305 = vsel %vm267, %v19, 0.0
  %v306 = vsel %vm269, %v20, 0.0
  %v307 = vadd.f32 %v305, %v306
  %v308 = vrot.slane %v307, 4
  %v309 = vadd.f32 %v307, %v308
  %v310 = vrot.slane %v309, 2
  %v311 = vadd.f32 %v309, %v310
  %v312 = vrot.slane %v311, 1
  %v313 = vadd.f32 %v311, %v312
  %v314 = vsel %vm267, %v21, 0.0
  %v315 = vsel %vm269, %v22, 0.0
  %v316 = vadd.f32 %v314, %v315
  %v317 = vrot.slane %v316, 4
  %v318 = vadd.f32 %v316, %v317
  %v319 = vrot.slane %v318, 2
  %v320 = vadd.f32 %v318, %v319
  %v321 = vrot.slane %v320, 1
  %v322 = vadd.f32 %v320, %v321
  %v323 = vsel %vm267, %v23, 0.0
  %v324 = vsel %vm269, %v24, 0.0
  %v325 = vadd.f32 %v323, %v324
  %v326 = vrot.slane %v325, 4
  %v327 = vadd.f32 %v325, %v326
  %v328 = vrot.slane %v327, 2
  %v329 = vadd.f32 %v327, %v328
  %v330 = vrot.slane %v329, 1
  %v331 = vadd.f32 %v329, %v330
  %v332 = vsel %vm267, %v25, 0.0
  %v333 = vsel %vm269, %v26, 0.0
  %v334 = vadd.f32 %v332, %v333
  %v335 = vrot.slane %v334, 4
  %v336 = vadd.f32 %v334, %v335
  %v337 = vrot.slane %v336, 2
  %v338 = vadd.f32 %v336, %v337
  %v339 = vrot.slane %v338, 1
  %v340 = vadd.f32 %v338, %v339
  %v341 = vsel %vm267, %v27, 0.0
  %v342 = vsel %vm269, %v28, 0.0
  %v343 = vadd.f32 %v341, %v342
  %v344 = vrot.slane %v343, 4
  %v345 = vadd.f32 %v343, %v344
  %v346 = vrot.slane %v345, 2
  %v347 = vadd.f32 %v345, %v346
  %v348 = vrot.slane %v347, 1
  %v349 = vadd.f32 %v347, %v348
  %v350 = vsel %vm267, %v29, 0.0
  %v351 = vsel %vm269, %v30, 0.0
  %v352 = vadd.f32 %v350, %v351
  %v353 = vrot.slane %v352, 4
  %v354 = vadd.f32 %v352, %v353
  %v355 = vrot.slane %v354, 2
  %v356 = vadd.f32 %v354, %v355
  %v357 = vrot.slane %v356, 1
  %v358 = vadd.f32 %v356, %v357
  %v359 = vsel %vm267, %v31, 0.0
  %v360 = vsel %vm269, %v32, 0.0
  %v361 = vadd.f32 %v359, %v360
  %v362 = vrot.slane %v361, 4
  %v363 = vadd.f32 %v361, %v362
  %v364 = vrot.slane %v363, 2
  %v365 = vadd.f32 %v363, %v364
  %v366 = vrot.slane %v365, 1
  %v367 = vadd.f32 %v365, %v366
  %v368 = vsel %vm267, %v33, 0.0
  %v369 = vsel %vm269, %v34, 0.0
  %v370 = vadd.f32 %v368, %v369
  %v371 = vrot.slane %v370, 4
  %v372 = vadd.f32 %v370, %v371
  %v373 = vrot.slane %v372, 2
  %v374 = vadd.f32 %v372, %v373
  %v375 = vrot.slane %v374, 1
  %v376 = vadd.f32 %v374, %v375
  %v377 = vsel %vm267, %v35, 0.0
  %v378 = vsel %vm269, %v36, 0.0
  %v379 = vadd.f32 %v377, %v378
  %v380 = vrot.slane %v379, 4
  %v381 = vadd.f32 %v379, %v380
  %v382 = vrot.slane %v381, 2
  %v383 = vadd.f32 %v381, %v382
  %v384 = vrot.slane %v383, 1
  %v385 = vadd.f32 %v383, %v384
  %v386 = vsel %vm267, %v37, 0.0
  %v387 = vsel %vm269, %v38, 0.0
  %v388 = vadd.f32 %v386, %v387
  %v389 = vrot.slane %v388, 4
  %v390 = vadd.f32 %v388, %v389
  %v391 = vrot.slane %v390, 2
  %v392 = vadd.f32 %v390, %v391
  %v393 = vrot.slane %v392, 1
  %v394 = vadd.f32 %v392, %v393
  %v395 = vsel %vm267, %v39, 0.0
  %v396 = vsel %vm269, %v40, 0.0
  %v397 = vadd.f32 %v395, %v396
  %v398 = vrot.slane %v397, 4
  %v399 = vadd.f32 %v397, %v398
  %v400 = vrot.slane %v399, 2
  %v401 = vadd.f32 %v399, %v400
  %v402 = vrot.slane %v401, 1
  %v403 = vadd.f32 %v401, %v402
  %v404 = vsel %vm267, %v41, 0.0
  %v405 = vsel %vm269, %v42, 0.0
  %v406 = vadd.f32 %v404, %v405
  %v407 = vrot.slane %v406, 4
  %v408 = vadd.f32 %v406, %v407
  %v409 = vrot.slane %v408, 2
  %v410 = vadd.f32 %v408, %v409
  %v411 = vrot.slane %v410, 1
  %v412 = vadd.f32 %v410, %v411
  %v413 = vsel %vm267, %v43, 0.0
  %v414 = vsel %vm269, %v44, 0.0
  %v415 = vadd.f32 %v413, %v414
  %v416 = vrot.slane %v415, 4
  %v417 = vadd.f32 %v415, %v416
  %v418 = vrot.slane %v417, 2
  %v419 = vadd.f32 %v417, %v418
  %v420 = vrot.slane %v419, 1
  %v421 = vadd.f32 %v419, %v420
  %v422 = vsel %vm267, %v45, 0.0
  %v423 = vsel %vm269, %v46, 0.0
  %v424 = vadd.f32 %v422, %v423
  %v425 = vrot.slane %v424, 4
  %v426 = vadd.f32 %v424, %v425
  %v427 = vrot.slane %v426, 2
  %v428 = vadd.f32 %v426, %v427
  %v429 = vrot.slane %v428, 1
  %v430 = vadd.f32 %v428, %v429
  %v431 = vsel %vm267, %v47, 0.0
  %v432 = vsel %vm269, %v48, 0.0
  %v433 = vadd.f32 %v431, %v432
  %v434 = vrot.slane %v433, 4
  %v435 = vadd.f32 %v433, %v434
  %v436 = vrot.slane %v435, 2
  %v437 = vadd.f32 %v435, %v436
  %v438 = vrot.slane %v437, 1
  %v439 = vadd.f32 %v437, %v438
  %v440 = vsel %vm267, %v49, 0.0
  %v441 = vsel %vm269, %v50, 0.0
  %v442 = vadd.f32 %v440, %v441
  %v443 = vrot.slane %v442, 4
  %v444 = vadd.f32 %v442, %v443
  %v445 = vrot.slane %v444, 2
  %v446 = vadd.f32 %v444, %v445
  %v447 = vrot.slane %v446, 1
  %v448 = vadd.f32 %v446, %v447
  %v449 = vsel %vm267, %v51, 0.0
  %v450 = vsel %vm269, %v52, 0.0
  %v451 = vadd.f32 %v449, %v450
  %v452 = vrot.slane %v451, 4
  %v453 = vadd.f32 %v451, %v452
  %v454 = vrot.slane %v453, 2
  %v455 = vadd.f32 %v453, %v454
  %v456 = vrot.slane %v455, 1
  %v457 = vadd.f32 %v455, %v456
  %v458 = vsel %vm267, %v53, 0.0
  %v459 = vsel %vm269, %v54, 0.0
  %v460 = vadd.f32 %v458, %v459
  %v461 = vrot.slane %v460, 4
  %v462 = vadd.f32 %v460, %v461
  %v463 = vrot.slane %v462, 2
  %v464 = vadd.f32 %v462, %v463
  %v465 = vrot.slane %v464, 1
  %v466 = vadd.f32 %v464, %v465
  %v467 = vsel %vm267, %v55, 0.0
  %v468 = vsel %vm269, %v56, 0.0
  %v469 = vadd.f32 %v467, %v468
  %v470 = vrot.slane %v469, 4
  %v471 = vadd.f32 %v469, %v470
  %v472 = vrot.slane %v471, 2
  %v473 = vadd.f32 %v471, %v472
  %v474 = vrot.slane %v473, 1
  %v475 = vadd.f32 %v473, %v474
  %v476 = vsel %vm267, %v57, 0.0
  %v477 = vsel %vm269, %v58, 0.0
  %v478 = vadd.f32 %v476, %v477
  %v479 = vrot.slane %v478, 4
  %v480 = vadd.f32 %v478, %v479
  %v481 = vrot.slane %v480, 2
  %v482 = vadd.f32 %v480, %v481
  %v483 = vrot.slane %v482, 1
  %v484 = vadd.f32 %v482, %v483
  %v485 = vsel %vm267, %v59, 0.0
  %v486 = vsel %vm269, %v60, 0.0
  %v487 = vadd.f32 %v485, %v486
  %v488 = vrot.slane %v487, 4
  %v489 = vadd.f32 %v487, %v488
  %v490 = vrot.slane %v489, 2
  %v491 = vadd.f32 %v489, %v490
  %v492 = vrot.slane %v491, 1
  %v493 = vadd.f32 %v491, %v492
  %v494 = vsel %vm267, %v61, 0.0
  %v495 = vsel %vm269, %v62, 0.0
  %v496 = vadd.f32 %v494, %v495
  %v497 = vrot.slane %v496, 4
  %v498 = vadd.f32 %v496, %v497
  %v499 = vrot.slane %v498, 2
  %v500 = vadd.f32 %v498, %v499
  %v501 = vrot.slane %v500, 1
  %v502 = vadd.f32 %v500, %v501
  %v503 = vsel %vm267, %v63, 0.0
  %v504 = vsel %vm269, %v64, 0.0
  %v505 = vadd.f32 %v503, %v504
  %v506 = vrot.slane %v505, 4
  %v507 = vadd.f32 %v505, %v506
  %v508 = vrot.slane %v507, 2
  %v509 = vadd.f32 %v507, %v508
  %v510 = vrot.slane %v509, 1
  %v511 = vadd.f32 %v509, %v510
  %v512 = vsel %vm267, %v65, 0.0
  %v513 = vsel %vm269, %v66, 0.0
  %v514 = vadd.f32 %v512, %v513
  %v515 = vrot.slane %v514, 4
  %v516 = vadd.f32 %v514, %v515
  %v517 = vrot.slane %v516, 2
  %v518 = vadd.f32 %v516, %v517
  %v519 = vrot.slane %v518, 1
  %v520 = vadd.f32 %v518, %v519
  %v521 = vsel %vm267, %v67, 0.0
  %v522 = vsel %vm269, %v68, 0.0
  %v523 = vadd.f32 %v521, %v522
  %v524 = vrot.slane %v523, 4
  %v525 = vadd.f32 %v523, %v524
  %v526 = vrot.slane %v525, 2
  %v527 = vadd.f32 %v525, %v526
  %v528 = vrot.slane %v527, 1
  %v529 = vadd.f32 %v527, %v528
  %v530 = vsel %vm267, %v69, 0.0
  %v531 = vsel %vm269, %v70, 0.0
  %v532 = vadd.f32 %v530, %v531
  %v533 = vrot.slane %v532, 4
  %v534 = vadd.f32 %v532, %v533
  %v535 = vrot.slane %v534, 2
  %v536 = vadd.f32 %v534, %v535
  %v537 = vrot.slane %v536, 1
  %v538 = vadd.f32 %v536, %v537
  %v539 = vsel %vm267, %v71, 0.0
  %v540 = vsel %vm269, %v72, 0.0
  %v541 = vadd.f32 %v539, %v540
  %v542 = vrot.slane %v541, 4
  %v543 = vadd.f32 %v541, %v542
  %v544 = vrot.slane %v543, 2
  %v545 = vadd.f32 %v543, %v544
  %v546 = vrot.slane %v545, 1
  %v547 = vadd.f32 %v545, %v546
  %v548 = vsel %vm267, %v73, 0.0
  %v549 = vsel %vm269, %v74, 0.0
  %v550 = vadd.f32 %v548, %v549
  %v551 = vrot.slane %v550, 4
  %v552 = vadd.f32 %v550, %v551
  %v553 = vrot.slane %v552, 2
  %v554 = vadd.f32 %v552, %v553
  %v555 = vrot.slane %v554, 1
  %v556 = vadd.f32 %v554, %v555
  %v557 = vsel %vm267, %v75, 0.0
  %v558 = vsel %vm269, %v76, 0.0
  %v559 = vadd.f32 %v557, %v558
  %v560 = vrot.slane %v559, 4
  %v561 = vadd.f32 %v559, %v560
  %v562 = vrot.slane %v561, 2
  %v563 = vadd.f32 %v561, %v562
  %v564 = vrot.slane %v563, 1
  %v565 = vadd.f32 %v563, %v564
  %v566 = vsel %vm267, %v77, 0.0
  %v567 = vsel %vm269, %v78, 0.0
  %v568 = vadd.f32 %v566, %v567
  %v569 = vrot.slane %v568, 4
  %v570 = vadd.f32 %v568, %v569
  %v571 = vrot.slane %v570, 2
  %v572 = vadd.f32 %v570, %v571
  %v573 = vrot.slane %v572, 1
  %v574 = vadd.f32 %v572, %v573
  %v575 = vsel %vm267, %v79, 0.0
  %v576 = vsel %vm269, %v80, 0.0
  %v577 = vadd.f32 %v575, %v576
  %v578 = vrot.slane %v577, 4
  %v579 = vadd.f32 %v577, %v578
  %v580 = vrot.slane %v579, 2
  %v581 = vadd.f32 %v579, %v580
  %v582 = vrot.slane %v581, 1
  %v583 = vadd.f32 %v581, %v582
  %v584 = vsel %vm267, %v81, 0.0
  %v585 = vsel %vm269, %v82, 0.0
  %v586 = vadd.f32 %v584, %v585
  %v587 = vrot.slane %v586, 4
  %v588 = vadd.f32 %v586, %v587
  %v589 = vrot.slane %v588, 2
  %v590 = vadd.f32 %v588, %v589
  %v591 = vrot.slane %v590, 1
  %v592 = vadd.f32 %v590, %v591
  %v593 = vsel %vm267, %v83, 0.0
  %v594 = vsel %vm269, %v84, 0.0
  %v595 = vadd.f32 %v593, %v594
  %v596 = vrot.slane %v595, 4
  %v597 = vadd.f32 %v595, %v596
  %v598 = vrot.slane %v597, 2
  %v599 = vadd.f32 %v597, %v598
  %v600 = vrot.slane %v599, 1
  %v601 = vadd.f32 %v599, %v600
  %v602 = vsel %vm267, %v85, 0.0
  %v603 = vsel %vm269, %v86, 0.0
  %v604 = vadd.f32 %v602, %v603
  %v605 = vrot.slane %v604, 4
  %v606 = vadd.f32 %v604, %v605
  %v607 = vrot.slane %v606, 2
  %v608 = vadd.f32 %v606, %v607
  %v609 = vrot.slane %v608, 1
  %v610 = vadd.f32 %v608, %v609
  %v611 = vsel %vm267, %v87, 0.0
  %v612 = vsel %vm269, %v88, 0.0
  %v613 = vadd.f32 %v611, %v612
  %v614 = vrot.slane %v613, 4
  %v615 = vadd.f32 %v613, %v614
  %v616 = vrot.slane %v615, 2
  %v617 = vadd.f32 %v615, %v616
  %v618 = vrot.slane %v617, 1
  %v619 = vadd.f32 %v617, %v618
  %v620 = vsel %vm267, %v89, 0.0
  %v621 = vsel %vm269, %v90, 0.0
  %v622 = vadd.f32 %v620, %v621
  %v623 = vrot.slane %v622, 4
  %v624 = vadd.f32 %v622, %v623
  %v625 = vrot.slane %v624, 2
  %v626 = vadd.f32 %v624, %v625
  %v627 = vrot.slane %v626, 1
  %v628 = vadd.f32 %v626, %v627
  %v629 = vsel %vm267, %v91, 0.0
  %v630 = vsel %vm269, %v92, 0.0
  %v631 = vadd.f32 %v629, %v630
  %v632 = vrot.slane %v631, 4
  %v633 = vadd.f32 %v631, %v632
  %v634 = vrot.slane %v633, 2
  %v635 = vadd.f32 %v633, %v634
  %v636 = vrot.slane %v635, 1
  %v637 = vadd.f32 %v635, %v636
  %v638 = vsel %vm267, %v93, 0.0
  %v639 = vsel %vm269, %v94, 0.0
  %v640 = vadd.f32 %v638, %v639
  %v641 = vrot.slane %v640, 4
  %v642 = vadd.f32 %v640, %v641
  %v643 = vrot.slane %v642, 2
  %v644 = vadd.f32 %v642, %v643
  %v645 = vrot.slane %v644, 1
  %v646 = vadd.f32 %v644, %v645
  %v647 = vsel %vm267, %v95, 0.0
  %v648 = vsel %vm269, %v96, 0.0
  %v649 = vadd.f32 %v647, %v648
  %v650 = vrot.slane %v649, 4
  %v651 = vadd.f32 %v649, %v650
  %v652 = vrot.slane %v651, 2
  %v653 = vadd.f32 %v651, %v652
  %v654 = vrot.slane %v653, 1
  %v655 = vadd.f32 %v653, %v654
  %v656 = vsel %vm267, %v97, 0.0
  %v657 = vsel %vm269, %v98, 0.0
  %v658 = vadd.f32 %v656, %v657
  %v659 = vrot.slane %v658, 4
  %v660 = vadd.f32 %v658, %v659
  %v661 = vrot.slane %v660, 2
  %v662 = vadd.f32 %v660, %v661
  %v663 = vrot.slane %v662, 1
  %v664 = vadd.f32 %v662, %v663
  %v665 = vsel %vm267, %v99, 0.0
  %v666 = vsel %vm269, %v100, 0.0
  %v667 = vadd.f32 %v665, %v666
  %v668 = vrot.slane %v667, 4
  %v669 = vadd.f32 %v667, %v668
  %v670 = vrot.slane %v669, 2
  %v671 = vadd.f32 %v669, %v670
  %v672 = vrot.slane %v671, 1
  %v673 = vadd.f32 %v671, %v672
  %v674 = vsel %vm267, %v101, 0.0
  %v675 = vsel %vm269, %v102, 0.0
  %v676 = vadd.f32 %v674, %v675
  %v677 = vrot.slane %v676, 4
  %v678 = vadd.f32 %v676, %v677
  %v679 = vrot.slane %v678, 2
  %v680 = vadd.f32 %v678, %v679
  %v681 = vrot.slane %v680, 1
  %v682 = vadd.f32 %v680, %v681
  %v683 = vsel %vm267, %v103, 0.0
  %v684 = vsel %vm269, %v104, 0.0
  %v685 = vadd.f32 %v683, %v684
  %v686 = vrot.slane %v685, 4
  %v687 = vadd.f32 %v685, %v686
  %v688 = vrot.slane %v687, 2
  %v689 = vadd.f32 %v687, %v688
  %v690 = vrot.slane %v689, 1
  %v691 = vadd.f32 %v689, %v690
  %v692 = vsel %vm267, %v105, 0.0
  %v693 = vsel %vm269, %v106, 0.0
  %v694 = vadd.f32 %v692, %v693
  %v695 = vrot.slane %v694, 4
  %v696 = vadd.f32 %v694, %v695
  %v697 = vrot.slane %v696, 2
  %v698 = vadd.f32 %v696, %v697
  %v699 = vrot.slane %v698, 1
  %v700 = vadd.f32 %v698, %v699
  %v701 = vsel %vm267, %v107, 0.0
  %v702 = vsel %vm269, %v108, 0.0
  %v703 = vadd.f32 %v701, %v702
  %v704 = vrot.slane %v703, 4
  %v705 = vadd.f32 %v703, %v704
  %v706 = vrot.slane %v705, 2
  %v707 = vadd.f32 %v705, %v706
  %v708 = vrot.slane %v707, 1
  %v709 = vadd.f32 %v707, %v708
  %v710 = vsel %vm267, %v109, 0.0
  %v711 = vsel %vm269, %v110, 0.0
  %v712 = vadd.f32 %v710, %v711
  %v713 = vrot.slane %v712, 4
  %v714 = vadd.f32 %v712, %v713
  %v715 = vrot.slane %v714, 2
  %v716 = vadd.f32 %v714, %v715
  %v717 = vrot.slane %v716, 1
  %v718 = vadd.f32 %v716, %v717
  %v719 = vsel %vm267, %v111, 0.0
  %v720 = vsel %vm269, %v112, 0.0
  %v721 = vadd.f32 %v719, %v720
  %v722 = vrot.slane %v721, 4
  %v723 = vadd.f32 %v721, %v722
  %v724 = vrot.slane %v723, 2
  %v725 = vadd.f32 %v723, %v724
  %v726 = vrot.slane %v725, 1
  %v727 = vadd.f32 %v725, %v726
  %v728 = vsel %vm267, %v113, 0.0
  %v729 = vsel %vm269, %v114, 0.0
  %v730 = vadd.f32 %v728, %v729
  %v731 = vrot.slane %v730, 4
  %v732 = vadd.f32 %v730, %v731
  %v733 = vrot.slane %v732, 2
  %v734 = vadd.f32 %v732, %v733
  %v735 = vrot.slane %v734, 1
  %v736 = vadd.f32 %v734, %v735
  %v737 = vsel %vm267, %v115, 0.0
  %v738 = vsel %vm269, %v116, 0.0
  %v739 = vadd.f32 %v737, %v738
  %v740 = vrot.slane %v739, 4
  %v741 = vadd.f32 %v739, %v740
  %v742 = vrot.slane %v741, 2
  %v743 = vadd.f32 %v741, %v742
  %v744 = vrot.slane %v743, 1
  %v745 = vadd.f32 %v743, %v744
  %v746 = vsel %vm267, %v117, 0.0
  %v747 = vsel %vm269, %v118, 0.0
  %v748 = vadd.f32 %v746, %v747
  %v749 = vrot.slane %v748, 4
  %v750 = vadd.f32 %v748, %v749
  %v751 = vrot.slane %v750, 2
  %v752 = vadd.f32 %v750, %v751
  %v753 = vrot.slane %v752, 1
  %v754 = vadd.f32 %v752, %v753
  %v755 = vsel %vm267, %v119, 0.0
  %v756 = vsel %vm269, %v120, 0.0
  %v757 = vadd.f32 %v755, %v756
  %v758 = vrot.slane %v757, 4
  %v759 = vadd.f32 %v757, %v758
  %v760 = vrot.slane %v759, 2
  %v761 = vadd.f32 %v759, %v760
  %v762 = vrot.slane %v761, 1
  %v763 = vadd.f32 %v761, %v762
  %v764 = vsel %vm267, %v121, 0.0
  %v765 = vsel %vm269, %v122, 0.0
  %v766 = vadd.f32 %v764, %v765
  %v767 = vrot.slane %v766, 4
  %v768 = vadd.f32 %v766, %v767
  %v769 = vrot.slane %v768, 2
  %v770 = vadd.f32 %v768, %v769
  %v771 = vrot.slane %v770, 1
  %v772 = vadd.f32 %v770, %v771
  %v773 = vsel %vm267, %v123, 0.0
  %v774 = vsel %vm269, %v124, 0.0
  %v775 = vadd.f32 %v773, %v774
  %v776 = vrot.slane %v775, 4
  %v777 = vadd.f32 %v775, %v776
  %v778 = vrot.slane %v777, 2
  %v779 = vadd.f32 %v777, %v778
  %v780 = vrot.slane %v779, 1
  %v781 = vadd.f32 %v779, %v780
  %v782 = vsel %vm267, %v125, 0.0
  %v783 = vsel %vm269, %v126, 0.0
  %v784 = vadd.f32 %v782, %v783
  %v785 = vrot.slane %v784, 4
  %v786 = vadd.f32 %v784, %v785
  %v787 = vrot.slane %v786, 2
  %v788 = vadd.f32 %v786, %v787
  %v789 = vrot.slane %v788, 1
  %v790 = vadd.f32 %v788, %v789
  %v791 = vsel %vm267, %v127, 0.0
  %v792 = vsel %vm269, %v128, 0.0
  %v793 = vadd.f32 %v791, %v792
  %v794 = vrot.slane %v793, 4
  %v795 = vadd.f32 %v793, %v794
  %v796 = vrot.slane %v795, 2
  %v797 = vadd.f32 %v795, %v796
  %v798 = vrot.slane %v797, 1
  %v799 = vadd.f32 %v797, %v798
  %v800 = vsel %vm267, %v129, 0.0
  %v801 = vsel %vm269, %v130, 0.0
  %v802 = vadd.f32 %v800, %v801
  %v803 = vrot.slane %v802, 4
  %v804 = vadd.f32 %v802, %v803
  %v805 = vrot.slane %v804, 2
  %v806 = vadd.f32 %v804, %v805
  %v807 = vrot.slane %v806, 1
  %v808 = vadd.f32 %v806, %v807
  %v809 = vsel %vm267, %v131, 0.0
  %v810 = vsel %vm269, %v132, 0.0
  %v811 = vadd.f32 %v809, %v810
  %v812 = vrot.slane %v811, 4
  %v813 = vadd.f32 %v811, %v812
  %v814 = vrot.slane %v813, 2
  %v815 = vadd.f32 %v813, %v814
  %v816 = vrot.slane %v815, 1
  %v817 = vadd.f32 %v815, %v816
  %v818 = vsel %vm267, %v133, 0.0
  %v819 = vsel %vm269, %v134, 0.0
  %v820 = vadd.f32 %v818, %v819
  %v821 = vrot.slane %v820, 4
  %v822 = vadd.f32 %v820, %v821
  %v823 = vrot.slane %v822, 2
  %v824 = vadd.f32 %v822, %v823
  %v825 = vrot.slane %v824, 1
  %v826 = vadd.f32 %v824, %v825
  %v827 = vsel %vm267, %v135, 0.0
  %v828 = vsel %vm269, %v136, 0.0
  %v829 = vadd.f32 %v827, %v828
  %v830 = vrot.slane %v829, 4
  %v831 = vadd.f32 %v829, %v830
  %v832 = vrot.slane %v831, 2
  %v833 = vadd.f32 %v831, %v832
  %v834 = vrot.slane %v833, 1
  %v835 = vadd.f32 %v833, %v834
  %v836 = vsel %vm267, %v137, 0.0
  %v837 = vsel %vm269, %v138, 0.0
  %v838 = vadd.f32 %v836, %v837
  %v839 = vrot.slane %v838, 4
  %v840 = vadd.f32 %v838, %v839
  %v841 = vrot.slane %v840, 2
  %v842 = vadd.f32 %v840, %v841
  %v843 = vrot.slane %v842, 1
  %v844 = vadd.f32 %v842, %v843
  %v845 = vsel %vm267, %v139, 0.0
  %v846 = vsel %vm269, %v140, 0.0
  %v847 = vadd.f32 %v845, %v846
  %v848 = vrot.slane %v847, 4
  %v849 = vadd.f32 %v847, %v848
  %v850 = vrot.slane %v849, 2
  %v851 = vadd.f32 %v849, %v850
  %v852 = vrot.slane %v851, 1
  %v853 = vadd.f32 %v851, %v852
  %v854 = vsel %vm267, %v141, 0.0
  %v855 = vsel %vm269, %v142, 0.0
  %v856 = vadd.f32 %v854, %v855
  %v857 = vrot.slane %v856, 4
  %v858 = vadd.f32 %v856, %v857
  %v859 = vrot.slane %v858, 2
  %v860 = vadd.f32 %v858, %v859
  %v861 = vrot.slane %v860, 1
  %v862 = vadd.f32 %v860, %v861
  %v863 = vsel %vm267, %v143, 0.0
  %v864 = vsel %vm269, %v144, 0.0
  %v865 = vadd.f32 %v863, %v864
  %v866 = vrot.slane %v865, 4
  %v867 = vadd.f32 %v865, %v866
  %v868 = vrot.slane %v867, 2
  %v869 = vadd.f32 %v867, %v868
  %v870 = vrot.slane %v869, 1
  %v871 = vadd.f32 %v869, %v870
  %v872 = vsel %vm267, %v145, 0.0
  %v873 = vsel %vm269, %v146, 0.0
  %v874 = vadd.f32 %v872, %v873
  %v875 = vrot.slane %v874, 4
  %v876 = vadd.f32 %v874, %v875
  %v877 = vrot.slane %v876, 2
  %v878 = vadd.f32 %v876, %v877
  %v879 = vrot.slane %v878, 1
  %v880 = vadd.f32 %v878, %v879
  %v881 = vsel %vm267, %v147, 0.0
  %v882 = vsel %vm269, %v148, 0.0
  %v883 = vadd.f32 %v881, %v882
  %v884 = vrot.slane %v883, 4
  %v885 = vadd.f32 %v883, %v884
  %v886 = vrot.slane %v885, 2
  %v887 = vadd.f32 %v885, %v886
  %v888 = vrot.slane %v887, 1
  %v889 = vadd.f32 %v887, %v888
  %v890 = vsel %vm267, %v149, 0.0
  %v891 = vsel %vm269, %v150, 0.0
  %v892 = vadd.f32 %v890, %v891
  %v893 = vrot.slane %v892, 4
  %v894 = vadd.f32 %v892, %v893
  %v895 = vrot.slane %v894, 2
  %v896 = vadd.f32 %v894, %v895
  %v897 = vrot.slane %v896, 1
  %v898 = vadd.f32 %v896, %v897
  %v899 = vsel %vm267, %v151, 0.0
  %v900 = vsel %vm269, %v152, 0.0
  %v901 = vadd.f32 %v899, %v900
  %v902 = vrot.slane %v901, 4
  %v903 = vadd.f32 %v901, %v902
  %v904 = vrot.slane %v903, 2
  %v905 = vadd.f32 %v903, %v904
  %v906 = vrot.slane %v905, 1
  %v907 = vadd.f32 %v905, %v906
  %v908 = vsel %vm267, %v153, 0.0
  %v909 = vsel %vm269, %v154, 0.0
  %v910 = vadd.f32 %v908, %v909
  %v911 = vrot.slane %v910, 4
  %v912 = vadd.f32 %v910, %v911
  %v913 = vrot.slane %v912, 2
  %v914 = vadd.f32 %v912, %v913
  %v915 = vrot.slane %v914, 1
  %v916 = vadd.f32 %v914, %v915
  %v917 = vsel %vm267, %v155, 0.0
  %v918 = vsel %vm269, %v156, 0.0
  %v919 = vadd.f32 %v917, %v918
  %v920 = vrot.slane %v919, 4
  %v921 = vadd.f32 %v919, %v920
  %v922 = vrot.slane %v921, 2
  %v923 = vadd.f32 %v921, %v922
  %v924 = vrot.slane %v923, 1
  %v925 = vadd.f32 %v923, %v924
  %v926 = vsel %vm267, %v157, 0.0
  %v927 = vsel %vm269, %v158, 0.0
  %v928 = vadd.f32 %v926, %v927
  %v929 = vrot.slane %v928, 4
  %v930 = vadd.f32 %v928, %v929
  %v931 = vrot.slane %v930, 2
  %v932 = vadd.f32 %v930, %v931
  %v933 = vrot.slane %v932, 1
  %v934 = vadd.f32 %v932, %v933
  %v935 = vsel %vm267, %v159, 0.0
  %v936 = vsel %vm269, %v160, 0.0
  %v937 = vadd.f32 %v935, %v936
  %v938 = vrot.slane %v937, 4
  %v939 = vadd.f32 %v937, %v938
  %v940 = vrot.slane %v939, 2
  %v941 = vadd.f32 %v939, %v940
  %v942 = vrot.slane %v941, 1
  %v943 = vadd.f32 %v941, %v942
  %v944 = vsel %vm267, %v161, 0.0
  %v945 = vsel %vm269, %v162, 0.0
  %v946 = vadd.f32 %v944, %v945
  %v947 = vrot.slane %v946, 4
  %v948 = vadd.f32 %v946, %v947
  %v949 = vrot.slane %v948, 2
  %v950 = vadd.f32 %v948, %v949
  %v951 = vrot.slane %v950, 1
  %v952 = vadd.f32 %v950, %v951
  %v953 = vsel %vm267, %v163, 0.0
  %v954 = vsel %vm269, %v164, 0.0
  %v955 = vadd.f32 %v953, %v954
  %v956 = vrot.slane %v955, 4
  %v957 = vadd.f32 %v955, %v956
  %v958 = vrot.slane %v957, 2
  %v959 = vadd.f32 %v957, %v958
  %v960 = vrot.slane %v959, 1
  %v961 = vadd.f32 %v959, %v960
  %v962 = vsel %vm267, %v165, 0.0
  %v963 = vsel %vm269, %v166, 0.0
  %v964 = vadd.f32 %v962, %v963
  %v965 = vrot.slane %v964, 4
  %v966 = vadd.f32 %v964, %v965
  %v967 = vrot.slane %v966, 2
  %v968 = vadd.f32 %v966, %v967
  %v969 = vrot.slane %v968, 1
  %v970 = vadd.f32 %v968, %v969
  %v971 = vsel %vm267, %v167, 0.0
  %v972 = vsel %vm269, %v168, 0.0
  %v973 = vadd.f32 %v971, %v972
  %v974 = vrot.slane %v973, 4
  %v975 = vadd.f32 %v973, %v974
  %v976 = vrot.slane %v975, 2
  %v977 = vadd.f32 %v975, %v976
  %v978 = vrot.slane %v977, 1
  %v979 = vadd.f32 %v977, %v978
  %v980 = vsel %vm267, %v169, 0.0
  %v981 = vsel %vm269, %v170, 0.0
  %v982 = vadd.f32 %v980, %v981
  %v983 = vrot.slane %v982, 4
  %v984 = vadd.f32 %v982, %v983
  %v985 = vrot.slane %v984, 2
  %v986 = vadd.f32 %v984, %v985
  %v987 = vrot.slane %v986, 1
  %v988 = vadd.f32 %v986, %v987
  %v989 = vsel %vm267, %v171, 0.0
  %v990 = vsel %vm269, %v172, 0.0
  %v991 = vadd.f32 %v989, %v990
  %v992 = vrot.slane %v991, 4
  %v993 = vadd.f32 %v991, %v992
  %v994 = vrot.slane %v993, 2
  %v995 = vadd.f32 %v993, %v994
  %v996 = vrot.slane %v995, 1
  %v997 = vadd.f32 %v995, %v996
  %v998 = vsel %vm267, %v173, 0.0
  %v999 = vsel %vm269, %v174, 0.0
  %v1000 = vadd.f32 %v998, %v999
  %v1001 = vrot.slane %v1000, 4
  %v1002 = vadd.f32 %v1000, %v1001
  %v1003 = vrot.slane %v1002, 2
  %v1004 = vadd.f32 %v1002, %v1003
  %v1005 = vrot.slane %v1004, 1
  %v1006 = vadd.f32 %v1004, %v1005
  %v1007 = vsel %vm267, %v175, 0.0
  %v1008 = vsel %vm269, %v176, 0.0
  %v1009 = vadd.f32 %v1007, %v1008
  %v1010 = vrot.slane %v1009, 4
  %v1011 = vadd.f32 %v1009, %v1010
  %v1012 = vrot.slane %v1011, 2
  %v1013 = vadd.f32 %v1011, %v1012
  %v1014 = vrot.slane %v1013, 1
  %v1015 = vadd.f32 %v1013, %v1014
  %v1016 = vsel %vm267, %v177, 0.0
  %v1017 = vsel %vm269, %v178, 0.0
  %v1018 = vadd.f32 %v1016, %v1017
  %v1019 = vrot.slane %v1018, 4
  %v1020 = vadd.f32 %v1018, %v1019
  %v1021 = vrot.slane %v1020, 2
  %v1022 = vadd.f32 %v1020, %v1021
  %v1023 = vrot.slane %v1022, 1
  %v1024 = vadd.f32 %v1022, %v1023
  %v1025 = vsel %vm267, %v179, 0.0
  %v1026 = vsel %vm269, %v180, 0.0
  %v1027 = vadd.f32 %v1025, %v1026
  %v1028 = vrot.slane %v1027, 4
  %v1029 = vadd.f32 %v1027, %v1028
  %v1030 = vrot.slane %v1029, 2
  %v1031 = vadd.f32 %v1029, %v1030
  %v1032 = vrot.slane %v1031, 1
  %v1033 = vadd.f32 %v1031, %v1032
  %v1034 = vsel %vm267, %v181, 0.0
  %v1035 = vsel %vm269, %v182, 0.0
  %v1036 = vadd.f32 %v1034, %v1035
  %v1037 = vrot.slane %v1036, 4
  %v1038 = vadd.f32 %v1036, %v1037
  %v1039 = vrot.slane %v1038, 2
  %v1040 = vadd.f32 %v1038, %v1039
  %v1041 = vrot.slane %v1040, 1
  %v1042 = vadd.f32 %v1040, %v1041
  %v1043 = vsel %vm267, %v183, 0.0
  %v1044 = vsel %vm269, %v184, 0.0
  %v1045 = vadd.f32 %v1043, %v1044
  %v1046 = vrot.slane %v1045, 4
  %v1047 = vadd.f32 %v1045, %v1046
  %v1048 = vrot.slane %v1047, 2
  %v1049 = vadd.f32 %v1047, %v1048
  %v1050 = vrot.slane %v1049, 1
  %v1051 = vadd.f32 %v1049, %v1050
  %v1052 = vsel %vm267, %v185, 0.0
  %v1053 = vsel %vm269, %v186, 0.0
  %v1054 = vadd.f32 %v1052, %v1053
  %v1055 = vrot.slane %v1054, 4
  %v1056 = vadd.f32 %v1054, %v1055
  %v1057 = vrot.slane %v1056, 2
  %v1058 = vadd.f32 %v1056, %v1057
  %v1059 = vrot.slane %v1058, 1
  %v1060 = vadd.f32 %v1058, %v1059
  %v1061 = vsel %vm267, %v187, 0.0
  %v1062 = vsel %vm269, %v188, 0.0
  %v1063 = vadd.f32 %v1061, %v1062
  %v1064 = vrot.slane %v1063, 4
  %v1065 = vadd.f32 %v1063, %v1064
  %v1066 = vrot.slane %v1065, 2
  %v1067 = vadd.f32 %v1065, %v1066
  %v1068 = vrot.slane %v1067, 1
  %v1069 = vadd.f32 %v1067, %v1068
  %v1070 = vsel %vm267, %v189, 0.0
  %v1071 = vsel %vm269, %v190, 0.0
  %v1072 = vadd.f32 %v1070, %v1071
  %v1073 = vrot.slane %v1072, 4
  %v1074 = vadd.f32 %v1072, %v1073
  %v1075 = vrot.slane %v1074, 2
  %v1076 = vadd.f32 %v1074, %v1075
  %v1077 = vrot.slane %v1076, 1
  %v1078 = vadd.f32 %v1076, %v1077
  %v1079 = vsel %vm267, %v191, 0.0
  %v1080 = vsel %vm269, %v192, 0.0
  %v1081 = vadd.f32 %v1079, %v1080
  %v1082 = vrot.slane %v1081, 4
  %v1083 = vadd.f32 %v1081, %v1082
  %v1084 = vrot.slane %v1083, 2
  %v1085 = vadd.f32 %v1083, %v1084
  %v1086 = vrot.slane %v1085, 1
  %v1087 = vadd.f32 %v1085, %v1086
  %v1088 = vsel %vm267, %v193, 0.0
  %v1089 = vsel %vm269, %v194, 0.0
  %v1090 = vadd.f32 %v1088, %v1089
  %v1091 = vrot.slane %v1090, 4
  %v1092 = vadd.f32 %v1090, %v1091
  %v1093 = vrot.slane %v1092, 2
  %v1094 = vadd.f32 %v1092, %v1093
  %v1095 = vrot.slane %v1094, 1
  %v1096 = vadd.f32 %v1094, %v1095
  %v1097 = vsel %vm267, %v195, 0.0
  %v1098 = vsel %vm269, %v196, 0.0
  %v1099 = vadd.f32 %v1097, %v1098
  %v1100 = vrot.slane %v1099, 4
  %v1101 = vadd.f32 %v1099, %v1100
  %v1102 = vrot.slane %v1101, 2
  %v1103 = vadd.f32 %v1101, %v1102
  %v1104 = vrot.slane %v1103, 1
  %v1105 = vadd.f32 %v1103, %v1104
  %v1106 = vsel %vm267, %v197, 0.0
  %v1107 = vsel %vm269, %v198, 0.0
  %v1108 = vadd.f32 %v1106, %v1107
  %v1109 = vrot.slane %v1108, 4
  %v1110 = vadd.f32 %v1108, %v1109
  %v1111 = vrot.slane %v1110, 2
  %v1112 = vadd.f32 %v1110, %v1111
  %v1113 = vrot.slane %v1112, 1
  %v1114 = vadd.f32 %v1112, %v1113
  %v1115 = vsel %vm267, %v199, 0.0
  %v1116 = vsel %vm269, %v200, 0.0
  %v1117 = vadd.f32 %v1115, %v1116
  %v1118 = vrot.slane %v1117, 4
  %v1119 = vadd.f32 %v1117, %v1118
  %v1120 = vrot.slane %v1119, 2
  %v1121 = vadd.f32 %v1119, %v1120
  %v1122 = vrot.slane %v1121, 1
  %v1123 = vadd.f32 %v1121, %v1122
  %v1124 = vsel %vm267, %v201, 0.0
  %v1125 = vsel %vm269, %v202, 0.0
  %v1126 = vadd.f32 %v1124, %v1125
  %v1127 = vrot.slane %v1126, 4
  %v1128 = vadd.f32 %v1126, %v1127
  %v1129 = vrot.slane %v1128, 2
  %v1130 = vadd.f32 %v1128, %v1129
  %v1131 = vrot.slane %v1130, 1
  %v1132 = vadd.f32 %v1130, %v1131
  %v1133 = vsel %vm267, %v203, 0.0
  %v1134 = vsel %vm269, %v204, 0.0
  %v1135 = vadd.f32 %v1133, %v1134
  %v1136 = vrot.slane %v1135, 4
  %v1137 = vadd.f32 %v1135, %v1136
  %v1138 = vrot.slane %v1137, 2
  %v1139 = vadd.f32 %v1137, %v1138
  %v1140 = vrot.slane %v1139, 1
  %v1141 = vadd.f32 %v1139, %v1140
  %v1142 = vsel %vm267, %v205, 0.0
  %v1143 = vsel %vm269, %v206, 0.0
  %v1144 = vadd.f32 %v1142, %v1143
  %v1145 = vrot.slane %v1144, 4
  %v1146 = vadd.f32 %v1144, %v1145
  %v1147 = vrot.slane %v1146, 2
  %v1148 = vadd.f32 %v1146, %v1147
  %v1149 = vrot.slane %v1148, 1
  %v1150 = vadd.f32 %v1148, %v1149
  %v1151 = vsel %vm267, %v207, 0.0
  %v1152 = vsel %vm269, %v208, 0.0
  %v1153 = vadd.f32 %v1151, %v1152
  %v1154 = vrot.slane %v1153, 4
  %v1155 = vadd.f32 %v1153, %v1154
  %v1156 = vrot.slane %v1155, 2
  %v1157 = vadd.f32 %v1155, %v1156
  %v1158 = vrot.slane %v1157, 1
  %v1159 = vadd.f32 %v1157, %v1158
  %v1160 = vsel %vm267, %v209, 0.0
  %v1161 = vsel %vm269, %v210, 0.0
  %v1162 = vadd.f32 %v1160, %v1161
  %v1163 = vrot.slane %v1162, 4
  %v1164 = vadd.f32 %v1162, %v1163
  %v1165 = vrot.slane %v1164, 2
  %v1166 = vadd.f32 %v1164, %v1165
  %v1167 = vrot.slane %v1166, 1
  %v1168 = vadd.f32 %v1166, %v1167
  %v1169 = vsel %vm267, %v211, 0.0
  %v1170 = vsel %vm269, %v212, 0.0
  %v1171 = vadd.f32 %v1169, %v1170
  %v1172 = vrot.slane %v1171, 4
  %v1173 = vadd.f32 %v1171, %v1172
  %v1174 = vrot.slane %v1173, 2
  %v1175 = vadd.f32 %v1173, %v1174
  %v1176 = vrot.slane %v1175, 1
  %v1177 = vadd.f32 %v1175, %v1176
  %v1178 = vsel %vm267, %v213, 0.0
  %v1179 = vsel %vm269, %v214, 0.0
  %v1180 = vadd.f32 %v1178, %v1179
  %v1181 = vrot.slane %v1180, 4
  %v1182 = vadd.f32 %v1180, %v1181
  %v1183 = vrot.slane %v1182, 2
  %v1184 = vadd.f32 %v1182, %v1183
  %v1185 = vrot.slane %v1184, 1
  %v1186 = vadd.f32 %v1184, %v1185
  %v1187 = vsel %vm267, %v215, 0.0
  %v1188 = vsel %vm269, %v216, 0.0
  %v1189 = vadd.f32 %v1187, %v1188
  %v1190 = vrot.slane %v1189, 4
  %v1191 = vadd.f32 %v1189, %v1190
  %v1192 = vrot.slane %v1191, 2
  %v1193 = vadd.f32 %v1191, %v1192
  %v1194 = vrot.slane %v1193, 1
  %v1195 = vadd.f32 %v1193, %v1194
  %v1196 = vsel %vm267, %v217, 0.0
  %v1197 = vsel %vm269, %v218, 0.0
  %v1198 = vadd.f32 %v1196, %v1197
  %v1199 = vrot.slane %v1198, 4
  %v1200 = vadd.f32 %v1198, %v1199
  %v1201 = vrot.slane %v1200, 2
  %v1202 = vadd.f32 %v1200, %v1201
  %v1203 = vrot.slane %v1202, 1
  %v1204 = vadd.f32 %v1202, %v1203
  %v1205 = vsel %vm267, %v219, 0.0
  %v1206 = vsel %vm269, %v220, 0.0
  %v1207 = vadd.f32 %v1205, %v1206
  %v1208 = vrot.slane %v1207, 4
  %v1209 = vadd.f32 %v1207, %v1208
  %v1210 = vrot.slane %v1209, 2
  %v1211 = vadd.f32 %v1209, %v1210
  %v1212 = vrot.slane %v1211, 1
  %v1213 = vadd.f32 %v1211, %v1212
  %v1214 = vsel %vm267, %v221, 0.0
  %v1215 = vsel %vm269, %v222, 0.0
  %v1216 = vadd.f32 %v1214, %v1215
  %v1217 = vrot.slane %v1216, 4
  %v1218 = vadd.f32 %v1216, %v1217
  %v1219 = vrot.slane %v1218, 2
  %v1220 = vadd.f32 %v1218, %v1219
  %v1221 = vrot.slane %v1220, 1
  %v1222 = vadd.f32 %v1220, %v1221
  %v1223 = vsel %vm267, %v223, 0.0
  %v1224 = vsel %vm269, %v224, 0.0
  %v1225 = vadd.f32 %v1223, %v1224
  %v1226 = vrot.slane %v1225, 4
  %v1227 = vadd.f32 %v1225, %v1226
  %v1228 = vrot.slane %v1227, 2
  %v1229 = vadd.f32 %v1227, %v1228
  %v1230 = vrot.slane %v1229, 1
  %v1231 = vadd.f32 %v1229, %v1230
  %v1232 = vsel %vm267, %v225, 0.0
  %v1233 = vsel %vm269, %v226, 0.0
  %v1234 = vadd.f32 %v1232, %v1233
  %v1235 = vrot.slane %v1234, 4
  %v1236 = vadd.f32 %v1234, %v1235
  %v1237 = vrot.slane %v1236, 2
  %v1238 = vadd.f32 %v1236, %v1237
  %v1239 = vrot.slane %v1238, 1
  %v1240 = vadd.f32 %v1238, %v1239
  %v1241 = vsel %vm267, %v227, 0.0
  %v1242 = vsel %vm269, %v228, 0.0
  %v1243 = vadd.f32 %v1241, %v1242
  %v1244 = vrot.slane %v1243, 4
  %v1245 = vadd.f32 %v1243, %v1244
  %v1246 = vrot.slane %v1245, 2
  %v1247 = vadd.f32 %v1245, %v1246
  %v1248 = vrot.slane %v1247, 1
  %v1249 = vadd.f32 %v1247, %v1248
  %v1250 = vsel %vm267, %v229, 0.0
  %v1251 = vsel %vm269, %v230, 0.0
  %v1252 = vadd.f32 %v1250, %v1251
  %v1253 = vrot.slane %v1252, 4
  %v1254 = vadd.f32 %v1252, %v1253
  %v1255 = vrot.slane %v1254, 2
  %v1256 = vadd.f32 %v1254, %v1255
  %v1257 = vrot.slane %v1256, 1
  %v1258 = vadd.f32 %v1256, %v1257
  %v1259 = vsel %vm267, %v231, 0.0
  %v1260 = vsel %vm269, %v232, 0.0
  %v1261 = vadd.f32 %v1259, %v1260
  %v1262 = vrot.slane %v1261, 4
  %v1263 = vadd.f32 %v1261, %v1262
  %v1264 = vrot.slane %v1263, 2
  %v1265 = vadd.f32 %v1263, %v1264
  %v1266 = vrot.slane %v1265, 1
  %v1267 = vadd.f32 %v1265, %v1266
  %v1268 = vsel %vm267, %v233, 0.0
  %v1269 = vsel %vm269, %v234, 0.0
  %v1270 = vadd.f32 %v1268, %v1269
  %v1271 = vrot.slane %v1270, 4
  %v1272 = vadd.f32 %v1270, %v1271
  %v1273 = vrot.slane %v1272, 2
  %v1274 = vadd.f32 %v1272, %v1273
  %v1275 = vrot.slane %v1274, 1
  %v1276 = vadd.f32 %v1274, %v1275
  %v1277 = vsel %vm267, %v235, 0.0
  %v1278 = vsel %vm269, %v236, 0.0
  %v1279 = vadd.f32 %v1277, %v1278
  %v1280 = vrot.slane %v1279, 4
  %v1281 = vadd.f32 %v1279, %v1280
  %v1282 = vrot.slane %v1281, 2
  %v1283 = vadd.f32 %v1281, %v1282
  %v1284 = vrot.slane %v1283, 1
  %v1285 = vadd.f32 %v1283, %v1284
  %v1286 = vsel %vm267, %v237, 0.0
  %v1287 = vsel %vm269, %v238, 0.0
  %v1288 = vadd.f32 %v1286, %v1287
  %v1289 = vrot.slane %v1288, 4
  %v1290 = vadd.f32 %v1288, %v1289
  %v1291 = vrot.slane %v1290, 2
  %v1292 = vadd.f32 %v1290, %v1291
  %v1293 = vrot.slane %v1292, 1
  %v1294 = vadd.f32 %v1292, %v1293
  %v1295 = vsel %vm267, %v239, 0.0
  %v1296 = vsel %vm269, %v240, 0.0
  %v1297 = vadd.f32 %v1295, %v1296
  %v1298 = vrot.slane %v1297, 4
  %v1299 = vadd.f32 %v1297, %v1298
  %v1300 = vrot.slane %v1299, 2
  %v1301 = vadd.f32 %v1299, %v1300
  %v1302 = vrot.slane %v1301, 1
  %v1303 = vadd.f32 %v1301, %v1302
  %v1304 = vsel %vm267, %v241, 0.0
  %v1305 = vsel %vm269, %v242, 0.0
  %v1306 = vadd.f32 %v1304, %v1305
  %v1307 = vrot.slane %v1306, 4
  %v1308 = vadd.f32 %v1306, %v1307
  %v1309 = vrot.slane %v1308, 2
  %v1310 = vadd.f32 %v1308, %v1309
  %v1311 = vrot.slane %v1310, 1
  %v1312 = vadd.f32 %v1310, %v1311
  %v1313 = vsel %vm267, %v243, 0.0
  %v1314 = vsel %vm269, %v244, 0.0
  %v1315 = vadd.f32 %v1313, %v1314
  %v1316 = vrot.slane %v1315, 4
  %v1317 = vadd.f32 %v1315, %v1316
  %v1318 = vrot.slane %v1317, 2
  %v1319 = vadd.f32 %v1317, %v1318
  %v1320 = vrot.slane %v1319, 1
  %v1321 = vadd.f32 %v1319, %v1320
  %v1322 = vsel %vm267, %v245, 0.0
  %v1323 = vsel %vm269, %v246, 0.0
  %v1324 = vadd.f32 %v1322, %v1323
  %v1325 = vrot.slane %v1324, 4
  %v1326 = vadd.f32 %v1324, %v1325
  %v1327 = vrot.slane %v1326, 2
  %v1328 = vadd.f32 %v1326, %v1327
  %v1329 = vrot.slane %v1328, 1
  %v1330 = vadd.f32 %v1328, %v1329
  %v1331 = vsel %vm267, %v247, 0.0
  %v1332 = vsel %vm269, %v248, 0.0
  %v1333 = vadd.f32 %v1331, %v1332
  %v1334 = vrot.slane %v1333, 4
  %v1335 = vadd.f32 %v1333, %v1334
  %v1336 = vrot.slane %v1335, 2
  %v1337 = vadd.f32 %v1335, %v1336
  %v1338 = vrot.slane %v1337, 1
  %v1339 = vadd.f32 %v1337, %v1338
  %v1340 = vsel %vm267, %v249, 0.0
  %v1341 = vsel %vm269, %v250, 0.0
  %v1342 = vadd.f32 %v1340, %v1341
  %v1343 = vrot.slane %v1342, 4
  %v1344 = vadd.f32 %v1342, %v1343
  %v1345 = vrot.slane %v1344, 2
  %v1346 = vadd.f32 %v1344, %v1345
  %v1347 = vrot.slane %v1346, 1
  %v1348 = vadd.f32 %v1346, %v1347
  %v1349 = vsel %vm267, %v251, 0.0
  %v1350 = vsel %vm269, %v252, 0.0
  %v1351 = vadd.f32 %v1349, %v1350
  %v1352 = vrot.slane %v1351, 4
  %v1353 = vadd.f32 %v1351, %v1352
  %v1354 = vrot.slane %v1353, 2
  %v1355 = vadd.f32 %v1353, %v1354
  %v1356 = vrot.slane %v1355, 1
  %v1357 = vadd.f32 %v1355, %v1356
  %v1358 = vsel %vm267, %v253, 0.0
  %v1359 = vsel %vm269, %v254, 0.0
  %v1360 = vadd.f32 %v1358, %v1359
  %v1361 = vrot.slane %v1360, 4
  %v1362 = vadd.f32 %v1360, %v1361
  %v1363 = vrot.slane %v1362, 2
  %v1364 = vadd.f32 %v1362, %v1363
  %v1365 = vrot.slane %v1364, 1
  %v1366 = vadd.f32 %v1364, %v1365
  %v1367 = vsel %vm267, %v255, 0.0
  %v1368 = vsel %vm269, %v256, 0.0
  %v1369 = vadd.f32 %v1367, %v1368
  %v1370 = vrot.slane %v1369, 4
  %v1371 = vadd.f32 %v1369, %v1370
  %v1372 = vrot.slane %v1371, 2
  %v1373 = vadd.f32 %v1371, %v1372
  %v1374 = vrot.slane %v1373, 1
  %v1375 = vadd.f32 %v1373, %v1374
  %v1376 = vsel %vm267, %v257, 0.0
  %v1377 = vsel %vm269, %v258, 0.0
  %v1378 = vadd.f32 %v1376, %v1377
  %v1379 = vrot.slane %v1378, 4
  %v1380 = vadd.f32 %v1378, %v1379
  %v1381 = vrot.slane %v1380, 2
  %v1382 = vadd.f32 %v1380, %v1381
  %v1383 = vrot.slane %v1382, 1
  %v1384 = vadd.f32 %v1382, %v1383
  %v1385 = vsel %vm267, %v259, 0.0
  %v1386 = vsel %vm269, %v260, 0.0
  %v1387 = vadd.f32 %v1385, %v1386
  %v1388 = vrot.slane %v1387, 4
  %v1389 = vadd.f32 %v1387, %v1388
  %v1390 = vrot.slane %v1389, 2
  %v1391 = vadd.f32 %v1389, %v1390
  %v1392 = vrot.slane %v1391, 1
  %v1393 = vadd.f32 %v1391, %v1392
  %v1394 = vsel %vm267, %v261, 0.0
  %v1395 = vsel %vm269, %v262, 0.0
  %v1396 = vadd.f32 %v1394, %v1395
  %v1397 = vrot.slane %v1396, 4
  %v1398 = vadd.f32 %v1396, %v1397
  %v1399 = vrot.slane %v1398, 2
  %v1400 = vadd.f32 %v1398, %v1399
  %v1401 = vrot.slane %v1400, 1
  %v1402 = vadd.f32 %v1400, %v1401
  %v1403 = vsel %vm267, %v263, 0.0
  %v1404 = vsel %vm269, %v264, 0.0
  %v1405 = vadd.f32 %v1403, %v1404
  %v1406 = vrot.slane %v1405, 4
  %v1407 = vadd.f32 %v1405, %v1406
  %v1408 = vrot.slane %v1407, 2
  %v1409 = vadd.f32 %v1407, %v1408
  %v1410 = vrot.slane %v1409, 1
  %v1411 = vadd.f32 %v1409, %v1410
  %v1412 = vsel %vm267, %v265, 0.0
  %v1413 = vsel %vm269, %v266, 0.0
  %v1414 = vadd.f32 %v1412, %v1413
  %v1415 = vrot.slane %v1414, 4
  %v1416 = vadd.f32 %v1414, %v1415
  %v1417 = vrot.slane %v1416, 2
  %v1418 = vadd.f32 %v1416, %v1417
  %v1419 = vrot.slane %v1418, 1
  %v1420 = vadd.f32 %v1418, %v1419
  %v1421 = vld [vmem:[%s1] sm:$0xff]
  %v1422 = vld [vmem:[%s1 + $0x8] sm:$0xff]
  %v1423 = vld [vmem:[%s1 + $0x10] sm:$0xff]
  %v1424 = vld [vmem:[%s1 + $0x18] sm:$0xff]
  %v1425 = vld [vmem:[%s1 + $0x20] sm:$0xff]
  %v1426 = vld [vmem:[%s1 + $0x28] sm:$0xff]
  %v1427 = vld [vmem:[%s1 + $0x30] sm:$0xff]
  %v1428 = vld [vmem:[%s1 + $0x38] sm:$0xff]
  %v1429 = vld [vmem:[%s1 + $0x40] sm:$0xff]
  %v1430 = vld [vmem:[%s1 + $0x48] sm:$0xff]
  %v1431 = vld [vmem:[%s1 + $0x50] sm:$0xff]
  %v1432 = vld [vmem:[%s1 + $0x58] sm:$0xff]
  %v1433 = vld [vmem:[%s1 + $0x60] sm:$0xff]
  %v1434 = vld [vmem:[%s1 + $0x68] sm:$0xff]
  %v1435 = vld [vmem:[%s1 + $0x70] sm:$0xff]
  %v1436 = vld [vmem:[%s1 + $0x78] sm:$0xff]
  %1438 = vset.pattern.permute.xlu0 0
  %1439 = vperm.xlu0 %1438, %v1421
  %v1440 = vpop.permute.xlu0 %1439
  %1442 = vset.pattern.permute.xlu0 0
  %1443 = vperm.xlu0 %1442, %v1422
  %v1444 = vpop.permute.xlu0 %1443
  %1446 = vset.pattern.permute.xlu0 0
  %1447 = vperm.xlu0 %1446, %v1423
  %v1448 = vpop.permute.xlu0 %1447
  %1450 = vset.pattern.permute.xlu0 0
  %1451 = vperm.xlu0 %1450, %v1424
  %v1452 = vpop.permute.xlu0 %1451
  %1454 = vset.pattern.permute.xlu0 0
  %1455 = vperm.xlu0 %1454, %v1425
  %v1456 = vpop.permute.xlu0 %1455
  %1458 = vset.pattern.permute.xlu0 0
  %1459 = vperm.xlu0 %1458, %v1426
  %v1460 = vpop.permute.xlu0 %1459
  %1462 = vset.pattern.permute.xlu0 0
  %1463 = vperm.xlu0 %1462, %v1427
  %v1464 = vpop.permute.xlu0 %1463
  %1466 = vset.pattern.permute.xlu0 0
  %1467 = vperm.xlu0 %1466, %v1428
  %v1468 = vpop.permute.xlu0 %1467
  %1470 = vset.pattern.permute.xlu0 0
  %1471 = vperm.xlu0 %1470, %v1429
  %v1472 = vpop.permute.xlu0 %1471
  %1474 = vset.pattern.permute.xlu0 0
  %1475 = vperm.xlu0 %1474, %v1430
  %v1476 = vpop.permute.xlu0 %1475
  %1478 = vset.pattern.permute.xlu0 0
  %1479 = vperm.xlu0 %1478, %v1431
  %v1480 = vpop.permute.xlu0 %1479
  %1482 = vset.pattern.permute.xlu0 0
  %1483 = vperm.xlu0 %1482, %v1432
  %v1484 = vpop.permute.xlu0 %1483
  %1486 = vset.pattern.permute.xlu0 0
  %1487 = vperm.xlu0 %1486, %v1433
  %v1488 = vpop.permute.xlu0 %1487
  %1490 = vset.pattern.permute.xlu0 0
  %1491 = vperm.xlu0 %1490, %v1434
  %v1492 = vpop.permute.xlu0 %1491
  %1494 = vset.pattern.permute.xlu0 0
  %1495 = vperm.xlu0 %1494, %v1435
  %v1496 = vpop.permute.xlu0 %1495
  %1498 = vset.pattern.permute.xlu0 0
  %1499 = vperm.xlu0 %1498, %v1436
  %v1500 = vpop.permute.xlu0 %1499
  %v1501 = vrot.slane %v1440, 1
  %v1502 = vrot.slane %v1440, 2
  %v1503 = vrot.slane %v1440, 3
  %v1504 = vrot.slane %v1440, 4
  %v1505 = vrot.slane %v1440, 5
  %v1506 = vrot.slane %v1440, 6
  %v1507 = vrot.slane %v1440, 7
  %v1508 = vrot.slane %v1444, 1
  %v1509 = vrot.slane %v1444, 2
  %v1510 = vrot.slane %v1444, 3
  %v1511 = vrot.slane %v1444, 4
  %v1512 = vrot.slane %v1444, 5
  %v1513 = vrot.slane %v1444, 6
  %v1514 = vrot.slane %v1444, 7
  %v1515 = vrot.slane %v1448, 1
  %v1516 = vrot.slane %v1448, 2
  %v1517 = vrot.slane %v1448, 3
  %v1518 = vrot.slane %v1448, 4
  %v1519 = vrot.slane %v1448, 5
  %v1520 = vrot.slane %v1448, 6
  %v1521 = vrot.slane %v1448, 7
  %v1522 = vrot.slane %v1452, 1
  %v1523 = vrot.slane %v1452, 2
  %v1524 = vrot.slane %v1452, 3
  %v1525 = vrot.slane %v1452, 4
  %v1526 = vrot.slane %v1452, 5
  %v1527 = vrot.slane %v1452, 6
  %v1528 = vrot.slane %v1452, 7
  %v1529 = vrot.slane %v1456, 1
  %v1530 = vrot.slane %v1456, 2
  %v1531 = vrot.slane %v1456, 3
  %v1532 = vrot.slane %v1456, 4
  %v1533 = vrot.slane %v1456, 5
  %v1534 = vrot.slane %v1456, 6
  %v1535 = vrot.slane %v1456, 7
  %v1536 = vrot.slane %v1460, 1
  %v1537 = vrot.slane %v1460, 2
  %v1538 = vrot.slane %v1460, 3
  %v1539 = vrot.slane %v1460, 4
  %v1540 = vrot.slane %v1460, 5
  %v1541 = vrot.slane %v1460, 6
  %v1542 = vrot.slane %v1460, 7
  %v1543 = vrot.slane %v1464, 1
  %v1544 = vrot.slane %v1464, 2
  %v1545 = vrot.slane %v1464, 3
  %v1546 = vrot.slane %v1464, 4
  %v1547 = vrot.slane %v1464, 5
  %v1548 = vrot.slane %v1464, 6
  %v1549 = vrot.slane %v1464, 7
  %v1550 = vrot.slane %v1468, 1
  %v1551 = vrot.slane %v1468, 2
  %v1552 = vrot.slane %v1468, 3
  %v1553 = vrot.slane %v1468, 4
  %v1554 = vrot.slane %v1468, 5
  %v1555 = vrot.slane %v1468, 6
  %v1556 = vrot.slane %v1468, 7
  %v1557 = vrot.slane %v1472, 1
  %v1558 = vrot.slane %v1472, 2
  %v1559 = vrot.slane %v1472, 3
  %v1560 = vrot.slane %v1472, 4
  %v1561 = vrot.slane %v1472, 5
  %v1562 = vrot.slane %v1472, 6
  %v1563 = vrot.slane %v1472, 7
  %v1564 = vrot.slane %v1476, 1
  %v1565 = vrot.slane %v1476, 2
  %v1566 = vrot.slane %v1476, 3
  %v1567 = vrot.slane %v1476, 4
  %v1568 = vrot.slane %v1476, 5
  %v1569 = vrot.slane %v1476, 6
  %v1570 = vrot.slane %v1476, 7
  %v1571 = vrot.slane %v1480, 1
  %v1572 = vrot.slane %v1480, 2
  %v1573 = vrot.slane %v1480, 3
  %v1574 = vrot.slane %v1480, 4
  %v1575 = vrot.slane %v1480, 5
  %v1576 = vrot.slane %v1480, 6
  %v1577 = vrot.slane %v1480, 7
  %v1578 = vrot.slane %v1484, 1
  %v1579 = vrot.slane %v1484, 2
  %v1580 = vrot.slane %v1484, 3
  %v1581 = vrot.slane %v1484, 4
  %v1582 = vrot.slane %v1484, 5
  %v1583 = vrot.slane %v1484, 6
  %v1584 = vrot.slane %v1484, 7
  %v1585 = vrot.slane %v1488, 1
  %v1586 = vrot.slane %v1488, 2
  %v1587 = vrot.slane %v1488, 3
  %v1588 = vrot.slane %v1488, 4
  %v1589 = vrot.slane %v1488, 5
  %v1590 = vrot.slane %v1488, 6
  %v1591 = vrot.slane %v1488, 7
  %v1592 = vrot.slane %v1492, 1
  %v1593 = vrot.slane %v1492, 2
  %v1594 = vrot.slane %v1492, 3
  %v1595 = vrot.slane %v1492, 4
  %v1596 = vrot.slane %v1492, 5
  %v1597 = vrot.slane %v1492, 6
  %v1598 = vrot.slane %v1492, 7
  %v1599 = vrot.slane %v1496, 1
  %v1600 = vrot.slane %v1496, 2
  %v1601 = vrot.slane %v1496, 3
  %v1602 = vrot.slane %v1496, 4
  %v1603 = vrot.slane %v1496, 5
  %v1604 = vrot.slane %v1496, 6
  %v1605 = vrot.slane %v1496, 7
  %v1606 = vrot.slane %v1500, 1
  %v1607 = vrot.slane %v1500, 2
  %v1608 = vrot.slane %v1500, 3
  %v1609 = vrot.slane %v1500, 4
  %v1610 = vrot.slane %v1500, 5
  %v1611 = vrot.slane %v1500, 6
  %v1612 = vrot.slane %v1500, 7
  %v1741 = vmul.f32 %v277, %v1440
  %v1742 = vmul.f32 %v286, %v1501
  %v1743 = vmul.f32 %v295, %v1502
  %v1744 = vmul.f32 %v304, %v1503
  %v1745 = vmul.f32 %v313, %v1504
  %v1746 = vmul.f32 %v322, %v1505
  %v1747 = vmul.f32 %v331, %v1506
  %v1748 = vmul.f32 %v340, %v1507
  %v1749 = vmul.f32 %v349, %v1444
  %v1750 = vmul.f32 %v358, %v1508
  %v1751 = vmul.f32 %v367, %v1509
  %v1752 = vmul.f32 %v376, %v1510
  %v1753 = vmul.f32 %v385, %v1511
  %v1754 = vmul.f32 %v394, %v1512
  %v1755 = vmul.f32 %v403, %v1513
  %v1756 = vmul.f32 %v412, %v1514
  %v1757 = vmul.f32 %v421, %v1448
  %v1758 = vmul.f32 %v430, %v1515
  %v1759 = vmul.f32 %v439, %v1516
  %v1760 = vmul.f32 %v448, %v1517
  %v1761 = vmul.f32 %v457, %v1518
  %v1762 = vmul.f32 %v466, %v1519
  %v1763 = vmul.f32 %v475, %v1520
  %v1764 = vmul.f32 %v484, %v1521
  %v1765 = vmul.f32 %v493, %v1452
  %v1766 = vmul.f32 %v502, %v1522
  %v1767 = vmul.f32 %v511, %v1523
  %v1768 = vmul.f32 %v520, %v1524
  %v1769 = vmul.f32 %v529, %v1525
  %v1770 = vmul.f32 %v538, %v1526
  %v1771 = vmul.f32 %v547, %v1527
  %v1772 = vmul.f32 %v556, %v1528
  %v1773 = vmul.f32 %v565, %v1456
  %v1774 = vmul.f32 %v574, %v1529
  %v1775 = vmul.f32 %v583, %v1530
  %v1776 = vmul.f32 %v592, %v1531
  %v1777 = vmul.f32 %v601, %v1532
  %v1778 = vmul.f32 %v610, %v1533
  %v1779 = vmul.f32 %v619, %v1534
  %v1780 = vmul.f32 %v628, %v1535
  %v1781 = vmul.f32 %v637, %v1460
  %v1782 = vmul.f32 %v646, %v1536
  %v1783 = vmul.f32 %v655, %v1537
  %v1784 = vmul.f32 %v664, %v1538
  %v1785 = vmul.f32 %v673, %v1539
  %v1786 = vmul.f32 %v682, %v1540
  %v1787 = vmul.f32 %v691, %v1541
  %v1788 = vmul.f32 %v700, %v1542
  %v1789 = vmul.f32 %v709, %v1464
  %v1790 = vmul.f32 %v718, %v1543
  %v1791 = vmul.f32 %v727, %v1544
  %v1792 = vmul.f32 %v736, %v1545
  %v1793 = vmul.f32 %v745, %v1546
  %v1794 = vmul.f32 %v754, %v1547
  %v1795 = vmul.f32 %v763, %v1548
  %v1796 = vmul.f32 %v772, %v1549
  %v1797 = vmul.f32 %v781, %v1468
  %v1798 = vmul.f32 %v790, %v1550
  %v1799 = vmul.f32 %v799, %v1551
  %v1800 = vmul.f32 %v808, %v1552
  %v1801 = vmul.f32 %v817, %v1553
  %v1802 = vmul.f32 %v826, %v1554
  %v1803 = vmul.f32 %v835, %v1555
  %v1804 = vmul.f32 %v844, %v1556
  %v1805 = vmul.f32 %v853, %v1472
  %v1806 = vmul.f32 %v862, %v1557
  %v1807 = vmul.f32 %v871, %v1558
  %v1808 = vmul.f32 %v880, %v1559
  %v1809 = vmul.f32 %v889, %v1560
  %v1810 = vmul.f32 %v898, %v1561
  %v1811 = vmul.f32 %v907, %v1562
  %v1812 = vmul.f32 %v916, %v1563
  %v1813 = vmul.f32 %v925, %v1476
  %v1814 = vmul.f32 %v934, %v1564
  %v1815 = vmul.f32 %v943, %v1565
  %v1816 = vmul.f32 %v952, %v1566
  %v1817 = vmul.f32 %v961, %v1567
  %v1818 = vmul.f32 %v970, %v1568
  %v1819 = vmul.f32 %v979, %v1569
  %v1820 = vmul.f32 %v988, %v1570
  %v1821 = vmul.f32 %v997, %v1480
  %v1822 = vmul.f32 %v1006, %v1571
  %v1823 = vmul.f32 %v1015, %v1572
  %v1824 = vmul.f32 %v1024, %v1573
  %v1825 = vmul.f32 %v1033, %v1574
  %v1826 = vmul.f32 %v1042, %v1575
  %v1827 = vmul.f32 %v1051, %v1576
  %v1828 = vmul.f32 %v1060, %v1577
  %v1829 = vmul.f32 %v1069, %v1484
  %v1830 = vmul.f32 %v1078, %v1578
  %v1831 = vmul.f32 %v1087, %v1579
  %v1832 = vmul.f32 %v1096, %v1580
  %v1833 = vmul.f32 %v1105, %v1581
  %v1834 = vmul.f32 %v1114, %v1582
  %v1835 = vmul.f32 %v1123, %v1583
  %v1836 = vmul.f32 %v1132, %v1584
  %v1837 = vmul.f32 %v1141, %v1488
  %v1838 = vmul.f32 %v1150, %v1585
  %v1839 = vmul.f32 %v1159, %v1586
  %v1840 = vmul.f32 %v1168, %v1587
  %v1841 = vmul.f32 %v1177, %v1588
  %v1842 = vmul.f32 %v1186, %v1589
  %v1843 = vmul.f32 %v1195, %v1590
  %v1844 = vmul.f32 %v1204, %v1591
  %v1845 = vmul.f32 %v1213, %v1492
  %v1846 = vmul.f32 %v1222, %v1592
  %v1847 = vmul.f32 %v1231, %v1593
  %v1848 = vmul.f32 %v1240, %v1594
  %v1849 = vmul.f32 %v1249, %v1595
  %v1850 = vmul.f32 %v1258, %v1596
  %v1851 = vmul.f32 %v1267, %v1597
  %v1852 = vmul.f32 %v1276, %v1598
  %v1853 = vmul.f32 %v1285, %v1496
  %v1854 = vmul.f32 %v1294, %v1599
  %v1855 = vmul.f32 %v1303, %v1600
  %v1856 = vmul.f32 %v1312, %v1601
  %v1857 = vmul.f32 %v1321, %v1602
  %v1858 = vmul.f32 %v1330, %v1603
  %v1859 = vmul.f32 %v1339, %v1604
  %v1860 = vmul.f32 %v1348, %v1605
  %v1861 = vmul.f32 %v1357, %v1500
  %v1862 = vmul.f32 %v1366, %v1606
  %v1863 = vmul.f32 %v1375, %v1607
  %v1864 = vmul.f32 %v1384, %v1608
  %v1865 = vmul.f32 %v1393, %v1609
  %v1866 = vmul.f32 %v1402, %v1610
  %v1867 = vmul.f32 %v1411, %v1611
  %v1868 = vmul.f32 %v1420, %v1612
  %v1997 = vrot.slane %v1742, 7
  %vm1998 = vcmask 1041409
  %v1999 = vsel %vm1998, %v1997, %v1741
  %v2000 = vrot.slane %v1743, 6
  %vm2001 = vcmask 1042434
  %v2002 = vsel %vm2001, %v2000, %v1999
  %v2003 = vrot.slane %v1744, 5
  %vm2004 = vcmask 1043459
  %v2005 = vsel %vm2004, %v2003, %v2002
  %v2006 = vrot.slane %v1745, 4
  %vm2007 = vcmask 1044484
  %v2008 = vsel %vm2007, %v2006, %v2005
  %v2009 = vrot.slane %v1746, 3
  %vm2010 = vcmask 1045509
  %v2011 = vsel %vm2010, %v2009, %v2008
  %v2012 = vrot.slane %v1747, 2
  %vm2013 = vcmask 1046534
  %v2014 = vsel %vm2013, %v2012, %v2011
  %v2015 = vrot.slane %v1748, 1
  %vm2016 = vcmask 1047559
  %v2017 = vsel %vm2016, %v2015, %v2014
  %v2018 = vrot.slane %v1750, 7
  %v2019 = vsel %vm1998, %v2018, %v1749
  %v2020 = vrot.slane %v1751, 6
  %v2021 = vsel %vm2001, %v2020, %v2019
  %v2022 = vrot.slane %v1752, 5
  %v2023 = vsel %vm2004, %v2022, %v2021
  %v2024 = vrot.slane %v1753, 4
  %v2025 = vsel %vm2007, %v2024, %v2023
  %v2026 = vrot.slane %v1754, 3
  %v2027 = vsel %vm2010, %v2026, %v2025
  %v2028 = vrot.slane %v1755, 2
  %v2029 = vsel %vm2013, %v2028, %v2027
  %v2030 = vrot.slane %v1756, 1
  %v2031 = vsel %vm2016, %v2030, %v2029
  %v2032 = vrot.slane %v1758, 7
  %v2033 = vsel %vm1998, %v2032, %v1757
  %v2034 = vrot.slane %v1759, 6
  %v2035 = vsel %vm2001, %v2034, %v2033
  %v2036 = vrot.slane %v1760, 5
  %v2037 = vsel %vm2004, %v2036, %v2035
  %v2038 = vrot.slane %v1761, 4
  %v2039 = vsel %vm2007, %v2038, %v2037
  %v2040 = vrot.slane %v1762, 3
  %v2041 = vsel %vm2010, %v2040, %v2039
  %v2042 = vrot.slane %v1763, 2
  %v2043 = vsel %vm2013, %v2042, %v2041
  %v2044 = vrot.slane %v1764, 1
  %v2045 = vsel %vm2016, %v2044, %v2043
  %v2046 = vrot.slane %v1766, 7
  %v2047 = vsel %vm1998, %v2046, %v1765
  %v2048 = vrot.slane %v1767, 6
  %v2049 = vsel %vm2001, %v2048, %v2047
  %v2050 = vrot.slane %v1768, 5
  %v2051 = vsel %vm2004, %v2050, %v2049
  %v2052 = vrot.slane %v1769, 4
  %v2053 = vsel %vm2007, %v2052, %v2051
  %v2054 = vrot.slane %v1770, 3
  %v2055 = vsel %vm2010, %v2054, %v2053
  %v2056 = vrot.slane %v1771, 2
  %v2057 = vsel %vm2013, %v2056, %v2055
  %v2058 = vrot.slane %v1772, 1
  %v2059 = vsel %vm2016, %v2058, %v2057
  %v2060 = vrot.slane %v1774, 7
  %v2061 = vsel %vm1998, %v2060, %v1773
  %v2062 = vrot.slane %v1775, 6
  %v2063 = vsel %vm2001, %v2062, %v2061
  %v2064 = vrot.slane %v1776, 5
  %v2065 = vsel %vm2004, %v2064, %v2063
  %v2066 = vrot.slane %v1777, 4
  %v2067 = vsel %vm2007, %v2066, %v2065
  %v2068 = vrot.slane %v1778, 3
  %v2069 = vsel %vm2010, %v2068, %v2067
  %v2070 = vrot.slane %v1779, 2
  %v2071 = vsel %vm2013, %v2070, %v2069
  %v2072 = vrot.slane %v1780, 1
  %v2073 = vsel %vm2016, %v2072, %v2071
  %v2074 = vrot.slane %v1782, 7
  %v2075 = vsel %vm1998, %v2074, %v1781
  %v2076 = vrot.slane %v1783, 6
  %v2077 = vsel %vm2001, %v2076, %v2075
  %v2078 = vrot.slane %v1784, 5
  %v2079 = vsel %vm2004, %v2078, %v2077
  %v2080 = vrot.slane %v1785, 4
  %v2081 = vsel %vm2007, %v2080, %v2079
  %v2082 = vrot.slane %v1786, 3
  %v2083 = vsel %vm2010, %v2082, %v2081
  %v2084 = vrot.slane %v1787, 2
  %v2085 = vsel %vm2013, %v2084, %v2083
  %v2086 = vrot.slane %v1788, 1
  %v2087 = vsel %vm2016, %v2086, %v2085
  %v2088 = vrot.slane %v1790, 7
  %v2089 = vsel %vm1998, %v2088, %v1789
  %v2090 = vrot.slane %v1791, 6
  %v2091 = vsel %vm2001, %v2090, %v2089
  %v2092 = vrot.slane %v1792, 5
  %v2093 = vsel %vm2004, %v2092, %v2091
  %v2094 = vrot.slane %v1793, 4
  %v2095 = vsel %vm2007, %v2094, %v2093
  %v2096 = vrot.slane %v1794, 3
  %v2097 = vsel %vm2010, %v2096, %v2095
  %v2098 = vrot.slane %v1795, 2
  %v2099 = vsel %vm2013, %v2098, %v2097
  %v2100 = vrot.slane %v1796, 1
  %v2101 = vsel %vm2016, %v2100, %v2099
  %v2102 = vrot.slane %v1798, 7
  %v2103 = vsel %vm1998, %v2102, %v1797
  %v2104 = vrot.slane %v1799, 6
  %v2105 = vsel %vm2001, %v2104, %v2103
  %v2106 = vrot.slane %v1800, 5
  %v2107 = vsel %vm2004, %v2106, %v2105
  %v2108 = vrot.slane %v1801, 4
  %v2109 = vsel %vm2007, %v2108, %v2107
  %v2110 = vrot.slane %v1802, 3
  %v2111 = vsel %vm2010, %v2110, %v2109
  %v2112 = vrot.slane %v1803, 2
  %v2113 = vsel %vm2013, %v2112, %v2111
  %v2114 = vrot.slane %v1804, 1
  %v2115 = vsel %vm2016, %v2114, %v2113
  %v2116 = vrot.slane %v1806, 7
  %v2117 = vsel %vm1998, %v2116, %v1805
  %v2118 = vrot.slane %v1807, 6
  %v2119 = vsel %vm2001, %v2118, %v2117
  %v2120 = vrot.slane %v1808, 5
  %v2121 = vsel %vm2004, %v2120, %v2119
  %v2122 = vrot.slane %v1809, 4
  %v2123 = vsel %vm2007, %v2122, %v2121
  %v2124 = vrot.slane %v1810, 3
  %v2125 = vsel %vm2010, %v2124, %v2123
  %v2126 = vrot.slane %v1811, 2
  %v2127 = vsel %vm2013, %v2126, %v2125
  %v2128 = vrot.slane %v1812, 1
  %v2129 = vsel %vm2016, %v2128, %v2127
  %v2130 = vrot.slane %v1814, 7
  %v2131 = vsel %vm1998, %v2130, %v1813
  %v2132 = vrot.slane %v1815, 6
  %v2133 = vsel %vm2001, %v2132, %v2131
  %v2134 = vrot.slane %v1816, 5
  %v2135 = vsel %vm2004, %v2134, %v2133
  %v2136 = vrot.slane %v1817, 4
  %v2137 = vsel %vm2007, %v2136, %v2135
  %v2138 = vrot.slane %v1818, 3
  %v2139 = vsel %vm2010, %v2138, %v2137
  %v2140 = vrot.slane %v1819, 2
  %v2141 = vsel %vm2013, %v2140, %v2139
  %v2142 = vrot.slane %v1820, 1
  %v2143 = vsel %vm2016, %v2142, %v2141
  %v2144 = vrot.slane %v1822, 7
  %v2145 = vsel %vm1998, %v2144, %v1821
  %v2146 = vrot.slane %v1823, 6
  %v2147 = vsel %vm2001, %v2146, %v2145
  %v2148 = vrot.slane %v1824, 5
  %v2149 = vsel %vm2004, %v2148, %v2147
  %v2150 = vrot.slane %v1825, 4
  %v2151 = vsel %vm2007, %v2150, %v2149
  %v2152 = vrot.slane %v1826, 3
  %v2153 = vsel %vm2010, %v2152, %v2151
  %v2154 = vrot.slane %v1827, 2
  %v2155 = vsel %vm2013, %v2154, %v2153
  %v2156 = vrot.slane %v1828, 1
  %v2157 = vsel %vm2016, %v2156, %v2155
  %v2158 = vrot.slane %v1830, 7
  %v2159 = vsel %vm1998, %v2158, %v1829
  %v2160 = vrot.slane %v1831, 6
  %v2161 = vsel %vm2001, %v2160, %v2159
  %v2162 = vrot.slane %v1832, 5
  %v2163 = vsel %vm2004, %v2162, %v2161
  %v2164 = vrot.slane %v1833, 4
  %v2165 = vsel %vm2007, %v2164, %v2163
  %v2166 = vrot.slane %v1834, 3
  %v2167 = vsel %vm2010, %v2166, %v2165
  %v2168 = vrot.slane %v1835, 2
  %v2169 = vsel %vm2013, %v2168, %v2167
  %v2170 = vrot.slane %v1836, 1
  %v2171 = vsel %vm2016, %v2170, %v2169
  %v2172 = vrot.slane %v1838, 7
  %v2173 = vsel %vm1998, %v2172, %v1837
  %v2174 = vrot.slane %v1839, 6
  %v2175 = vsel %vm2001, %v2174, %v2173
  %v2176 = vrot.slane %v1840, 5
  %v2177 = vsel %vm2004, %v2176, %v2175
  %v2178 = vrot.slane %v1841, 4
  %v2179 = vsel %vm2007, %v2178, %v2177
  %v2180 = vrot.slane %v1842, 3
  %v2181 = vsel %vm2010, %v2180, %v2179
  %v2182 = vrot.slane %v1843, 2
  %v2183 = vsel %vm2013, %v2182, %v2181
  %v2184 = vrot.slane %v1844, 1
  %v2185 = vsel %vm2016, %v2184, %v2183
  %v2186 = vrot.slane %v1846, 7
  %v2187 = vsel %vm1998, %v2186, %v1845
  %v2188 = vrot.slane %v1847, 6
  %v2189 = vsel %vm2001, %v2188, %v2187
  %v2190 = vrot.slane %v1848, 5
  %v2191 = vsel %vm2004, %v2190, %v2189
  %v2192 = vrot.slane %v1849, 4
  %v2193 = vsel %vm2007, %v2192, %v2191
  %v2194 = vrot.slane %v1850, 3
  %v2195 = vsel %vm2010, %v2194, %v2193
  %v2196 = vrot.slane %v1851, 2
  %v2197 = vsel %vm2013, %v2196, %v2195
  %v2198 = vrot.slane %v1852, 1
  %v2199 = vsel %vm2016, %v2198, %v2197
  %v2200 = vrot.slane %v1854, 7
  %v2201 = vsel %vm1998, %v2200, %v1853
  %v2202 = vrot.slane %v1855, 6
  %v2203 = vsel %vm2001, %v2202, %v2201
  %v2204 = vrot.slane %v1856, 5
  %v2205 = vsel %vm2004, %v2204, %v2203
  %v2206 = vrot.slane %v1857, 4
  %v2207 = vsel %vm2007, %v2206, %v2205
  %v2208 = vrot.slane %v1858, 3
  %v2209 = vsel %vm2010, %v2208, %v2207
  %v2210 = vrot.slane %v1859, 2
  %v2211 = vsel %vm2013, %v2210, %v2209
  %v2212 = vrot.slane %v1860, 1
  %v2213 = vsel %vm2016, %v2212, %v2211
  %v2214 = vrot.slane %v1862, 7
  %v2215 = vsel %vm1998, %v2214, %v1861
  %v2216 = vrot.slane %v1863, 6
  %v2217 = vsel %vm2001, %v2216, %v2215
  %v2218 = vrot.slane %v1864, 5
  %v2219 = vsel %vm2004, %v2218, %v2217
  %v2220 = vrot.slane %v1865, 4
  %v2221 = vsel %vm2007, %v2220, %v2219
  %v2222 = vrot.slane %v1866, 3
  %v2223 = vsel %vm2010, %v2222, %v2221
  %v2224 = vrot.slane %v1867, 2
  %v2225 = vsel %vm2013, %v2224, %v2223
  %v2226 = vrot.slane %v1868, 1
  %v2227 = vsel %vm2016, %v2226, %v2225
  %2244 = vst.msk [vmem:[%s2] sm:$0xff] %vm267, %v2017
  %2245 = vst.msk [vmem:[%s2 + $0x8] sm:$0xff] %vm267, %v2031
  %2246 = vst.msk [vmem:[%s2 + $0x10] sm:$0xff] %vm267, %v2045
  %2247 = vst.msk [vmem:[%s2 + $0x18] sm:$0xff] %vm267, %v2059
  %2248 = vst.msk [vmem:[%s2 + $0x20] sm:$0xff] %vm267, %v2073
  %2249 = vst.msk [vmem:[%s2 + $0x28] sm:$0xff] %vm267, %v2087
  %2250 = vst.msk [vmem:[%s2 + $0x30] sm:$0xff] %vm267, %v2101
  %2251 = vst.msk [vmem:[%s2 + $0x38] sm:$0xff] %vm267, %v2115
  %2252 = vst.msk [vmem:[%s2 + $0x40] sm:$0xff] %vm267, %v2129
  %2253 = vst.msk [vmem:[%s2 + $0x48] sm:$0xff] %vm267, %v2143
  %2254 = vst.msk [vmem:[%s2 + $0x50] sm:$0xff] %vm267, %v2157
  %2255 = vst.msk [vmem:[%s2 + $0x58] sm:$0xff] %vm267, %v2171
  %2256 = vst.msk [vmem:[%s2 + $0x60] sm:$0xff] %vm267, %v2185
  %2257 = vst.msk [vmem:[%s2 + $0x68] sm:$0xff] %vm267, %v2199
  %2258 = vst.msk [vmem:[%s2 + $0x70] sm:$0xff] %vm267, %v2213
  %2259 = vst.msk [vmem:[%s2 + $0x78] sm:$0xff] %vm267, %v2227
  // Predicated region
  $region10: #{_lambda_.13} parent=0 // pred_check
    _
  $region11: #{_lambda_.13} parent=0 // pred_check_branch
    %2261 = sbr.rel (0) target = $region13
  $region12: #{_lambda_.13} parent=0 // pred_region
    _
  $region13: #{_lambda_.13} parent=0 // pred_fallthru
    _
  // Predicated region
  $region14: #{_lambda_.13} parent=0 // pred_check
    _
  $region15: #{_lambda_.13} parent=0 // pred_check_branch
    %2263 = sbr.rel (0) target = $region17
  $region16: #{_lambda_.13} parent=0 // pred_region
    _
  $region17: #{_lambda_.13} parent=0 // pred_fallthru
    _

// kernel: _lambda_.14
$region0: #{_lambda_.14}
  #allocation0 [shape = 'u32[]', space=smem, size = 0x4, offset = 0x4, fixed_abs, tag = 'smem constant byte address 0x4 - core index']
  #allocation1 [shape = 'u32[72,128]{1,0:T(1,128)}', space=vmem, size = 0x9000, scoped, tag = 'internal scratch']
  #allocation2 [shape = 'f32[32,128]{1,0:T(8,128)}', space=vmem, size = 0x4000, scoped, tag = 'scratch operand']
  %s0 = inlined_call_operand.vmem [shape: bf16[32,48], index: 0, kind: input, shape index: {}]
  %s1 = inlined_call_operand.vmem [shape: bf16[48,128], index: 1, kind: input, shape index: {}]
  %s2 = inlined_call_operand.vmem [shape: f32[1,128], index: 2, kind: input, shape index: {}]
  %s3 = inlined_call_operand.vmem [shape: bf16[32,4], index: 3, kind: output, shape index: {}]
  %s4 = sld [smem:[#allocation0]]
  $region30: #{_lambda_.14} parent=0
    _
  %s6 = ssub.s32 1, %s4
  %s7 = scalar_select 0, %s6, %s4
  // Predicated region
  $region2: #{_lambda_.14} parent=0 // pred_check
    _
  $region3: #{_lambda_.14} parent=0 // pred_check_branch
    %9 = sbr.rel (0) target = $region5
  $region4: #{_lambda_.14} parent=0 // pred_region
    _
  $region5: #{_lambda_.14} parent=0 // pred_fallthru
    _
  // Predicated region
  $region6: #{_lambda_.14} parent=0 // pred_check
    _
  $region7: #{_lambda_.14} parent=0 // pred_check_branch
    %11 = sbr.rel (0) target = $region9
  $region8: #{_lambda_.14} parent=0 // pred_region
    _
  $region9: #{_lambda_.14} parent=0 // pred_fallthru
    _
  // Predicated region
  $region10: #{_lambda_.14} parent=0 // pred_check
    _
  $region11: #{_lambda_.14} parent=0 // pred_check_branch
    %13 = sbr.rel (0) target = $region13
  $region12: #{_lambda_.14} parent=0 // pred_region
    _
  $region13: #{_lambda_.14} parent=0 // pred_fallthru
    _
  %p15 = scmp.eq.s32.totalorder 0, 0
  // Predicated region
  $region14: #{_lambda_.14} parent=0 // pred_check
    %p16 = pneg %p15
  $region15: #{_lambda_.14} parent=0 // pred_check_branch
    %18 = sbr.rel (%p16) target = $region17
  $region16: #{_lambda_.14} parent=0 // pred_region
    %19 = vst [vmem:[#allocation2] sm:$0xff] 0.0
    %20 = vst [vmem:[#allocation2 + $0x8] sm:$0xff] 0.0
    %21 = vst [vmem:[#allocation2 + $0x10] sm:$0xff] 0.0
    %22 = vst [vmem:[#allocation2 + $0x18] sm:$0xff] 0.0
  $region17: #{_lambda_.14} parent=0 // pred_fallthru
    _
  %v23 = vld [vmem:[#allocation2] sm:$0xff]
  %v24 = vld [vmem:[#allocation2 + $0x8] sm:$0xff]
  %v25 = vld [vmem:[#allocation2 + $0x10] sm:$0xff]
  %v26 = vld [vmem:[#allocation2 + $0x18] sm:$0xff]
  %v27 = vld [vmem:[%s0] sm:$0xf]
  %v28 = vld [vmem:[%s0 + $0x4] sm:$0xf]
  %v29 = vld [vmem:[%s0 + $0x8] sm:$0xf]
  %v30 = vld [vmem:[%s0 + $0xc] sm:$0xf]
  %v31 = vld [vmem:[%s1] sm:$0xf]
  %v32 = vld [vmem:[%s1 + $0x4] sm:$0xf]
  %v33 = vld [vmem:[%s1 + $0x8] sm:$0xf]
  %v34 = vld [vmem:[%s1 + $0xc] sm:$0xf]
  %v35 = vld [vmem:[%s1 + $0x10] sm:$0xf]
  %v36 = vld [vmem:[%s1 + $0x14] sm:$0xf]
  %v41 = vunpack.c.l.b16 %v27
  %v42 = vunpack.c.l.b16 %v28
  %v43 = vunpack.c.l.b16 %v29
  %v44 = vunpack.c.l.b16 %v30
  %v45 = vpack.c.b16 %v42, %v41
  %v46 = vpack.c.b16 %v44, %v43
  %v53 = vunpack.c.l.b16 %v31
  %v54 = vunpack.c.l.b16 %v32
  %v55 = vunpack.c.l.b16 %v33
  %v56 = vunpack.c.l.b16 %v34
  %v57 = vunpack.c.l.b16 %v35
  %v58 = vunpack.c.l.b16 %v36
  %v59 = vpack.c.b16 %v54, %v53
  %v60 = vpack.c.b16 %v56, %v55
  %v61 = vpack.c.b16 %v58, %v57
  %vm65 = vcmask 392192
  %v67 = vsel %vm65, %v45, 0
  %v70 = vsel %vm65, %v46, 0
  %72 = vmatpush.bf16.msra.mxu0 0
  %73 = vmatpush.bf16.msra.mxu0 0
  %74 = vmatpush.bf16.msra.mxu0 0
  %75 = vmatpush.bf16.msra.mxu0 0
  %76 = vmatpush.bf16.msra.mxu0 0
  %77 = vmatpush.bf16.msra.mxu0 %v61
  %78 = vmatpush.bf16.msra.mxu0 %v60
  %79 = vmatpush.bf16.msra.mxu0 %v59
  %80 = vmatmul.bf16.gmra.mxu0 %v67
  %v81 = vpop.f32.mrf.mxu0
  %v82 = vadd.f32 0.0, %v81
  %v83 = vpop.f32.mrf.mxu0
  %v84 = vadd.f32 0.0, %v83
  %85 = vmatmul.bf16.gmra.mxu0 %v70
  %v86 = vpop.f32.mrf.mxu0
  %v87 = vadd.f32 0.0, %v86
  %v88 = vpop.f32.mrf.mxu0
  %v89 = vadd.f32 0.0, %v88
  %90 = vdwg.mxu0
  %v91 = vadd.f32 %v23, %v82
  %v92 = vadd.f32 %v24, %v84
  %v93 = vadd.f32 %v25, %v87
  %v94 = vadd.f32 %v26, %v89
  %95 = vst [vmem:[#allocation2] sm:$0xff] %v91
  %96 = vst [vmem:[#allocation2 + $0x8] sm:$0xff] %v92
  %97 = vst [vmem:[#allocation2 + $0x10] sm:$0xff] %v93
  %98 = vst [vmem:[#allocation2 + $0x18] sm:$0xff] %v94
  // Predicated region
  $region18: #{_lambda_.14} parent=0 // pred_check
    %p99 = pneg %p15
  $region19: #{_lambda_.14} parent=0 // pred_check_branch
    %101 = sbr.rel (%p99) target = $region21
  $region20: #{_lambda_.14} parent=0 // pred_region
    %v102 = vld [vmem:[#allocation2] sm:$0xff]
    %v103 = vld [vmem:[#allocation2 + $0x8] sm:$0xff]
    %v104 = vld [vmem:[#allocation2 + $0x10] sm:$0xff]
    %v105 = vld [vmem:[#allocation2 + $0x18] sm:$0xff]
    %v106 = vld [vmem:[%s2] sm:$0x1]
    %v108 = vperm.slane %v106, 0
    %v110 = vadd.f32 %v102, %v108
    %v111 = vadd.f32 %v103, %v108
    %v112 = vadd.f32 %v104, %v108
    %v113 = vadd.f32 %v105, %v108
    %vm114 = vcmp.ge.f32.partialorder %v110, 0.0
    %vm115 = vcmp.ge.f32.partialorder %v111, 0.0
    %vm116 = vcmp.ge.f32.partialorder %v112, 0.0
    %vm117 = vcmp.ge.f32.partialorder %v113, 0.0
    %v118 = vmul.f32 %v110, 0.2
    %v119 = vmul.f32 %v111, 0.2
    %v120 = vmul.f32 %v112, 0.2
    %v121 = vmul.f32 %v113, 0.2
    %v122 = vsel %vm114, %v110, %v118
    %v123 = vsel %vm115, %v111, %v119
    %v124 = vsel %vm116, %v112, %v120
    %v125 = vsel %vm117, %v113, %v121
    %v126 = vpack.c.bf16 %v122, %v122
    %v127 = vpack.c.bf16 %v123, %v123
    %v128 = vpack.c.bf16 %v124, %v124
    %v129 = vpack.c.bf16 %v125, %v125
    %vm130 = vcmask 27648
    %131 = vst.msk [vmem:[%s3] sm:$0xf] %vm130, %v126
    %132 = vst.msk [vmem:[%s3 + $0x4] sm:$0xf] %vm130, %v127
    %133 = vst.msk [vmem:[%s3 + $0x8] sm:$0xf] %vm130, %v128
    %134 = vst.msk [vmem:[%s3 + $0xc] sm:$0xf] %vm130, %v129
  $region21: #{_lambda_.14} parent=0 // pred_fallthru
    _
  // Predicated region
  $region22: #{_lambda_.14} parent=0 // pred_check
    _
  $region23: #{_lambda_.14} parent=0 // pred_check_branch
    %136 = sbr.rel (0) target = $region25
  $region24: #{_lambda_.14} parent=0 // pred_region
    _
  $region25: #{_lambda_.14} parent=0 // pred_fallthru
    _
  // Predicated region
  $region26: #{_lambda_.14} parent=0 // pred_check
    _
  $region27: #{_lambda_.14} parent=0 // pred_check_branch
    %138 = sbr.rel (0) target = $region29
  $region28: #{_lambda_.14} parent=0 // pred_region
    _
  $region29: #{_lambda_.14} parent=0 // pred_fallthru
    _

// kernel: _lambda_.16
$region0: #{_lambda_.16}
  #allocation0 [shape = 'u32[]', space=smem, size = 0x4, offset = 0x4, fixed_abs, tag = 'smem constant byte address 0x4 - core index']
  #allocation1 [shape = 'u32[72,128]{1,0:T(1,128)}', space=vmem, size = 0x9000, scoped, tag = 'internal scratch']
  %s0 = inlined_call_operand.vmem [shape: bf16[8,8], index: 0, kind: input, shape index: {}]
  %s1 = inlined_call_operand.vmem [shape: f32[1,8], index: 1, kind: input, shape index: {}]
  %s2 = inlined_call_operand.vmem [shape: f32[1,8], index: 2, kind: input, shape index: {}]
  %s3 = inlined_call_operand.vmem [shape: bf16[8,8], index: 3, kind: output, shape index: {}]
  %s4 = sld [smem:[#allocation0]]
  $region22: #{_lambda_.16} parent=0
    _
  %s6 = ssub.s32 1, %s4
  %s7 = scalar_select 0, %s6, %s4
  // Predicated region
  $region2: #{_lambda_.16} parent=0 // pred_check
    _
  $region3: #{_lambda_.16} parent=0 // pred_check_branch
    %9 = sbr.rel (0) target = $region5
  $region4: #{_lambda_.16} parent=0 // pred_region
    _
  $region5: #{_lambda_.16} parent=0 // pred_fallthru
    _
  // Predicated region
  $region6: #{_lambda_.16} parent=0 // pred_check
    _
  $region7: #{_lambda_.16} parent=0 // pred_check_branch
    %11 = sbr.rel (0) target = $region9
  $region8: #{_lambda_.16} parent=0 // pred_region
    _
  $region9: #{_lambda_.16} parent=0 // pred_fallthru
    _
  // Predicated region
  $region10: #{_lambda_.16} parent=0 // pred_check
    _
  $region11: #{_lambda_.16} parent=0 // pred_check_branch
    %13 = sbr.rel (0) target = $region13
  $region12: #{_lambda_.16} parent=0 // pred_region
    _
  $region13: #{_lambda_.16} parent=0 // pred_fallthru
    _
  %v14 = vld [vmem:[%s0] sm:$0xf]
  %v15 = vunpack.c.l.bf16 %v14
  %v16 = vld [vmem:[%s1] sm:$0x1]
  %v18 = vperm.slane %v16, 0
  %v20 = vmul.f32 %v15, %v18
  %v21 = vld [vmem:[%s2] sm:$0x1]
  %v23 = vperm.slane %v21, 0
  %v25 = vadd.f32 %v20, %v23
  %vm26 = vcmp.ge.f32.partialorder %v25, 0.0
  %v27 = vmul.f32 %v25, 0.2
  %v28 = vsel %vm26, %v25, %v27
  %v29 = vpack.c.bf16 %v28, %v28
  %vm30 = vcmask 60416
  %31 = vst.msk [vmem:[%s3] sm:$0xf] %vm30, %v29
  // Predicated region
  $region14: #{_lambda_.16} parent=0 // pred_check
    _
  $region15: #{_lambda_.16} parent=0 // pred_check_branch
    %33 = sbr.rel (0) target = $region17
  $region16: #{_lambda_.16} parent=0 // pred_region
    _
  $region17: #{_lambda_.16} parent=0 // pred_fallthru
    _
  // Predicated region
  $region18: #{_lambda_.16} parent=0 // pred_check
    _
  $region19: #{_lambda_.16} parent=0 // pred_check_branch
    %35 = sbr.rel (0) target = $region21
  $region20: #{_lambda_.16} parent=0 // pred_region
    _
  $region21: #{_lambda_.16} parent=0 // pred_fallthru
    _

// kernel: _lambda_.15
$region0: #{_lambda_.15}
  #allocation0 [shape = 'u32[]', space=smem, size = 0x4, offset = 0x4, fixed_abs, tag = 'smem constant byte address 0x4 - core index']
  #allocation1 [shape = 'u32[72,128]{1,0:T(1,128)}', space=vmem, size = 0x9000, scoped, tag = 'internal scratch']
  #allocation2 [shape = 'f32[8,128]{1,0:T(8,128)}', space=vmem, size = 0x1000, scoped, tag = 'scratch operand']
  %s0 = inlined_call_operand.vmem [shape: bf16[8,64], index: 0, kind: input, shape index: {}]
  %s1 = inlined_call_operand.vmem [shape: bf16[64,128], index: 1, kind: input, shape index: {}]
  %s2 = inlined_call_operand.vmem [shape: f32[1,128], index: 2, kind: input, shape index: {}]
  %s3 = inlined_call_operand.vmem [shape: bf16[8,8], index: 3, kind: output, shape index: {0}]
  %s4 = inlined_call_operand.vmem [shape: f32[1,1,8], index: 4, kind: output, shape index: {1}]
  %s5 = inlined_call_operand.vmem [shape: f32[1,1,8], index: 5, kind: output, shape index: {2}]
  %6 = xla_tuple %s3, %s4, %s5
  %s7 = sld [smem:[#allocation0]]
  $region46: #{_lambda_.15} parent=0
    _
  %s9 = ssub.s32 1, %s7
  %s10 = scalar_select 0, %s9, %s7
  // Predicated region
  $region2: #{_lambda_.15} parent=0 // pred_check
    _
  $region3: #{_lambda_.15} parent=0 // pred_check_branch
    %12 = sbr.rel (0) target = $region5
  $region4: #{_lambda_.15} parent=0 // pred_region
    _
  $region5: #{_lambda_.15} parent=0 // pred_fallthru
    _
  // Predicated region
  $region6: #{_lambda_.15} parent=0 // pred_check
    _
  $region7: #{_lambda_.15} parent=0 // pred_check_branch
    %14 = sbr.rel (0) target = $region9
  $region8: #{_lambda_.15} parent=0 // pred_region
    _
  $region9: #{_lambda_.15} parent=0 // pred_fallthru
    _
  // Predicated region
  $region10: #{_lambda_.15} parent=0 // pred_check
    _
  $region11: #{_lambda_.15} parent=0 // pred_check_branch
    %16 = sbr.rel (0) target = $region13
  $region12: #{_lambda_.15} parent=0 // pred_region
    _
  $region13: #{_lambda_.15} parent=0 // pred_fallthru
    _
  %p18 = scmp.eq.s32.totalorder 0, 0
  // Predicated region
  $region14: #{_lambda_.15} parent=0 // pred_check
    %p19 = pneg %p18
  $region15: #{_lambda_.15} parent=0 // pred_check_branch
    %21 = sbr.rel (%p19) target = $region17
  $region16: #{_lambda_.15} parent=0 // pred_region
    %22 = vst [vmem:[#allocation2] sm:$0xff] 0.0
  $region17: #{_lambda_.15} parent=0 // pred_fallthru
    _
  %v23 = vld [vmem:[#allocation2] sm:$0xff]
  %v24 = vld [vmem:[%s0] sm:$0xf]
  %v25 = vld [vmem:[%s1] sm:$0xf]
  %v26 = vld [vmem:[%s1 + $0x4] sm:$0xf]
  %v27 = vld [vmem:[%s1 + $0x8] sm:$0xf]
  %v28 = vld [vmem:[%s1 + $0xc] sm:$0xf]
  %v29 = vld [vmem:[%s1 + $0x10] sm:$0xf]
  %v30 = vld [vmem:[%s1 + $0x14] sm:$0xf]
  %v31 = vld [vmem:[%s1 + $0x18] sm:$0xf]
  %v32 = vld [vmem:[%s1 + $0x1c] sm:$0xf]
  %v41 = vunpack.c.l.b16 %v25
  %v42 = vunpack.c.l.b16 %v26
  %v43 = vunpack.c.l.b16 %v27
  %v44 = vunpack.c.l.b16 %v28
  %v45 = vunpack.c.l.b16 %v29
  %v46 = vunpack.c.l.b16 %v30
  %v47 = vunpack.c.l.b16 %v31
  %v48 = vunpack.c.l.b16 %v32
  %v49 = vpack.c.b16 %v42, %v41
  %v50 = vpack.c.b16 %v44, %v43
  %v51 = vpack.c.b16 %v46, %v45
  %v52 = vpack.c.b16 %v48, %v47
  %vm57 = vcmask 523264
  %v59 = vsel %vm57, %v24, 0
  %61 = vmatpush.bf16.msra.mxu0 0
  %62 = vmatpush.bf16.msra.mxu0 0
  %63 = vmatpush.bf16.msra.mxu0 0
  %64 = vmatpush.bf16.msra.mxu0 0
  %65 = vmatpush.bf16.msra.mxu0 %v52
  %66 = vmatpush.bf16.msra.mxu0 %v51
  %67 = vmatpush.bf16.msra.mxu0 %v50
  %68 = vmatpush.bf16.msra.mxu0 %v49
  %69 = vmatmul.bf16.gmra.mxu0 %v59
  %v70 = vpop.f32.mrf.mxu0
  %v71 = vadd.f32 0.0, %v70
  %v72 = vpop.f32.mrf.mxu0
  %73 = vdwg.mxu0
  %v74 = vadd.f32 %v23, %v71
  %75 = vst [vmem:[#allocation2] sm:$0xff] %v74
  // Predicated region
  $region18: #{_lambda_.15} parent=0 // pred_check
    %p76 = pneg %p18
  $region19: #{_lambda_.15} parent=0 // pred_check_branch
    %78 = sbr.rel (%p76) target = $region21
  $region20: #{_lambda_.15} parent=0 // pred_region
    %v79 = vld [vmem:[#allocation2] sm:$0xff]
    %v80 = vld [vmem:[%s2] sm:$0x1]
    %v82 = vperm.slane %v80, 0
    %v84 = vadd.f32 %v79, %v82
    %v85 = vpack.c.bf16 %v84, %v84
    %vm86 = vcmask 60416
    %87 = vst.msk [vmem:[%s3] sm:$0xf] %vm86, %v85
    %v88 = vld [vmem:[#allocation2] sm:$0xff]
    %v89 = vld [vmem:[%s2] sm:$0x1]
    %v91 = vperm.slane %v89, 0
    %v93 = vadd.f32 %v88, %v91
    %vm94 = vcmask 64512
    %v95 = vsel %vm94, %v93, 0.0
    %v96 = vrot.slane %v95, 4
    %v97 = vadd.f32 %v95, %v96
    %v98 = vrot.slane %v97, 2
    %v99 = vadd.f32 %v97, %v98
    %v100 = vrot.slane %v99, 1
    %v101 = vadd.f32 %v99, %v100
    %vm102 = vcmask 57344
    %103 = vst.msk [vmem:[%s4] sm:$0x1] %vm102, %v101
    %v104 = vmul.f32 %v93, %v93
    %v105 = vsel %vm94, %v104, 0.0
    %v106 = vrot.slane %v105, 4
    %v107 = vadd.f32 %v105, %v106
    %v108 = vrot.slane %v107, 2
    %v109 = vadd.f32 %v107, %v108
    %v110 = vrot.slane %v109, 1
    %v111 = vadd.f32 %v109, %v110
    %112 = vst.msk [vmem:[%s5] sm:$0x1] %vm102, %v111
  $region21: #{_lambda_.15} parent=0 // pred_fallthru
    _
  // Predicated region
  $region22: #{_lambda_.15} parent=0 // pred_check
    _
  $region23: #{_lambda_.15} parent=0 // pred_check_branch
    %114 = sbr.rel (0) target = $region25
  $region24: #{_lambda_.15} parent=0 // pred_region
    _
  $region25: #{_lambda_.15} parent=0 // pred_fallthru
    _
  // Predicated region
  $region26: #{_lambda_.15} parent=0 // pred_check
    _
  $region27: #{_lambda_.15} parent=0 // pred_check_branch
    %116 = sbr.rel (0) target = $region29
  $region28: #{_lambda_.15} parent=0 // pred_region
    _
  $region29: #{_lambda_.15} parent=0 // pred_fallthru
    _
  // Predicated region
  $region30: #{_lambda_.15} parent=0 // pred_check
    _
  $region31: #{_lambda_.15} parent=0 // pred_check_branch
    %118 = sbr.rel (0) target = $region33
  $region32: #{_lambda_.15} parent=0 // pred_region
    _
  $region33: #{_lambda_.15} parent=0 // pred_fallthru
    _
  // Predicated region
  $region34: #{_lambda_.15} parent=0 // pred_check
    _
  $region35: #{_lambda_.15} parent=0 // pred_check_branch
    %120 = sbr.rel (0) target = $region37
  $region36: #{_lambda_.15} parent=0 // pred_region
    _
  $region37: #{_lambda_.15} parent=0 // pred_fallthru
    _
  // Predicated region
  $region38: #{_lambda_.15} parent=0 // pred_check
    _
  $region39: #{_lambda_.15} parent=0 // pred_check_branch
    %122 = sbr.rel (0) target = $region41
  $region40: #{_lambda_.15} parent=0 // pred_region
    _
  $region41: #{_lambda_.15} parent=0 // pred_fallthru
    _
  // Predicated region
  $region42: #{_lambda_.15} parent=0 // pred_check
    _
  $region43: #{_lambda_.15} parent=0 // pred_check_branch
    %124 = sbr.rel (0) target = $region45
  $region44: #{_lambda_.15} parent=0 // pred_region
    _
  $region45: #{_lambda_.15} parent=0 // pred_fallthru
    _

// kernel: _lambda_.17
$region0: #{_lambda_.17}
  #allocation0 [shape = 'u32[]', space=smem, size = 0x4, offset = 0x4, fixed_abs, tag = 'smem constant byte address 0x4 - core index']
  #allocation1 [shape = 'u32[72,128]{1,0:T(1,128)}', space=vmem, size = 0x9000, scoped, tag = 'internal scratch']
  #allocation2 [shape = 'f32[8,128]{1,0:T(8,128)}', space=vmem, size = 0x1000, scoped, tag = 'scratch operand']
  %s0 = inlined_call_operand.vmem [shape: bf16[8,72], index: 0, kind: input, shape index: {}]
  %s1 = inlined_call_operand.vmem [shape: bf16[72,128], index: 1, kind: input, shape index: {}]
  %s2 = inlined_call_operand.vmem [shape: f32[1,128], index: 2, kind: input, shape index: {}]
  %s3 = inlined_call_operand.vmem [shape: f32[8,1], index: 3, kind: output, shape index: {}]
  %s4 = sld [smem:[#allocation0]]
  $region30: #{_lambda_.17} parent=0
    _
  %s6 = ssub.s32 1, %s4
  %s7 = scalar_select 0, %s6, %s4
  // Predicated region
  $region2: #{_lambda_.17} parent=0 // pred_check
    _
  $region3: #{_lambda_.17} parent=0 // pred_check_branch
    %9 = sbr.rel (0) target = $region5
  $region4: #{_lambda_.17} parent=0 // pred_region
    _
  $region5: #{_lambda_.17} parent=0 // pred_fallthru
    _
  // Predicated region
  $region6: #{_lambda_.17} parent=0 // pred_check
    _
  $region7: #{_lambda_.17} parent=0 // pred_check_branch
    %11 = sbr.rel (0) target = $region9
  $region8: #{_lambda_.17} parent=0 // pred_region
    _
  $region9: #{_lambda_.17} parent=0 // pred_fallthru
    _
  // Predicated region
  $region10: #{_lambda_.17} parent=0 // pred_check
    _
  $region11: #{_lambda_.17} parent=0 // pred_check_branch
    %13 = sbr.rel (0) target = $region13
  $region12: #{_lambda_.17} parent=0 // pred_region
    _
  $region13: #{_lambda_.17} parent=0 // pred_fallthru
    _
  %p15 = scmp.eq.s32.totalorder 0, 0
  // Predicated region
  $region14: #{_lambda_.17} parent=0 // pred_check
    %p16 = pneg %p15
  $region15: #{_lambda_.17} parent=0 // pred_check_branch
    %18 = sbr.rel (%p16) target = $region17
  $region16: #{_lambda_.17} parent=0 // pred_region
    %19 = vst [vmem:[#allocation2] sm:$0xff] 0.0
  $region17: #{_lambda_.17} parent=0 // pred_fallthru
    _
  %v20 = vld [vmem:[#allocation2] sm:$0xff]
  %v21 = vld [vmem:[%s0] sm:$0xf]
  %v22 = vld [vmem:[%s1] sm:$0xf]
  %v23 = vld [vmem:[%s1 + $0x4] sm:$0xf]
  %v24 = vld [vmem:[%s1 + $0x8] sm:$0xf]
  %v25 = vld [vmem:[%s1 + $0xc] sm:$0xf]
  %v26 = vld [vmem:[%s1 + $0x10] sm:$0xf]
  %v27 = vld [vmem:[%s1 + $0x14] sm:$0xf]
  %v28 = vld [vmem:[%s1 + $0x18] sm:$0xf]
  %v29 = vld [vmem:[%s1 + $0x1c] sm:$0xf]
  %v30 = vld [vmem:[%s1 + $0x20] sm:$0xf]
  %v40 = vunpack.c.l.b16 %v22
  %v41 = vunpack.c.l.b16 %v23
  %v42 = vunpack.c.l.b16 %v24
  %v43 = vunpack.c.l.b16 %v25
  %v44 = vunpack.c.l.b16 %v26
  %v45 = vunpack.c.l.b16 %v27
  %v46 = vunpack.c.l.b16 %v28
  %v47 = vunpack.c.l.b16 %v29
  %v48 = vunpack.c.l.b16 %v30
  %v49 = vpack.c.b16 %v41, %v40
  %v50 = vpack.c.b16 %v43, %v42
  %v51 = vpack.c.b16 %v45, %v44
  %v52 = vpack.c.b16 %v47, %v46
  %v53 = vpack.c.b16 %v48, %v48
  %vm58 = vcmask 588800
  %v60 = vsel %vm58, %v21, 0
  %vm62 = vcmask 1043456
  %v64 = vsel %vm62, %v53, 0
  %66 = vmatpush.bf16.msra.mxu0 0
  %67 = vmatpush.bf16.msra.mxu0 0
  %68 = vmatpush.bf16.msra.mxu0 0
  %69 = vmatpush.bf16.msra.mxu0 %v64
  %70 = vmatpush.bf16.msra.mxu0 %v52
  %71 = vmatpush.bf16.msra.mxu0 %v51
  %72 = vmatpush.bf16.msra.mxu0 %v50
  %73 = vmatpush.bf16.msra.mxu0 %v49
  %74 = vmatmul.bf16.gmra.mxu0 %v60
  %v75 = vpop.f32.mrf.mxu0
  %v76 = vadd.f32 0.0, %v75
  %v77 = vpop.f32.mrf.mxu0
  %78 = vdwg.mxu0
  %v79 = vadd.f32 %v20, %v76
  %80 = vst [vmem:[#allocation2] sm:$0xff] %v79
  // Predicated region
  $region18: #{_lambda_.17} parent=0 // pred_check
    %p81 = pneg %p15
  $region19: #{_lambda_.17} parent=0 // pred_check_branch
    %83 = sbr.rel (%p81) target = $region21
  $region20: #{_lambda_.17} parent=0 // pred_region
    %v84 = vld [vmem:[#allocation2] sm:$0xff]
    %v85 = vld [vmem:[%s2] sm:$0x1]
    %v87 = vperm.slane %v85, 0
    %v89 = vadd.f32 %v84, %v87
    %vm90 = vcmask 7168
    %91 = vst.msk [vmem:[%s3] sm:$0xff] %vm90, %v89
  $region21: #{_lambda_.17} parent=0 // pred_fallthru
    _
  // Predicated region
  $region22: #{_lambda_.17} parent=0 // pred_check
    _
  $region23: #{_lambda_.17} parent=0 // pred_check_branch
    %93 = sbr.rel (0) target = $region25
  $region24: #{_lambda_.17} parent=0 // pred_region
    _
  $region25: #{_lambda_.17} parent=0 // pred_fallthru
    _
  // Predicated region
  $region26: #{_lambda_.17} parent=0 // pred_check
    _
  $region27: #{_lambda_.17} parent=0 // pred_check_branch
    %95 = sbr.rel (0) target = $region29
  $region28: #{_lambda_.17} parent=0 // pred_region
    _
  $region29: #{_lambda_.17} parent=0 // pred_fallthru
    _

</llo_original>
